<compile_context>
chip_gen: v5e
topology: v5e:2x2
jax: 0.10.0
libtpu: 0.0.40
codegen_flags: <defaults>
</compile_context>

<pallas_src>
import jax
import jax.numpy as jnp
from jax.experimental import pallas as pl
from jax.experimental.pallas import tpu as pltpu

INPUT_SIZE = 3      # len(features)
HIDDEN_SIZE = 50
NUM_LAYERS = 2
OUTPUT_SIZE = 3

IP = 8              # input padded to one sublane tile's worth of lanes
HP = 128            # hidden padded to one full lane tile
GP = 4 * HP         # fused gate width [i | f | o | g]
OP = 128            # fc output padded to lane width (lane-dense output store)

GATE_PERM = (0, 1, 3, 2)   # PyTorch gate order (i, f, g, o) -> kernel order (i, f, o, g)


# ----------------------------------------------------------------------------- kernel
def lstm_kernel(x_ref,       # (T*Bp, IP)     f32   raw inputs, time-major, padded
                wih0_ref,    # (IP, GP)       f32   layer-0 input weights, fused gates
                b0_ref,      # (1, GP)        f32   layer-0 bias (b_ih + b_hh)
                wbig_ref,    # (2*HP, 2*GP)   bf16  [[whh0, wih1], [0, whh1]]
                b1_ref,      # (1, GP)        f32   layer-1 bias (b_ih + b_hh)
                wfc_ref,     # (HP, OP)       f32   fc weights (zero-padded)
                bfc_ref,     # (1, OP)        f32   fc bias (zero-padded)
                out_ref,     # (Bp, OP)       f32
                xproj_ref):  # (T*Bp, GP)     f32   VMEM scratch: layer-0 x-projection
    Bp = out_ref.shape[0]
    T = x_ref.shape[0] // Bp
    Hp = wfc_ref.shape[0]
    Gp = b1_ref.shape[1]

    # ---- layer-0 input projection for ALL timesteps: one small f32 matmul, staged in
    #      VMEM scratch (off the recurrent critical path, no HBM round-trip). ----
    xproj_ref[...] = (jnp.dot(x_ref[...], wih0_ref[...],
                              preferred_element_type=jnp.float32) + b0_ref[...])

    # Hoisted bias broadcast: no broadcast_in_dim re-emitted inside the unrolled loop.
    b1b = jnp.broadcast_to(b1_ref[...], (Bp, Gp))

    def xp(t):
        row = t * Bp
        if not isinstance(row, int):
            row = pl.multiple_of(row, Bp)
        return xproj_ref[pl.ds(row, Bp), :]

    def sigmoid(z):
        # One EUP push per vreg on every generation (avoids a possible exp+recip
        # lowering of the logistic); the extra VPU mul/adds ride in free slots.
        return 0.5 * jnp.tanh(0.5 * z) + 0.5

    def fused_gates(z, c):
        # z: (Bp, 4*Hp), gate layout [i | f | o | g]; every slice is one (8,128) vreg.
        s = sigmoid(z[:, :3 * Hp])          # one EUP pass covers i, f, o
        g = jnp.tanh(z[:, 3 * Hp:])         # one EUP pass covers g
        i = s[:, :Hp]
        f = s[:, Hp:2 * Hp]
        o = s[:, 2 * Hp:3 * Hp]
        c_new = f * c + i * g
        return o * jnp.tanh(c_new), c_new

    def fused_step_matmul(h0, h1):
        # Single K=256 bf16 matmul driving BOTH layers (single bf16 cast per step).
        a = jnp.concatenate([h0, h1], axis=1).astype(jnp.bfloat16)   # (Bp, 2*Hp)
        return jnp.dot(a, wbig_ref[...], preferred_element_type=jnp.float32)

    zeros = jnp.zeros((Bp, Hp), jnp.float32)

    # ---- prologue: layer-0 cell at t=0 (zero initial h0 -> recurrent term vanishes) --
    h0, c0 = fused_gates(xp(0), zeros)
    h1, c1 = zeros, zeros

    # ---- skewed steady state: step s computes layer-0 cell for t=s+1 and layer-1
    #      cell for t=s from one fused matmul; the two gate chains interleave. ----
    def step(s, carry):
        h0, c0, h1, c1 = carry
        big = fused_step_matmul(h0, h1)               # (Bp, 2*Gp)
        z0 = big[:, :4 * Hp] + xp(s + 1)              # layer-0 pre-act, time s+1
        z1 = big[:, 4 * Hp:] + b1b                    # layer-1 pre-act, time s
        h0n, c0n = fused_gates(z0, c0)
        h1n, c1n = fused_gates(z1, c1)
        return (h0n, c0n, h1n, c1n)

    h0, c0, h1, c1 = jax.lax.fori_loop(0, T - 1, step, (h0, c0, h1, c1), unroll=True)

    # ---- epilogue: layer-1 cell at t = T-1 (layer-0 columns of the result unused) ----
    big = fused_step_matmul(h0, h1)
    h1, _ = fused_gates(big[:, 4 * Hp:] + b1b, c1)

    # ---- fc: Linear + ReLU on the last timestep's top-layer hidden state ----
    out = jnp.dot(h1, wfc_ref[...], preferred_element_type=jnp.float32) + bfc_ref[...]
    out_ref[...] = jnp.maximum(out, 0.0)


# --------------------------------------------------------------------- param packing
def _pack_w(w4):
    """(4, K, H) per-gate -> (K, 4*HP) fused, gate-reordered, zero-padded columns."""
    K = w4.shape[1]
    out = jnp.zeros((K, GP), jnp.float32)
    for slot, g in enumerate(GATE_PERM):
        out = out.at[:, slot * HP: slot * HP + HIDDEN_SIZE].set(w4[g])
    return out


def _pack_b(b4):
    """(4, H) per-gate -> (1, 4*HP) fused, gate-reordered, zero-padded."""
    out = jnp.zeros((1, GP), jnp.float32)
    for slot, g in enumerate(GATE_PERM):
        out = out.at[0, slot * HP: slot * HP + HIDDEN_SIZE].set(b4[g])
    return out


def _pad_rows(w, rows):
    return jnp.pad(w, ((0, rows - w.shape[0]), (0, 0)))


# --------------------------------------------------------------------------- wrapper
def lstm_model_pallas(x, params):
    """x: (B, T, I) float32 -> (B, O) float32.  Matches LSTMModel.forward."""
    (wih0, whh0, b0, wih1, whh1, b1, wfc, bfc) = params
    B, T, I = x.shape
    BP = ((B + 7) // 8) * 8   # batch padded to a sublane multiple

    # ---- pack / pad weights (zero padding keeps padded lanes exactly zero) ----
    wih0_k = jnp.pad(_pack_w(wih0), ((0, IP - I), (0, 0)))           # (IP, GP)  f32
    b0_k = _pack_b(b0)                                               # (1, GP)   f32
    whh0_p = _pad_rows(_pack_w(whh0), HP)                            # (HP, GP)  f32
    wih1_p = _pad_rows(_pack_w(wih1), HP)                            # (HP, GP)  f32
    whh1_p = _pad_rows(_pack_w(whh1), HP)                            # (HP, GP)  f32
    # Fused skewed-step weight: [[whh0, wih1], [0, whh1]]  -> (2*HP, 2*GP) bf16.
    w_big = jnp.zeros((2 * HP, 2 * GP), jnp.float32)
    w_big = w_big.at[:HP, :GP].set(whh0_p)
    w_big = w_big.at[:HP, GP:].set(wih1_p)
    w_big = w_big.at[HP:, GP:].set(whh1_p)
    w_big = w_big.astype(jnp.bfloat16)
    b1_k = _pack_b(b1)                                               # (1, GP)   f32
    wfc_k = jnp.zeros((HP, OP), jnp.float32).at[:HIDDEN_SIZE, :OUTPUT_SIZE].set(wfc)
    bfc_k = jnp.zeros((1, OP), jnp.float32).at[0, :OUTPUT_SIZE].set(bfc)

    # ---- raw inputs, time-major, padded, flattened: (T*BP, IP) ----
    x_tm = jnp.transpose(x, (1, 0, 2))                               # (T, B, I)
    x_tm = jnp.pad(x_tm, ((0, 0), (0, BP - B), (0, IP - I)))         # (T, BP, IP)
    x_flat = x_tm.reshape(T * BP, IP)

    out = pl.pallas_call(
        lstm_kernel,
        out_shape=jax.ShapeDtypeStruct((BP, OP), jnp.float32),
        in_specs=[pl.BlockSpec(memory_space=pltpu.MemorySpace.VMEM)] * 7,
        out_specs=pl.BlockSpec(memory_space=pltpu.MemorySpace.VMEM),
        scratch_shapes=[pltpu.VMEM((T * BP, GP), jnp.float32)],
    )(x_flat, wih0_k, b0_k, w_big, b1_k, wfc_k, bfc_k)
    return out[:B, :OUTPUT_SIZE]


# ------------------------------------------------------------------------------ init
def make_params(key):
    """Deterministic init mimicking PyTorch's U(-1/sqrt(H), 1/sqrt(H))."""
    H, I, O = HIDDEN_SIZE, INPUT_SIZE, OUTPUT_SIZE
    bound = 1.0 / (H ** 0.5)
    ks = jax.random.split(key, 10)

    def u(k, shape):
        return jax.random.uniform(k, shape, jnp.float32, -bound, bound)

    # PyTorch gate order (i, f, g, o); weights stored transposed so kernels do x @ W.
    wih0 = u(ks[0], (4, I, H))
    whh0 = u(ks[1], (4, H, H))
    b0 = u(ks[2], (4, H)) + u(ks[3], (4, H))      # b_ih + b_hh combined
    wih1 = u(ks[4], (4, H, H))
    whh1 = u(ks[5], (4, H, H))
    b1 = u(ks[6], (4, H)) + u(ks[7], (4, H))
    wfc = u(ks[8], (H, O))
    bfc = u(ks[9], (O,))
    return (wih0, whh0, b0, wih1, whh1, b1, wfc, bfc)


# -------------------------------------------------------------------------- reference
def lstm_model_ref(x, params, *, bf16_matmul=True):
    """Pure-JAX reference. bf16_matmul=True mirrors the kernel's MXU precision;
    bf16_matmul=False is the full-f32, PyTorch-faithful reference."""
    (wih0, whh0, b0, wih1, whh1, b1, wfc, bfc) = params
    B, T, I = x.shape
    H = HIDDEN_SIZE

    def mm(a, w):
        if bf16_matmul:
            a = a.astype(jnp.bfloat16)
            w = w.astype(jnp.bfloat16)
        return jnp.dot(a, w, preferred_element_type=jnp.float32)

    def gates(z, c):
        # z: (B, 4, H) in PyTorch gate order (i, f, g, o)
        i = jax.nn.sigmoid(z[:, 0])
        f = jax.nn.sigmoid(z[:, 1])
        g = jnp.tanh(z[:, 2])
        o = jax.nn.sigmoid(z[:, 3])
        c_new = f * c + i * g
        return o * jnp.tanh(c_new), c_new

    # Layer-0 input projections stay f32 (mirrors the in-kernel f32 precompute).
    xproj0 = jnp.einsum('bti,gih->tbgh', x, wih0) + b0[None, None]   # (T, B, 4, H)

    def step(carry, xp_t):
        h0, c0, h1, c1 = carry
        z0 = xp_t + jnp.stack([mm(h0, whh0[g]) for g in range(4)], axis=1)
        h0, c0 = gates(z0, c0)
        z1 = (jnp.stack([mm(h0, wih1[g]) for g in range(4)], axis=1)
              + jnp.stack([mm(h1, whh1[g]) for g in range(4)], axis=1)
              + b1[None])
        h1, c1 = gates(z1, c1)
        return (h0, c0, h1, c1), None

    z = jnp.zeros((B, H), jnp.float32)
    (_, _, h1, _), _ = jax.lax.scan(step, (z, z, z, z), xproj0)
    return jnp.maximum(jnp.dot(h1, wfc) + bfc, 0.0)


# ------------------------------------------------------------------------------ main
if __name__ == "__main__":
    key = jax.random.PRNGKey(0)
    k_x, k_p = jax.random.split(key)

    B, T = 2, 8
    x = jax.random.normal(k_x, (B, T, INPUT_SIZE), jnp.float32)
    params = make_params(k_p)

    fwd = jax.jit(lstm_model_pallas)
    out = jax.block_until_ready(fwd(x, params))
    assert out.shape == (B, OUTPUT_SIZE)

    # Tight check against a reference with matching matmul precision (bf16 MXU, f32 acc).
    ref_bf16 = lstm_model_ref(x, params, bf16_matmul=True)
    assert jnp.allclose(out, ref_bf16, atol=2e-3, rtol=2e-3), (out, ref_bf16)

    # Loose check against the full-f32 PyTorch-faithful reference (bf16 rounding slack).
    ref_f32 = lstm_model_ref(x, params, bf16_matmul=False)
    assert jnp.allclose(out, ref_f32, atol=5e-2, rtol=5e-2), (out, ref_f32)

    print("KERNEL_OK")
</pallas_src>

<mosaic_0001>
module attributes {stable_mosaic.version = 11 : i64} {
  func.func @lstm_kernel(%arg0: memref<64x8xf32, #tpu.memory_space<vmem>>, %arg1: memref<8x512xf32, #tpu.memory_space<vmem>>, %arg2: memref<1x512xf32, #tpu.memory_space<vmem>>, %arg3: memref<256x1024xbf16, #tpu.memory_space<vmem>>, %arg4: memref<1x512xf32, #tpu.memory_space<vmem>>, %arg5: memref<128x128xf32, #tpu.memory_space<vmem>>, %arg6: memref<1x128xf32, #tpu.memory_space<vmem>>, %arg7: memref<8x128xf32, #tpu.memory_space<vmem>>, %arg8: memref<64x512xf32, #tpu.memory_space<vmem>>) attributes {dimension_semantics = [], scalar_prefetch = 0 : i64, scratch_operands = 1 : i64, tpu.core_type = #tpu.core_type<tc>} {
    %c0 = arith.constant 0 : index
    %c0_0 = arith.constant 0 : index
    %0 = vector.load %arg0[%c0, %c0_0] : memref<64x8xf32, #tpu.memory_space<vmem>>, vector<64x8xf32>
    %c0_1 = arith.constant 0 : index
    %c0_2 = arith.constant 0 : index
    %1 = vector.load %arg1[%c0_1, %c0_2] : memref<8x512xf32, #tpu.memory_space<vmem>>, vector<8x512xf32>
    %cst = arith.constant dense<0.000000e+00> : vector<64x512xf32>
    %2 = tpu.matmul %0, %1, %cst {dimension_numbers = #tpu.dot_dimension_numbers<[1], [0], [0], [1], [0, 0, 1, 1], [], []>} : vector<64x8xf32>, vector<8x512xf32>, vector<64x512xf32> -> vector<64x512xf32>
    %c0_3 = arith.constant 0 : index
    %c0_4 = arith.constant 0 : index
    %3 = vector.load %arg2[%c0_3, %c0_4] : memref<1x512xf32, #tpu.memory_space<vmem>>, vector<1x512xf32>
    %4 = vector.broadcast %3 : vector<1x512xf32> to vector<64x512xf32>
    %5 = arith.addf %2, %4 : vector<64x512xf32>
    %c0_5 = arith.constant 0 : index
    %c0_6 = arith.constant 0 : index
    %6 = vector.load %arg8[%c0_5, %c0_6] : memref<64x512xf32, #tpu.memory_space<vmem>>, vector<64x512xf32>
    tpu.vector_store %arg8[%c0_5, %c0_6], %5 {strides = array<i32>} : memref<64x512xf32, #tpu.memory_space<vmem>>, vector<64x512xf32>,
    %c0_7 = arith.constant 0 : index
    %c0_8 = arith.constant 0 : index
    %7 = vector.load %arg4[%c0_7, %c0_8] : memref<1x512xf32, #tpu.memory_space<vmem>>, vector<1x512xf32>
    %8 = vector.shape_cast %7 : vector<1x512xf32> to vector<1x512xf32>
    %9 = vector.broadcast %8 : vector<1x512xf32> to vector<8x512xf32>
    %cst_9 = arith.constant 0.000000e+00 : f32
    %10 = vector.broadcast %cst_9 : f32 to vector<8x128xf32>
    %c0_10 = arith.constant 0 : index
    %c0_11 = arith.constant 0 : index
    %11 = vector.load %arg8[%c0_10, %c0_11] : memref<64x512xf32, #tpu.memory_space<vmem>>, vector<8x512xf32>
    %12 = vector.extract_strided_slice %11 {offsets = [0, 0], sizes = [8, 384], strides = [1, 1]} : vector<8x512xf32> to vector<8x384xf32>
    %cst_12 = arith.constant 5.000000e-01 : f32
    %13 = vector.broadcast %cst_12 : f32 to vector<8x384xf32>
    %14 = arith.mulf %13, %12 : vector<8x384xf32>
    %15 = math.tanh %14 : vector<8x384xf32>
    %cst_13 = arith.constant 5.000000e-01 : f32
    %16 = vector.broadcast %cst_13 : f32 to vector<8x384xf32>
    %17 = arith.mulf %16, %15 : vector<8x384xf32>
    %cst_14 = arith.constant 5.000000e-01 : f32
    %18 = vector.broadcast %cst_14 : f32 to vector<8x384xf32>
    %19 = arith.addf %17, %18 : vector<8x384xf32>
    %20 = vector.extract_strided_slice %11 {offsets = [0, 384], sizes = [8, 128], strides = [1, 1]} : vector<8x512xf32> to vector<8x128xf32>
    %21 = math.tanh %20 : vector<8x128xf32>
    %22 = vector.extract_strided_slice %19 {offsets = [0, 0], sizes = [8, 128], strides = [1, 1]} : vector<8x384xf32> to vector<8x128xf32>
    %23 = vector.extract_strided_slice %19 {offsets = [0, 128], sizes = [8, 128], strides = [1, 1]} : vector<8x384xf32> to vector<8x128xf32>
    %24 = vector.extract_strided_slice %19 {offsets = [0, 256], sizes = [8, 128], strides = [1, 1]} : vector<8x384xf32> to vector<8x128xf32>
    %25 = arith.mulf %23, %10 : vector<8x128xf32>
    %26 = arith.mulf %22, %21 : vector<8x128xf32>
    %27 = arith.addf %25, %26 : vector<8x128xf32>
    %28 = math.tanh %27 : vector<8x128xf32>
    %29 = arith.mulf %24, %28 : vector<8x128xf32>
    %c0_i32 = arith.constant 0 : i32
    %30 = tpu.concatenate %29, %10 in 1 : vector<8x128xf32>, vector<8x128xf32> -> vector<8x256xf32>
    %31 = arith.truncf %30 : vector<8x256xf32> to vector<8x256xbf16>
    %c0_15 = arith.constant 0 : index
    %c0_16 = arith.constant 0 : index
    %32 = vector.load %arg3[%c0_15, %c0_16] : memref<256x1024xbf16, #tpu.memory_space<vmem>>, vector<256x1024xbf16>
    %cst_17 = arith.constant dense<0.000000e+00> : vector<8x1024xf32>
    %33 = tpu.matmul %31, %32, %cst_17 {dimension_numbers = #tpu.dot_dimension_numbers<[1], [0], [0], [1], [0, 0, 1, 1], [], []>} : vector<8x256xbf16>, vector<256x1024xbf16>, vector<8x1024xf32> -> vector<8x1024xf32>
    %34 = vector.extract_strided_slice %33 {offsets = [0, 0], sizes = [8, 512], strides = [1, 1]} : vector<8x1024xf32> to vector<8x512xf32>
    %c1_i32 = arith.constant 1 : i32
    %35 = arith.addi %c0_i32, %c1_i32 : i32
    %c8_i32 = arith.constant 8 : i32
    %36 = arith.muli %35, %c8_i32 : i32
    %37 = tpu.assume_multiple %36, 8 : i32
    %38 = arith.index_cast %37 : i32 to index
    %c0_18 = arith.constant 0 : index
    %39 = vector.load %arg8[%38, %c0_18] : memref<64x512xf32, #tpu.memory_space<vmem>>, vector<8x512xf32>
    %40 = arith.addf %34, %39 : vector<8x512xf32>
    %41 = vector.extract_strided_slice %33 {offsets = [0, 512], sizes = [8, 512], strides = [1, 1]} : vector<8x1024xf32> to vector<8x512xf32>
    %42 = arith.addf %41, %9 : vector<8x512xf32>
    %43 = vector.extract_strided_slice %40 {offsets = [0, 0], sizes = [8, 384], strides = [1, 1]} : vector<8x512xf32> to vector<8x384xf32>
    %cst_19 = arith.constant 5.000000e-01 : f32
    %44 = vector.broadcast %cst_19 : f32 to vector<8x384xf32>
    %45 = arith.mulf %44, %43 : vector<8x384xf32>
    %46 = math.tanh %45 : vector<8x384xf32>
    %cst_20 = arith.constant 5.000000e-01 : f32
    %47 = vector.broadcast %cst_20 : f32 to vector<8x384xf32>
    %48 = arith.mulf %47, %46 : vector<8x384xf32>
    %cst_21 = arith.constant 5.000000e-01 : f32
    %49 = vector.broadcast %cst_21 : f32 to vector<8x384xf32>
    %50 = arith.addf %48, %49 : vector<8x384xf32>
    %51 = vector.extract_strided_slice %40 {offsets = [0, 384], sizes = [8, 128], strides = [1, 1]} : vector<8x512xf32> to vector<8x128xf32>
    %52 = math.tanh %51 : vector<8x128xf32>
    %53 = vector.extract_strided_slice %50 {offsets = [0, 0], sizes = [8, 128], strides = [1, 1]} : vector<8x384xf32> to vector<8x128xf32>
    %54 = vector.extract_strided_slice %50 {offsets = [0, 128], sizes = [8, 128], strides = [1, 1]} : vector<8x384xf32> to vector<8x128xf32>
    %55 = vector.extract_strided_slice %50 {offsets = [0, 256], sizes = [8, 128], strides = [1, 1]} : vector<8x384xf32> to vector<8x128xf32>
    %56 = arith.mulf %54, %27 : vector<8x128xf32>
    %57 = arith.mulf %53, %52 : vector<8x128xf32>
    %58 = arith.addf %56, %57 : vector<8x128xf32>
    %59 = math.tanh %58 : vector<8x128xf32>
    %60 = arith.mulf %55, %59 : vector<8x128xf32>
    %61 = vector.extract_strided_slice %42 {offsets = [0, 0], sizes = [8, 384], strides = [1, 1]} : vector<8x512xf32> to vector<8x384xf32>
    %cst_22 = arith.constant 5.000000e-01 : f32
    %62 = vector.broadcast %cst_22 : f32 to vector<8x384xf32>
    %63 = arith.mulf %62, %61 : vector<8x384xf32>
    %64 = math.tanh %63 : vector<8x384xf32>
    %cst_23 = arith.constant 5.000000e-01 : f32
    %65 = vector.broadcast %cst_23 : f32 to vector<8x384xf32>
    %66 = arith.mulf %65, %64 : vector<8x384xf32>
    %cst_24 = arith.constant 5.000000e-01 : f32
    %67 = vector.broadcast %cst_24 : f32 to vector<8x384xf32>
    %68 = arith.addf %66, %67 : vector<8x384xf32>
    %69 = vector.extract_strided_slice %42 {offsets = [0, 384], sizes = [8, 128], strides = [1, 1]} : vector<8x512xf32> to vector<8x128xf32>
    %70 = math.tanh %69 : vector<8x128xf32>
    %71 = vector.extract_strided_slice %68 {offsets = [0, 0], sizes = [8, 128], strides = [1, 1]} : vector<8x384xf32> to vector<8x128xf32>
    %72 = vector.extract_strided_slice %68 {offsets = [0, 128], sizes = [8, 128], strides = [1, 1]} : vector<8x384xf32> to vector<8x128xf32>
    %73 = vector.extract_strided_slice %68 {offsets = [0, 256], sizes = [8, 128], strides = [1, 1]} : vector<8x384xf32> to vector<8x128xf32>
    %74 = arith.mulf %72, %10 : vector<8x128xf32>
    %75 = arith.mulf %71, %70 : vector<8x128xf32>
    %76 = arith.addf %74, %75 : vector<8x128xf32>
    %77 = math.tanh %76 : vector<8x128xf32>
    %78 = arith.mulf %73, %77 : vector<8x128xf32>
    %c1_i32_25 = arith.constant 1 : i32
    %79 = tpu.concatenate %60, %78 in 1 : vector<8x128xf32>, vector<8x128xf32> -> vector<8x256xf32>
    %80 = arith.truncf %79 : vector<8x256xf32> to vector<8x256xbf16>
    %c0_26 = arith.constant 0 : index
    %c0_27 = arith.constant 0 : index
    %81 = vector.load %arg3[%c0_26, %c0_27] : memref<256x1024xbf16, #tpu.memory_space<vmem>>, vector<256x1024xbf16>
    %cst_28 = arith.constant dense<0.000000e+00> : vector<8x1024xf32>
    %82 = tpu.matmul %80, %81, %cst_28 {dimension_numbers = #tpu.dot_dimension_numbers<[1], [0], [0], [1], [0, 0, 1, 1], [], []>} : vector<8x256xbf16>, vector<256x1024xbf16>, vector<8x1024xf32> -> vector<8x1024xf32>
    %83 = vector.extract_strided_slice %82 {offsets = [0, 0], sizes = [8, 512], strides = [1, 1]} : vector<8x1024xf32> to vector<8x512xf32>
    %c1_i32_29 = arith.constant 1 : i32
    %84 = arith.addi %c1_i32_25, %c1_i32_29 : i32
    %c8_i32_30 = arith.constant 8 : i32
    %85 = arith.muli %84, %c8_i32_30 : i32
    %86 = tpu.assume_multiple %85, 8 : i32
    %87 = arith.index_cast %86 : i32 to index
    %c0_31 = arith.constant 0 : index
    %88 = vector.load %arg8[%87, %c0_31] : memref<64x512xf32, #tpu.memory_space<vmem>>, vector<8x512xf32>
    %89 = arith.addf %83, %88 : vector<8x512xf32>
    %90 = vector.extract_strided_slice %82 {offsets = [0, 512], sizes = [8, 512], strides = [1, 1]} : vector<8x1024xf32> to vector<8x512xf32>
    %91 = arith.addf %90, %9 : vector<8x512xf32>
    %92 = vector.extract_strided_slice %89 {offsets = [0, 0], sizes = [8, 384], strides = [1, 1]} : vector<8x512xf32> to vector<8x384xf32>
    %cst_32 = arith.constant 5.000000e-01 : f32
    %93 = vector.broadcast %cst_32 : f32 to vector<8x384xf32>
    %94 = arith.mulf %93, %92 : vector<8x384xf32>
    %95 = math.tanh %94 : vector<8x384xf32>
    %cst_33 = arith.constant 5.000000e-01 : f32
    %96 = vector.broadcast %cst_33 : f32 to vector<8x384xf32>
    %97 = arith.mulf %96, %95 : vector<8x384xf32>
    %cst_34 = arith.constant 5.000000e-01 : f32
    %98 = vector.broadcast %cst_34 : f32 to vector<8x384xf32>
    %99 = arith.addf %97, %98 : vector<8x384xf32>
    %100 = vector.extract_strided_slice %89 {offsets = [0, 384], sizes = [8, 128], strides = [1, 1]} : vector<8x512xf32> to vector<8x128xf32>
    %101 = math.tanh %100 : vector<8x128xf32>
    %102 = vector.extract_strided_slice %99 {offsets = [0, 0], sizes = [8, 128], strides = [1, 1]} : vector<8x384xf32> to vector<8x128xf32>
    %103 = vector.extract_strided_slice %99 {offsets = [0, 128], sizes = [8, 128], strides = [1, 1]} : vector<8x384xf32> to vector<8x128xf32>
    %104 = vector.extract_strided_slice %99 {offsets = [0, 256], sizes = [8, 128], strides = [1, 1]} : vector<8x384xf32> to vector<8x128xf32>
    %105 = arith.mulf %103, %58 : vector<8x128xf32>
    %106 = arith.mulf %102, %101 : vector<8x128xf32>
    %107 = arith.addf %105, %106 : vector<8x128xf32>
    %108 = math.tanh %107 : vector<8x128xf32>
    %109 = arith.mulf %104, %108 : vector<8x128xf32>
    %110 = vector.extract_strided_slice %91 {offsets = [0, 0], sizes = [8, 384], strides = [1, 1]} : vector<8x512xf32> to vector<8x384xf32>
    %cst_35 = arith.constant 5.000000e-01 : f32
    %111 = vector.broadcast %cst_35 : f32 to vector<8x384xf32>
    %112 = arith.mulf %111, %110 : vector<8x384xf32>
    %113 = math.tanh %112 : vector<8x384xf32>
    %cst_36 = arith.constant 5.000000e-01 : f32
    %114 = vector.broadcast %cst_36 : f32 to vector<8x384xf32>
    %115 = arith.mulf %114, %113 : vector<8x384xf32>
    %cst_37 = arith.constant 5.000000e-01 : f32
    %116 = vector.broadcast %cst_37 : f32 to vector<8x384xf32>
    %117 = arith.addf %115, %116 : vector<8x384xf32>
    %118 = vector.extract_strided_slice %91 {offsets = [0, 384], sizes = [8, 128], strides = [1, 1]} : vector<8x512xf32> to vector<8x128xf32>
    %119 = math.tanh %118 : vector<8x128xf32>
    %120 = vector.extract_strided_slice %117 {offsets = [0, 0], sizes = [8, 128], strides = [1, 1]} : vector<8x384xf32> to vector<8x128xf32>
    %121 = vector.extract_strided_slice %117 {offsets = [0, 128], sizes = [8, 128], strides = [1, 1]} : vector<8x384xf32> to vector<8x128xf32>
    %122 = vector.extract_strided_slice %117 {offsets = [0, 256], sizes = [8, 128], strides = [1, 1]} : vector<8x384xf32> to vector<8x128xf32>
    %123 = arith.mulf %121, %76 : vector<8x128xf32>
    %124 = arith.mulf %120, %119 : vector<8x128xf32>
    %125 = arith.addf %123, %124 : vector<8x128xf32>
    %126 = math.tanh %125 : vector<8x128xf32>
    %127 = arith.mulf %122, %126 : vector<8x128xf32>
    %c2_i32 = arith.constant 2 : i32
    %128 = tpu.concatenate %109, %127 in 1 : vector<8x128xf32>, vector<8x128xf32> -> vector<8x256xf32>
    %129 = arith.truncf %128 : vector<8x256xf32> to vector<8x256xbf16>
    %c0_38 = arith.constant 0 : index
    %c0_39 = arith.constant 0 : index
    %130 = vector.load %arg3[%c0_38, %c0_39] : memref<256x1024xbf16, #tpu.memory_space<vmem>>, vector<256x1024xbf16>
    %cst_40 = arith.constant dense<0.000000e+00> : vector<8x1024xf32>
    %131 = tpu.matmul %129, %130, %cst_40 {dimension_numbers = #tpu.dot_dimension_numbers<[1], [0], [0], [1], [0, 0, 1, 1], [], []>} : vector<8x256xbf16>, vector<256x1024xbf16>, vector<8x1024xf32> -> vector<8x1024xf32>
    %132 = vector.extract_strided_slice %131 {offsets = [0, 0], sizes = [8, 512], strides = [1, 1]} : vector<8x1024xf32> to vector<8x512xf32>
    %c1_i32_41 = arith.constant 1 : i32
    %133 = arith.addi %c2_i32, %c1_i32_41 : i32
    %c8_i32_42 = arith.constant 8 : i32
    %134 = arith.muli %133, %c8_i32_42 : i32
    %135 = tpu.assume_multiple %134, 8 : i32
    %136 = arith.index_cast %135 : i32 to index
    %c0_43 = arith.constant 0 : index
    %137 = vector.load %arg8[%136, %c0_43] : memref<64x512xf32, #tpu.memory_space<vmem>>, vector<8x512xf32>
    %138 = arith.addf %132, %137 : vector<8x512xf32>
    %139 = vector.extract_strided_slice %131 {offsets = [0, 512], sizes = [8, 512], strides = [1, 1]} : vector<8x1024xf32> to vector<8x512xf32>
    %140 = arith.addf %139, %9 : vector<8x512xf32>
    %141 = vector.extract_strided_slice %138 {offsets = [0, 0], sizes = [8, 384], strides = [1, 1]} : vector<8x512xf32> to vector<8x384xf32>
    %cst_44 = arith.constant 5.000000e-01 : f32
    %142 = vector.broadcast %cst_44 : f32 to vector<8x384xf32>
    %143 = arith.mulf %142, %141 : vector<8x384xf32>
    %144 = math.tanh %143 : vector<8x384xf32>
    %cst_45 = arith.constant 5.000000e-01 : f32
    %145 = vector.broadcast %cst_45 : f32 to vector<8x384xf32>
    %146 = arith.mulf %145, %144 : vector<8x384xf32>
    %cst_46 = arith.constant 5.000000e-01 : f32
    %147 = vector.broadcast %cst_46 : f32 to vector<8x384xf32>
    %148 = arith.addf %146, %147 : vector<8x384xf32>
    %149 = vector.extract_strided_slice %138 {offsets = [0, 384], sizes = [8, 128], strides = [1, 1]} : vector<8x512xf32> to vector<8x128xf32>
    %150 = math.tanh %149 : vector<8x128xf32>
    %151 = vector.extract_strided_slice %148 {offsets = [0, 0], sizes = [8, 128], strides = [1, 1]} : vector<8x384xf32> to vector<8x128xf32>
    %152 = vector.extract_strided_slice %148 {offsets = [0, 128], sizes = [8, 128], strides = [1, 1]} : vector<8x384xf32> to vector<8x128xf32>
    %153 = vector.extract_strided_slice %148 {offsets = [0, 256], sizes = [8, 128], strides = [1, 1]} : vector<8x384xf32> to vector<8x128xf32>
    %154 = arith.mulf %152, %107 : vector<8x128xf32>
    %155 = arith.mulf %151, %150 : vector<8x128xf32>
    %156 = arith.addf %154, %155 : vector<8x128xf32>
    %157 = math.tanh %156 : vector<8x128xf32>
    %158 = arith.mulf %153, %157 : vector<8x128xf32>
    %159 = vector.extract_strided_slice %140 {offsets = [0, 0], sizes = [8, 384], strides = [1, 1]} : vector<8x512xf32> to vector<8x384xf32>
    %cst_47 = arith.constant 5.000000e-01 : f32
    %160 = vector.broadcast %cst_47 : f32 to vector<8x384xf32>
    %161 = arith.mulf %160, %159 : vector<8x384xf32>
    %162 = math.tanh %161 : vector<8x384xf32>
    %cst_48 = arith.constant 5.000000e-01 : f32
    %163 = vector.broadcast %cst_48 : f32 to vector<8x384xf32>
    %164 = arith.mulf %163, %162 : vector<8x384xf32>
    %cst_49 = arith.constant 5.000000e-01 : f32
    %165 = vector.broadcast %cst_49 : f32 to vector<8x384xf32>
    %166 = arith.addf %164, %165 : vector<8x384xf32>
    %167 = vector.extract_strided_slice %140 {offsets = [0, 384], sizes = [8, 128], strides = [1, 1]} : vector<8x512xf32> to vector<8x128xf32>
    %168 = math.tanh %167 : vector<8x128xf32>
    %169 = vector.extract_strided_slice %166 {offsets = [0, 0], sizes = [8, 128], strides = [1, 1]} : vector<8x384xf32> to vector<8x128xf32>
    %170 = vector.extract_strided_slice %166 {offsets = [0, 128], sizes = [8, 128], strides = [1, 1]} : vector<8x384xf32> to vector<8x128xf32>
    %171 = vector.extract_strided_slice %166 {offsets = [0, 256], sizes = [8, 128], strides = [1, 1]} : vector<8x384xf32> to vector<8x128xf32>
    %172 = arith.mulf %170, %125 : vector<8x128xf32>
    %173 = arith.mulf %169, %168 : vector<8x128xf32>
    %174 = arith.addf %172, %173 : vector<8x128xf32>
    %175 = math.tanh %174 : vector<8x128xf32>
    %176 = arith.mulf %171, %175 : vector<8x128xf32>
    %c3_i32 = arith.constant 3 : i32
    %177 = tpu.concatenate %158, %176 in 1 : vector<8x128xf32>, vector<8x128xf32> -> vector<8x256xf32>
    %178 = arith.truncf %177 : vector<8x256xf32> to vector<8x256xbf16>
    %c0_50 = arith.constant 0 : index
    %c0_51 = arith.constant 0 : index
    %179 = vector.load %arg3[%c0_50, %c0_51] : memref<256x1024xbf16, #tpu.memory_space<vmem>>, vector<256x1024xbf16>
    %cst_52 = arith.constant dense<0.000000e+00> : vector<8x1024xf32>
    %180 = tpu.matmul %178, %179, %cst_52 {dimension_numbers = #tpu.dot_dimension_numbers<[1], [0], [0], [1], [0, 0, 1, 1], [], []>} : vector<8x256xbf16>, vector<256x1024xbf16>, vector<8x1024xf32> -> vector<8x1024xf32>
    %181 = vector.extract_strided_slice %180 {offsets = [0, 0], sizes = [8, 512], strides = [1, 1]} : vector<8x1024xf32> to vector<8x512xf32>
    %c1_i32_53 = arith.constant 1 : i32
    %182 = arith.addi %c3_i32, %c1_i32_53 : i32
    %c8_i32_54 = arith.constant 8 : i32
    %183 = arith.muli %182, %c8_i32_54 : i32
    %184 = tpu.assume_multiple %183, 8 : i32
    %185 = arith.index_cast %184 : i32 to index
    %c0_55 = arith.constant 0 : index
    %186 = vector.load %arg8[%185, %c0_55] : memref<64x512xf32, #tpu.memory_space<vmem>>, vector<8x512xf32>
    %187 = arith.addf %181, %186 : vector<8x512xf32>
    %188 = vector.extract_strided_slice %180 {offsets = [0, 512], sizes = [8, 512], strides = [1, 1]} : vector<8x1024xf32> to vector<8x512xf32>
    %189 = arith.addf %188, %9 : vector<8x512xf32>
    %190 = vector.extract_strided_slice %187 {offsets = [0, 0], sizes = [8, 384], strides = [1, 1]} : vector<8x512xf32> to vector<8x384xf32>
    %cst_56 = arith.constant 5.000000e-01 : f32
    %191 = vector.broadcast %cst_56 : f32 to vector<8x384xf32>
    %192 = arith.mulf %191, %190 : vector<8x384xf32>
    %193 = math.tanh %192 : vector<8x384xf32>
    %cst_57 = arith.constant 5.000000e-01 : f32
    %194 = vector.broadcast %cst_57 : f32 to vector<8x384xf32>
    %195 = arith.mulf %194, %193 : vector<8x384xf32>
    %cst_58 = arith.constant 5.000000e-01 : f32
    %196 = vector.broadcast %cst_58 : f32 to vector<8x384xf32>
    %197 = arith.addf %195, %196 : vector<8x384xf32>
    %198 = vector.extract_strided_slice %187 {offsets = [0, 384], sizes = [8, 128], strides = [1, 1]} : vector<8x512xf32> to vector<8x128xf32>
    %199 = math.tanh %198 : vector<8x128xf32>
    %200 = vector.extract_strided_slice %197 {offsets = [0, 0], sizes = [8, 128], strides = [1, 1]} : vector<8x384xf32> to vector<8x128xf32>
    %201 = vector.extract_strided_slice %197 {offsets = [0, 128], sizes = [8, 128], strides = [1, 1]} : vector<8x384xf32> to vector<8x128xf32>
    %202 = vector.extract_strided_slice %197 {offsets = [0, 256], sizes = [8, 128], strides = [1, 1]} : vector<8x384xf32> to vector<8x128xf32>
    %203 = arith.mulf %201, %156 : vector<8x128xf32>
    %204 = arith.mulf %200, %199 : vector<8x128xf32>
    %205 = arith.addf %203, %204 : vector<8x128xf32>
    %206 = math.tanh %205 : vector<8x128xf32>
    %207 = arith.mulf %202, %206 : vector<8x128xf32>
    %208 = vector.extract_strided_slice %189 {offsets = [0, 0], sizes = [8, 384], strides = [1, 1]} : vector<8x512xf32> to vector<8x384xf32>
    %cst_59 = arith.constant 5.000000e-01 : f32
    %209 = vector.broadcast %cst_59 : f32 to vector<8x384xf32>
    %210 = arith.mulf %209, %208 : vector<8x384xf32>
    %211 = math.tanh %210 : vector<8x384xf32>
    %cst_60 = arith.constant 5.000000e-01 : f32
    %212 = vector.broadcast %cst_60 : f32 to vector<8x384xf32>
    %213 = arith.mulf %212, %211 : vector<8x384xf32>
    %cst_61 = arith.constant 5.000000e-01 : f32
    %214 = vector.broadcast %cst_61 : f32 to vector<8x384xf32>
    %215 = arith.addf %213, %214 : vector<8x384xf32>
    %216 = vector.extract_strided_slice %189 {offsets = [0, 384], sizes = [8, 128], strides = [1, 1]} : vector<8x512xf32> to vector<8x128xf32>
    %217 = math.tanh %216 : vector<8x128xf32>
    %218 = vector.extract_strided_slice %215 {offsets = [0, 0], sizes = [8, 128], strides = [1, 1]} : vector<8x384xf32> to vector<8x128xf32>
    %219 = vector.extract_strided_slice %215 {offsets = [0, 128], sizes = [8, 128], strides = [1, 1]} : vector<8x384xf32> to vector<8x128xf32>
    %220 = vector.extract_strided_slice %215 {offsets = [0, 256], sizes = [8, 128], strides = [1, 1]} : vector<8x384xf32> to vector<8x128xf32>
    %221 = arith.mulf %219, %174 : vector<8x128xf32>
    %222 = arith.mulf %218, %217 : vector<8x128xf32>
    %223 = arith.addf %221, %222 : vector<8x128xf32>
    %224 = math.tanh %223 : vector<8x128xf32>
    %225 = arith.mulf %220, %224 : vector<8x128xf32>
    %c4_i32 = arith.constant 4 : i32
    %226 = tpu.concatenate %207, %225 in 1 : vector<8x128xf32>, vector<8x128xf32> -> vector<8x256xf32>
    %227 = arith.truncf %226 : vector<8x256xf32> to vector<8x256xbf16>
    %c0_62 = arith.constant 0 : index
    %c0_63 = arith.constant 0 : index
    %228 = vector.load %arg3[%c0_62, %c0_63] : memref<256x1024xbf16, #tpu.memory_space<vmem>>, vector<256x1024xbf16>
    %cst_64 = arith.constant dense<0.000000e+00> : vector<8x1024xf32>
    %229 = tpu.matmul %227, %228, %cst_64 {dimension_numbers = #tpu.dot_dimension_numbers<[1], [0], [0], [1], [0, 0, 1, 1], [], []>} : vector<8x256xbf16>, vector<256x1024xbf16>, vector<8x1024xf32> -> vector<8x1024xf32>
    %230 = vector.extract_strided_slice %229 {offsets = [0, 0], sizes = [8, 512], strides = [1, 1]} : vector<8x1024xf32> to vector<8x512xf32>
    %c1_i32_65 = arith.constant 1 : i32
    %231 = arith.addi %c4_i32, %c1_i32_65 : i32
    %c8_i32_66 = arith.constant 8 : i32
    %232 = arith.muli %231, %c8_i32_66 : i32
    %233 = tpu.assume_multiple %232, 8 : i32
    %234 = arith.index_cast %233 : i32 to index
    %c0_67 = arith.constant 0 : index
    %235 = vector.load %arg8[%234, %c0_67] : memref<64x512xf32, #tpu.memory_space<vmem>>, vector<8x512xf32>
    %236 = arith.addf %230, %235 : vector<8x512xf32>
    %237 = vector.extract_strided_slice %229 {offsets = [0, 512], sizes = [8, 512], strides = [1, 1]} : vector<8x1024xf32> to vector<8x512xf32>
    %238 = arith.addf %237, %9 : vector<8x512xf32>
    %239 = vector.extract_strided_slice %236 {offsets = [0, 0], sizes = [8, 384], strides = [1, 1]} : vector<8x512xf32> to vector<8x384xf32>
    %cst_68 = arith.constant 5.000000e-01 : f32
    %240 = vector.broadcast %cst_68 : f32 to vector<8x384xf32>
    %241 = arith.mulf %240, %239 : vector<8x384xf32>
    %242 = math.tanh %241 : vector<8x384xf32>
    %cst_69 = arith.constant 5.000000e-01 : f32
    %243 = vector.broadcast %cst_69 : f32 to vector<8x384xf32>
    %244 = arith.mulf %243, %242 : vector<8x384xf32>
    %cst_70 = arith.constant 5.000000e-01 : f32
    %245 = vector.broadcast %cst_70 : f32 to vector<8x384xf32>
    %246 = arith.addf %244, %245 : vector<8x384xf32>
    %247 = vector.extract_strided_slice %236 {offsets = [0, 384], sizes = [8, 128], strides = [1, 1]} : vector<8x512xf32> to vector<8x128xf32>
    %248 = math.tanh %247 : vector<8x128xf32>
    %249 = vector.extract_strided_slice %246 {offsets = [0, 0], sizes = [8, 128], strides = [1, 1]} : vector<8x384xf32> to vector<8x128xf32>
    %250 = vector.extract_strided_slice %246 {offsets = [0, 128], sizes = [8, 128], strides = [1, 1]} : vector<8x384xf32> to vector<8x128xf32>
    %251 = vector.extract_strided_slice %246 {offsets = [0, 256], sizes = [8, 128], strides = [1, 1]} : vector<8x384xf32> to vector<8x128xf32>
    %252 = arith.mulf %250, %205 : vector<8x128xf32>
    %253 = arith.mulf %249, %248 : vector<8x128xf32>
    %254 = arith.addf %252, %253 : vector<8x128xf32>
    %255 = math.tanh %254 : vector<8x128xf32>
    %256 = arith.mulf %251, %255 : vector<8x128xf32>
    %257 = vector.extract_strided_slice %238 {offsets = [0, 0], sizes = [8, 384], strides = [1, 1]} : vector<8x512xf32> to vector<8x384xf32>
    %cst_71 = arith.constant 5.000000e-01 : f32
    %258 = vector.broadcast %cst_71 : f32 to vector<8x384xf32>
    %259 = arith.mulf %258, %257 : vector<8x384xf32>
    %260 = math.tanh %259 : vector<8x384xf32>
    %cst_72 = arith.constant 5.000000e-01 : f32
    %261 = vector.broadcast %cst_72 : f32 to vector<8x384xf32>
    %262 = arith.mulf %261, %260 : vector<8x384xf32>
    %cst_73 = arith.constant 5.000000e-01 : f32
    %263 = vector.broadcast %cst_73 : f32 to vector<8x384xf32>
    %264 = arith.addf %262, %263 : vector<8x384xf32>
    %265 = vector.extract_strided_slice %238 {offsets = [0, 384], sizes = [8, 128], strides = [1, 1]} : vector<8x512xf32> to vector<8x128xf32>
    %266 = math.tanh %265 : vector<8x128xf32>
    %267 = vector.extract_strided_slice %264 {offsets = [0, 0], sizes = [8, 128], strides = [1, 1]} : vector<8x384xf32> to vector<8x128xf32>
    %268 = vector.extract_strided_slice %264 {offsets = [0, 128], sizes = [8, 128], strides = [1, 1]} : vector<8x384xf32> to vector<8x128xf32>
    %269 = vector.extract_strided_slice %264 {offsets = [0, 256], sizes = [8, 128], strides = [1, 1]} : vector<8x384xf32> to vector<8x128xf32>
    %270 = arith.mulf %268, %223 : vector<8x128xf32>
    %271 = arith.mulf %267, %266 : vector<8x128xf32>
    %272 = arith.addf %270, %271 : vector<8x128xf32>
    %273 = math.tanh %272 : vector<8x128xf32>
    %274 = arith.mulf %269, %273 : vector<8x128xf32>
    %c5_i32 = arith.constant 5 : i32
    %275 = tpu.concatenate %256, %274 in 1 : vector<8x128xf32>, vector<8x128xf32> -> vector<8x256xf32>
    %276 = arith.truncf %275 : vector<8x256xf32> to vector<8x256xbf16>
    %c0_74 = arith.constant 0 : index
    %c0_75 = arith.constant 0 : index
    %277 = vector.load %arg3[%c0_74, %c0_75] : memref<256x1024xbf16, #tpu.memory_space<vmem>>, vector<256x1024xbf16>
    %cst_76 = arith.constant dense<0.000000e+00> : vector<8x1024xf32>
    %278 = tpu.matmul %276, %277, %cst_76 {dimension_numbers = #tpu.dot_dimension_numbers<[1], [0], [0], [1], [0, 0, 1, 1], [], []>} : vector<8x256xbf16>, vector<256x1024xbf16>, vector<8x1024xf32> -> vector<8x1024xf32>
    %279 = vector.extract_strided_slice %278 {offsets = [0, 0], sizes = [8, 512], strides = [1, 1]} : vector<8x1024xf32> to vector<8x512xf32>
    %c1_i32_77 = arith.constant 1 : i32
    %280 = arith.addi %c5_i32, %c1_i32_77 : i32
    %c8_i32_78 = arith.constant 8 : i32
    %281 = arith.muli %280, %c8_i32_78 : i32
    %282 = tpu.assume_multiple %281, 8 : i32
    %283 = arith.index_cast %282 : i32 to index
    %c0_79 = arith.constant 0 : index
    %284 = vector.load %arg8[%283, %c0_79] : memref<64x512xf32, #tpu.memory_space<vmem>>, vector<8x512xf32>
    %285 = arith.addf %279, %284 : vector<8x512xf32>
    %286 = vector.extract_strided_slice %278 {offsets = [0, 512], sizes = [8, 512], strides = [1, 1]} : vector<8x1024xf32> to vector<8x512xf32>
    %287 = arith.addf %286, %9 : vector<8x512xf32>
    %288 = vector.extract_strided_slice %285 {offsets = [0, 0], sizes = [8, 384], strides = [1, 1]} : vector<8x512xf32> to vector<8x384xf32>
    %cst_80 = arith.constant 5.000000e-01 : f32
    %289 = vector.broadcast %cst_80 : f32 to vector<8x384xf32>
    %290 = arith.mulf %289, %288 : vector<8x384xf32>
    %291 = math.tanh %290 : vector<8x384xf32>
    %cst_81 = arith.constant 5.000000e-01 : f32
    %292 = vector.broadcast %cst_81 : f32 to vector<8x384xf32>
    %293 = arith.mulf %292, %291 : vector<8x384xf32>
    %cst_82 = arith.constant 5.000000e-01 : f32
    %294 = vector.broadcast %cst_82 : f32 to vector<8x384xf32>
    %295 = arith.addf %293, %294 : vector<8x384xf32>
    %296 = vector.extract_strided_slice %285 {offsets = [0, 384], sizes = [8, 128], strides = [1, 1]} : vector<8x512xf32> to vector<8x128xf32>
    %297 = math.tanh %296 : vector<8x128xf32>
    %298 = vector.extract_strided_slice %295 {offsets = [0, 0], sizes = [8, 128], strides = [1, 1]} : vector<8x384xf32> to vector<8x128xf32>
    %299 = vector.extract_strided_slice %295 {offsets = [0, 128], sizes = [8, 128], strides = [1, 1]} : vector<8x384xf32> to vector<8x128xf32>
    %300 = vector.extract_strided_slice %295 {offsets = [0, 256], sizes = [8, 128], strides = [1, 1]} : vector<8x384xf32> to vector<8x128xf32>
    %301 = arith.mulf %299, %254 : vector<8x128xf32>
    %302 = arith.mulf %298, %297 : vector<8x128xf32>
    %303 = arith.addf %301, %302 : vector<8x128xf32>
    %304 = math.tanh %303 : vector<8x128xf32>
    %305 = arith.mulf %300, %304 : vector<8x128xf32>
    %306 = vector.extract_strided_slice %287 {offsets = [0, 0], sizes = [8, 384], strides = [1, 1]} : vector<8x512xf32> to vector<8x384xf32>
    %cst_83 = arith.constant 5.000000e-01 : f32
    %307 = vector.broadcast %cst_83 : f32 to vector<8x384xf32>
    %308 = arith.mulf %307, %306 : vector<8x384xf32>
    %309 = math.tanh %308 : vector<8x384xf32>
    %cst_84 = arith.constant 5.000000e-01 : f32
    %310 = vector.broadcast %cst_84 : f32 to vector<8x384xf32>
    %311 = arith.mulf %310, %309 : vector<8x384xf32>
    %cst_85 = arith.constant 5.000000e-01 : f32
    %312 = vector.broadcast %cst_85 : f32 to vector<8x384xf32>
    %313 = arith.addf %311, %312 : vector<8x384xf32>
    %314 = vector.extract_strided_slice %287 {offsets = [0, 384], sizes = [8, 128], strides = [1, 1]} : vector<8x512xf32> to vector<8x128xf32>
    %315 = math.tanh %314 : vector<8x128xf32>
    %316 = vector.extract_strided_slice %313 {offsets = [0, 0], sizes = [8, 128], strides = [1, 1]} : vector<8x384xf32> to vector<8x128xf32>
    %317 = vector.extract_strided_slice %313 {offsets = [0, 128], sizes = [8, 128], strides = [1, 1]} : vector<8x384xf32> to vector<8x128xf32>
    %318 = vector.extract_strided_slice %313 {offsets = [0, 256], sizes = [8, 128], strides = [1, 1]} : vector<8x384xf32> to vector<8x128xf32>
    %319 = arith.mulf %317, %272 : vector<8x128xf32>
    %320 = arith.mulf %316, %315 : vector<8x128xf32>
    %321 = arith.addf %319, %320 : vector<8x128xf32>
    %322 = math.tanh %321 : vector<8x128xf32>
    %323 = arith.mulf %318, %322 : vector<8x128xf32>
    %c6_i32 = arith.constant 6 : i32
    %324 = tpu.concatenate %305, %323 in 1 : vector<8x128xf32>, vector<8x128xf32> -> vector<8x256xf32>
    %325 = arith.truncf %324 : vector<8x256xf32> to vector<8x256xbf16>
    %c0_86 = arith.constant 0 : index
    %c0_87 = arith.constant 0 : index
    %326 = vector.load %arg3[%c0_86, %c0_87] : memref<256x1024xbf16, #tpu.memory_space<vmem>>, vector<256x1024xbf16>
    %cst_88 = arith.constant dense<0.000000e+00> : vector<8x1024xf32>
    %327 = tpu.matmul %325, %326, %cst_88 {dimension_numbers = #tpu.dot_dimension_numbers<[1], [0], [0], [1], [0, 0, 1, 1], [], []>} : vector<8x256xbf16>, vector<256x1024xbf16>, vector<8x1024xf32> -> vector<8x1024xf32>
    %328 = vector.extract_strided_slice %327 {offsets = [0, 0], sizes = [8, 512], strides = [1, 1]} : vector<8x1024xf32> to vector<8x512xf32>
    %c1_i32_89 = arith.constant 1 : i32
    %329 = arith.addi %c6_i32, %c1_i32_89 : i32
    %c8_i32_90 = arith.constant 8 : i32
    %330 = arith.muli %329, %c8_i32_90 : i32
    %331 = tpu.assume_multiple %330, 8 : i32
    %332 = arith.index_cast %331 : i32 to index
    %c0_91 = arith.constant 0 : index
    %333 = vector.load %arg8[%332, %c0_91] : memref<64x512xf32, #tpu.memory_space<vmem>>, vector<8x512xf32>
    %334 = arith.addf %328, %333 : vector<8x512xf32>
    %335 = vector.extract_strided_slice %327 {offsets = [0, 512], sizes = [8, 512], strides = [1, 1]} : vector<8x1024xf32> to vector<8x512xf32>
    %336 = arith.addf %335, %9 : vector<8x512xf32>
    %337 = vector.extract_strided_slice %334 {offsets = [0, 0], sizes = [8, 384], strides = [1, 1]} : vector<8x512xf32> to vector<8x384xf32>
    %cst_92 = arith.constant 5.000000e-01 : f32
    %338 = vector.broadcast %cst_92 : f32 to vector<8x384xf32>
    %339 = arith.mulf %338, %337 : vector<8x384xf32>
    %340 = math.tanh %339 : vector<8x384xf32>
    %cst_93 = arith.constant 5.000000e-01 : f32
    %341 = vector.broadcast %cst_93 : f32 to vector<8x384xf32>
    %342 = arith.mulf %341, %340 : vector<8x384xf32>
    %cst_94 = arith.constant 5.000000e-01 : f32
    %343 = vector.broadcast %cst_94 : f32 to vector<8x384xf32>
    %344 = arith.addf %342, %343 : vector<8x384xf32>
    %345 = vector.extract_strided_slice %334 {offsets = [0, 384], sizes = [8, 128], strides = [1, 1]} : vector<8x512xf32> to vector<8x128xf32>
    %346 = math.tanh %345 : vector<8x128xf32>
    %347 = vector.extract_strided_slice %344 {offsets = [0, 0], sizes = [8, 128], strides = [1, 1]} : vector<8x384xf32> to vector<8x128xf32>
    %348 = vector.extract_strided_slice %344 {offsets = [0, 128], sizes = [8, 128], strides = [1, 1]} : vector<8x384xf32> to vector<8x128xf32>
    %349 = vector.extract_strided_slice %344 {offsets = [0, 256], sizes = [8, 128], strides = [1, 1]} : vector<8x384xf32> to vector<8x128xf32>
    %350 = arith.mulf %348, %303 : vector<8x128xf32>
    %351 = arith.mulf %347, %346 : vector<8x128xf32>
    %352 = arith.addf %350, %351 : vector<8x128xf32>
    %353 = math.tanh %352 : vector<8x128xf32>
    %354 = arith.mulf %349, %353 : vector<8x128xf32>
    %355 = vector.extract_strided_slice %336 {offsets = [0, 0], sizes = [8, 384], strides = [1, 1]} : vector<8x512xf32> to vector<8x384xf32>
    %cst_95 = arith.constant 5.000000e-01 : f32
    %356 = vector.broadcast %cst_95 : f32 to vector<8x384xf32>
    %357 = arith.mulf %356, %355 : vector<8x384xf32>
    %358 = math.tanh %357 : vector<8x384xf32>
    %cst_96 = arith.constant 5.000000e-01 : f32
    %359 = vector.broadcast %cst_96 : f32 to vector<8x384xf32>
    %360 = arith.mulf %359, %358 : vector<8x384xf32>
    %cst_97 = arith.constant 5.000000e-01 : f32
    %361 = vector.broadcast %cst_97 : f32 to vector<8x384xf32>
    %362 = arith.addf %360, %361 : vector<8x384xf32>
    %363 = vector.extract_strided_slice %336 {offsets = [0, 384], sizes = [8, 128], strides = [1, 1]} : vector<8x512xf32> to vector<8x128xf32>
    %364 = math.tanh %363 : vector<8x128xf32>
    %365 = vector.extract_strided_slice %362 {offsets = [0, 0], sizes = [8, 128], strides = [1, 1]} : vector<8x384xf32> to vector<8x128xf32>
    %366 = vector.extract_strided_slice %362 {offsets = [0, 128], sizes = [8, 128], strides = [1, 1]} : vector<8x384xf32> to vector<8x128xf32>
    %367 = vector.extract_strided_slice %362 {offsets = [0, 256], sizes = [8, 128], strides = [1, 1]} : vector<8x384xf32> to vector<8x128xf32>
    %368 = arith.mulf %366, %321 : vector<8x128xf32>
    %369 = arith.mulf %365, %364 : vector<8x128xf32>
    %370 = arith.addf %368, %369 : vector<8x128xf32>
    %371 = math.tanh %370 : vector<8x128xf32>
    %372 = arith.mulf %367, %371 : vector<8x128xf32>
    %c7_i32 = arith.constant 7 : i32
    %373 = tpu.concatenate %354, %372 in 1 : vector<8x128xf32>, vector<8x128xf32> -> vector<8x256xf32>
    %374 = arith.truncf %373 : vector<8x256xf32> to vector<8x256xbf16>
    %c0_98 = arith.constant 0 : index
    %c0_99 = arith.constant 0 : index
    %375 = vector.load %arg3[%c0_98, %c0_99] : memref<256x1024xbf16, #tpu.memory_space<vmem>>, vector<256x1024xbf16>
    %cst_100 = arith.constant dense<0.000000e+00> : vector<8x1024xf32>
    %376 = tpu.matmul %374, %375, %cst_100 {dimension_numbers = #tpu.dot_dimension_numbers<[1], [0], [0], [1], [0, 0, 1, 1], [], []>} : vector<8x256xbf16>, vector<256x1024xbf16>, vector<8x1024xf32> -> vector<8x1024xf32>
    %377 = vector.extract_strided_slice %376 {offsets = [0, 512], sizes = [8, 512], strides = [1, 1]} : vector<8x1024xf32> to vector<8x512xf32>
    %378 = arith.addf %377, %9 : vector<8x512xf32>
    %379 = vector.extract_strided_slice %378 {offsets = [0, 0], sizes = [8, 384], strides = [1, 1]} : vector<8x512xf32> to vector<8x384xf32>
    %cst_101 = arith.constant 5.000000e-01 : f32
    %380 = vector.broadcast %cst_101 : f32 to vector<8x384xf32>
    %381 = arith.mulf %380, %379 : vector<8x384xf32>
    %382 = math.tanh %381 : vector<8x384xf32>
    %cst_102 = arith.constant 5.000000e-01 : f32
    %383 = vector.broadcast %cst_102 : f32 to vector<8x384xf32>
    %384 = arith.mulf %383, %382 : vector<8x384xf32>
    %cst_103 = arith.constant 5.000000e-01 : f32
    %385 = vector.broadcast %cst_103 : f32 to vector<8x384xf32>
    %386 = arith.addf %384, %385 : vector<8x384xf32>
    %387 = vector.extract_strided_slice %378 {offsets = [0, 384], sizes = [8, 128], strides = [1, 1]} : vector<8x512xf32> to vector<8x128xf32>
    %388 = math.tanh %387 : vector<8x128xf32>
    %389 = vector.extract_strided_slice %386 {offsets = [0, 0], sizes = [8, 128], strides = [1, 1]} : vector<8x384xf32> to vector<8x128xf32>
    %390 = vector.extract_strided_slice %386 {offsets = [0, 128], sizes = [8, 128], strides = [1, 1]} : vector<8x384xf32> to vector<8x128xf32>
    %391 = vector.extract_strided_slice %386 {offsets = [0, 256], sizes = [8, 128], strides = [1, 1]} : vector<8x384xf32> to vector<8x128xf32>
    %392 = arith.mulf %390, %370 : vector<8x128xf32>
    %393 = arith.mulf %389, %388 : vector<8x128xf32>
    %394 = arith.addf %392, %393 : vector<8x128xf32>
    %395 = math.tanh %394 : vector<8x128xf32>
    %396 = arith.mulf %391, %395 : vector<8x128xf32>
    %c0_104 = arith.constant 0 : index
    %c0_105 = arith.constant 0 : index
    %397 = vector.load %arg5[%c0_104, %c0_105] : memref<128x128xf32, #tpu.memory_space<vmem>>, vector<128x128xf32>
    %cst_106 = arith.constant dense<0.000000e+00> : vector<8x128xf32>
    %398 = tpu.matmul %396, %397, %cst_106 {dimension_numbers = #tpu.dot_dimension_numbers<[1], [0], [0], [1], [0, 0, 1, 1], [], []>} : vector<8x128xf32>, vector<128x128xf32>, vector<8x128xf32> -> vector<8x128xf32>
    %c0_107 = arith.constant 0 : index
    %c0_108 = arith.constant 0 : index
    %399 = vector.load %arg6[%c0_107, %c0_108] : memref<1x128xf32, #tpu.memory_space<vmem>>, vector<1x128xf32>
    %400 = vector.broadcast %399 : vector<1x128xf32> to vector<8x128xf32>
    %401 = arith.addf %398, %400 : vector<8x128xf32>
    %cst_109 = arith.constant 0.000000e+00 : f32
    %402 = vector.broadcast %cst_109 : f32 to vector<8x128xf32>
    %403 = arith.maximumf %401, %402 : vector<8x128xf32>
    %c0_110 = arith.constant 0 : index
    %c0_111 = arith.constant 0 : index
    %404 = vector.load %arg7[%c0_110, %c0_111] : memref<8x128xf32, #tpu.memory_space<vmem>>, vector<8x128xf32>
    tpu.vector_store %arg7[%c0_110, %c0_111], %403 {strides = array<i32>} : memref<8x128xf32, #tpu.memory_space<vmem>>, vector<8x128xf32>,
    return
  }
}

</mosaic_0001>

<llo_original>
// kernel: lstm_model_pallas.1
$region0: #{lstm_model_pallas.1}
  #allocation0 [shape = 'u32[]', space=smem, size = 0x4, offset = 0x4, fixed_abs, tag = 'smem constant byte address 0x4 - core index']
  #allocation1 [shape = 'u32[72,128]{1,0:T(1,128)}', space=vmem, size = 0x9000, scoped, tag = 'internal scratch']
  #allocation2 [shape = 'f32[64,512]{1,0:T(8,128)}', space=vmem, size = 0x20000, scoped, tag = 'scratch operand']
  %s0 = inlined_call_operand.vmem [shape: f32[64,8], index: 0, kind: input, shape index: {}]
  %s1 = inlined_call_operand.vmem [shape: f32[8,512], index: 1, kind: input, shape index: {}]
  %s2 = inlined_call_operand.vmem [shape: f32[1,512], index: 2, kind: input, shape index: {}]
  %s3 = inlined_call_operand.vmem [shape: bf16[256,1024], index: 3, kind: input, shape index: {}]
  %s4 = inlined_call_operand.vmem [shape: f32[1,512], index: 4, kind: input, shape index: {}]
  %s5 = inlined_call_operand.vmem [shape: f32[128,128], index: 5, kind: input, shape index: {}]
  %s6 = inlined_call_operand.vmem [shape: f32[1,128], index: 6, kind: input, shape index: {}]
  %s7 = inlined_call_operand.vmem [shape: f32[8,128], index: 7, kind: output, shape index: {}]
  %s8 = sld [smem:[#allocation0]]
  $region38: #{lstm_model_pallas.1} parent=0
    _
  %s10 = ssub.s32 1, %s8
  %s11 = scalar_select 0, %s10, %s8
  // Predicated region
  $region2: #{lstm_model_pallas.1} parent=0 // pred_check
    _
  $region3: #{lstm_model_pallas.1} parent=0 // pred_check_branch
    %13 = sbr.rel (0) target = $region5
  $region4: #{lstm_model_pallas.1} parent=0 // pred_region
    _
  $region5: #{lstm_model_pallas.1} parent=0 // pred_fallthru
    _
  // Predicated region
  $region6: #{lstm_model_pallas.1} parent=0 // pred_check
    _
  $region7: #{lstm_model_pallas.1} parent=0 // pred_check_branch
    %15 = sbr.rel (0) target = $region9
  $region8: #{lstm_model_pallas.1} parent=0 // pred_region
    _
  $region9: #{lstm_model_pallas.1} parent=0 // pred_fallthru
    _
  // Predicated region
  $region10: #{lstm_model_pallas.1} parent=0 // pred_check
    _
  $region11: #{lstm_model_pallas.1} parent=0 // pred_check_branch
    %17 = sbr.rel (0) target = $region13
  $region12: #{lstm_model_pallas.1} parent=0 // pred_region
    _
  $region13: #{lstm_model_pallas.1} parent=0 // pred_fallthru
    _
  // Predicated region
  $region14: #{lstm_model_pallas.1} parent=0 // pred_check
    _
  $region15: #{lstm_model_pallas.1} parent=0 // pred_check_branch
    %19 = sbr.rel (0) target = $region17
  $region16: #{lstm_model_pallas.1} parent=0 // pred_region
    _
  $region17: #{lstm_model_pallas.1} parent=0 // pred_fallthru
    _
  // Predicated region
  $region18: #{lstm_model_pallas.1} parent=0 // pred_check
    _
  $region19: #{lstm_model_pallas.1} parent=0 // pred_check_branch
    %21 = sbr.rel (0) target = $region21
  $region20: #{lstm_model_pallas.1} parent=0 // pred_region
    _
  $region21: #{lstm_model_pallas.1} parent=0 // pred_fallthru
    _
  // Predicated region
  $region22: #{lstm_model_pallas.1} parent=0 // pred_check
    _
  $region23: #{lstm_model_pallas.1} parent=0 // pred_check_branch
    %23 = sbr.rel (0) target = $region25
  $region24: #{lstm_model_pallas.1} parent=0 // pred_region
    _
  $region25: #{lstm_model_pallas.1} parent=0 // pred_fallthru
    _
  // Predicated region
  $region26: #{lstm_model_pallas.1} parent=0 // pred_check
    _
  $region27: #{lstm_model_pallas.1} parent=0 // pred_check_branch
    %25 = sbr.rel (0) target = $region29
  $region28: #{lstm_model_pallas.1} parent=0 // pred_region
    _
  $region29: #{lstm_model_pallas.1} parent=0 // pred_fallthru
    _
  %v26 = vld [vmem:[%s0] sm:$0xff]
  %v27 = vld [vmem:[%s0 + $0x8] sm:$0xff]
  %v28 = vld [vmem:[%s0 + $0x10] sm:$0xff]
  %v29 = vld [vmem:[%s0 + $0x18] sm:$0xff]
  %v30 = vld [vmem:[%s0 + $0x20] sm:$0xff]
  %v31 = vld [vmem:[%s0 + $0x28] sm:$0xff]
  %v32 = vld [vmem:[%s0 + $0x30] sm:$0xff]
  %v33 = vld [vmem:[%s0 + $0x38] sm:$0xff]
  %v34 = vld [vmem:[%s1] sm:$0xff]
  %v35 = vld [vmem:[%s1 + $0x8] sm:$0xff]
  %v36 = vld [vmem:[%s1 + $0x10] sm:$0xff]
  %v37 = vld [vmem:[%s1 + $0x18] sm:$0xff]
  %v38 = vld [vmem:[%s2] sm:$0xf]
  %v40 = vperm.slane %v38, 0
  %v41 = vperm.slane %v38, 1
  %v42 = vperm.slane %v38, 2
  %v43 = vperm.slane %v38, 3
  %vm48 = vcmask 64512
  %v50 = vsel %vm48, %v26, 0
  %v53 = vsel %vm48, %v27, 0
  %v56 = vsel %vm48, %v28, 0
  %v59 = vsel %vm48, %v29, 0
  %v62 = vsel %vm48, %v30, 0
  %v65 = vsel %vm48, %v31, 0
  %v68 = vsel %vm48, %v32, 0
  %v71 = vsel %vm48, %v33, 0
  %73 = vmatpush.msra.mxu0 0.0
  %74 = vmatpush.msra.mxu0 0.0
  %75 = vmatpush.msra.mxu0 0.0
  %76 = vmatpush.msra.mxu0 0.0
  %77 = vmatpush.msra.mxu0 0.0
  %78 = vmatpush.msra.mxu0 0.0
  %79 = vmatpush.msra.mxu0 0.0
  %80 = vmatpush.msra.mxu0 0.0
  %81 = vmatpush.msra.mxu0 0.0
  %82 = vmatpush.msra.mxu0 0.0
  %83 = vmatpush.msra.mxu0 0.0
  %84 = vmatpush.msra.mxu0 0.0
  %85 = vmatpush.msra.mxu0 0.0
  %86 = vmatpush.msra.mxu0 0.0
  %87 = vmatpush.msra.mxu0 0.0
  %88 = vmatpush.msra.mxu0 %v34
  %89 = vmatmul.f32.gmra.mxu0 %v50
  %v90 = vpop.f32.mrf.mxu0
  %v91 = vadd.f32 %v40, %v90
  %92 = vmatmul.f32.gmra.mxu0 %v53
  %v93 = vpop.f32.mrf.mxu0
  %v94 = vadd.f32 %v40, %v93
  %95 = vmatmul.f32.gmra.mxu0 %v56
  %v96 = vpop.f32.mrf.mxu0
  %v97 = vadd.f32 %v40, %v96
  %98 = vmatmul.f32.gmra.mxu0 %v59
  %v99 = vpop.f32.mrf.mxu0
  %v100 = vadd.f32 %v40, %v99
  %101 = vmatmul.f32.gmra.mxu0 %v62
  %v102 = vpop.f32.mrf.mxu0
  %v103 = vadd.f32 %v40, %v102
  %104 = vmatmul.f32.gmra.mxu0 %v65
  %v105 = vpop.f32.mrf.mxu0
  %v106 = vadd.f32 %v40, %v105
  %107 = vmatmul.f32.gmra.mxu0 %v68
  %v108 = vpop.f32.mrf.mxu0
  %v109 = vadd.f32 %v40, %v108
  %110 = vmatmul.f32.gmra.mxu0 %v71
  %v111 = vpop.f32.mrf.mxu0
  %v112 = vadd.f32 %v40, %v111
  %113 = vdwg.mxu0
  %114 = vmatpush.msra.mxu0 0.0
  %115 = vmatpush.msra.mxu0 0.0
  %116 = vmatpush.msra.mxu0 0.0
  %117 = vmatpush.msra.mxu0 0.0
  %118 = vmatpush.msra.mxu0 0.0
  %119 = vmatpush.msra.mxu0 0.0
  %120 = vmatpush.msra.mxu0 0.0
  %121 = vmatpush.msra.mxu0 0.0
  %122 = vmatpush.msra.mxu0 0.0
  %123 = vmatpush.msra.mxu0 0.0
  %124 = vmatpush.msra.mxu0 0.0
  %125 = vmatpush.msra.mxu0 0.0
  %126 = vmatpush.msra.mxu0 0.0
  %127 = vmatpush.msra.mxu0 0.0
  %128 = vmatpush.msra.mxu0 0.0
  %129 = vmatpush.msra.mxu0 %v35
  %130 = vmatmul.f32.gmra.mxu0 %v50
  %v131 = vpop.f32.mrf.mxu0
  %v132 = vadd.f32 %v41, %v131
  %133 = vmatmul.f32.gmra.mxu0 %v53
  %v134 = vpop.f32.mrf.mxu0
  %v135 = vadd.f32 %v41, %v134
  %136 = vmatmul.f32.gmra.mxu0 %v56
  %v137 = vpop.f32.mrf.mxu0
  %v138 = vadd.f32 %v41, %v137
  %139 = vmatmul.f32.gmra.mxu0 %v59
  %v140 = vpop.f32.mrf.mxu0
  %v141 = vadd.f32 %v41, %v140
  %142 = vmatmul.f32.gmra.mxu0 %v62
  %v143 = vpop.f32.mrf.mxu0
  %v144 = vadd.f32 %v41, %v143
  %145 = vmatmul.f32.gmra.mxu0 %v65
  %v146 = vpop.f32.mrf.mxu0
  %v147 = vadd.f32 %v41, %v146
  %148 = vmatmul.f32.gmra.mxu0 %v68
  %v149 = vpop.f32.mrf.mxu0
  %v150 = vadd.f32 %v41, %v149
  %151 = vmatmul.f32.gmra.mxu0 %v71
  %v152 = vpop.f32.mrf.mxu0
  %v153 = vadd.f32 %v41, %v152
  %154 = vdwg.mxu0
  %155 = vmatpush.msra.mxu0 0.0
  %156 = vmatpush.msra.mxu0 0.0
  %157 = vmatpush.msra.mxu0 0.0
  %158 = vmatpush.msra.mxu0 0.0
  %159 = vmatpush.msra.mxu0 0.0
  %160 = vmatpush.msra.mxu0 0.0
  %161 = vmatpush.msra.mxu0 0.0
  %162 = vmatpush.msra.mxu0 0.0
  %163 = vmatpush.msra.mxu0 0.0
  %164 = vmatpush.msra.mxu0 0.0
  %165 = vmatpush.msra.mxu0 0.0
  %166 = vmatpush.msra.mxu0 0.0
  %167 = vmatpush.msra.mxu0 0.0
  %168 = vmatpush.msra.mxu0 0.0
  %169 = vmatpush.msra.mxu0 0.0
  %170 = vmatpush.msra.mxu0 %v36
  %171 = vmatmul.f32.gmra.mxu0 %v50
  %v172 = vpop.f32.mrf.mxu0
  %v173 = vadd.f32 %v42, %v172
  %174 = vmatmul.f32.gmra.mxu0 %v53
  %v175 = vpop.f32.mrf.mxu0
  %v176 = vadd.f32 %v42, %v175
  %177 = vmatmul.f32.gmra.mxu0 %v56
  %v178 = vpop.f32.mrf.mxu0
  %v179 = vadd.f32 %v42, %v178
  %180 = vmatmul.f32.gmra.mxu0 %v59
  %v181 = vpop.f32.mrf.mxu0
  %v182 = vadd.f32 %v42, %v181
  %183 = vmatmul.f32.gmra.mxu0 %v62
  %v184 = vpop.f32.mrf.mxu0
  %v185 = vadd.f32 %v42, %v184
  %186 = vmatmul.f32.gmra.mxu0 %v65
  %v187 = vpop.f32.mrf.mxu0
  %v188 = vadd.f32 %v42, %v187
  %189 = vmatmul.f32.gmra.mxu0 %v68
  %v190 = vpop.f32.mrf.mxu0
  %v191 = vadd.f32 %v42, %v190
  %192 = vmatmul.f32.gmra.mxu0 %v71
  %v193 = vpop.f32.mrf.mxu0
  %v194 = vadd.f32 %v42, %v193
  %195 = vdwg.mxu0
  %196 = vmatpush.msra.mxu0 0.0
  %197 = vmatpush.msra.mxu0 0.0
  %198 = vmatpush.msra.mxu0 0.0
  %199 = vmatpush.msra.mxu0 0.0
  %200 = vmatpush.msra.mxu0 0.0
  %201 = vmatpush.msra.mxu0 0.0
  %202 = vmatpush.msra.mxu0 0.0
  %203 = vmatpush.msra.mxu0 0.0
  %204 = vmatpush.msra.mxu0 0.0
  %205 = vmatpush.msra.mxu0 0.0
  %206 = vmatpush.msra.mxu0 0.0
  %207 = vmatpush.msra.mxu0 0.0
  %208 = vmatpush.msra.mxu0 0.0
  %209 = vmatpush.msra.mxu0 0.0
  %210 = vmatpush.msra.mxu0 0.0
  %211 = vmatpush.msra.mxu0 %v37
  %212 = vmatmul.f32.gmra.mxu0 %v50
  %v213 = vpop.f32.mrf.mxu0
  %v214 = vadd.f32 %v43, %v213
  %215 = vmatmul.f32.gmra.mxu0 %v53
  %v216 = vpop.f32.mrf.mxu0
  %v217 = vadd.f32 %v43, %v216
  %218 = vmatmul.f32.gmra.mxu0 %v56
  %v219 = vpop.f32.mrf.mxu0
  %v220 = vadd.f32 %v43, %v219
  %221 = vmatmul.f32.gmra.mxu0 %v59
  %v222 = vpop.f32.mrf.mxu0
  %v223 = vadd.f32 %v43, %v222
  %224 = vmatmul.f32.gmra.mxu0 %v62
  %v225 = vpop.f32.mrf.mxu0
  %v226 = vadd.f32 %v43, %v225
  %227 = vmatmul.f32.gmra.mxu0 %v65
  %v228 = vpop.f32.mrf.mxu0
  %v229 = vadd.f32 %v43, %v228
  %230 = vmatmul.f32.gmra.mxu0 %v68
  %v231 = vpop.f32.mrf.mxu0
  %v232 = vadd.f32 %v43, %v231
  %233 = vmatmul.f32.gmra.mxu0 %v71
  %v234 = vpop.f32.mrf.mxu0
  %v235 = vadd.f32 %v43, %v234
  %236 = vdwg.mxu0
  %237 = vst [vmem:[#allocation2] sm:$0xff] %v91
  %238 = vst [vmem:[#allocation2 + $0x8] sm:$0xff] %v132
  %239 = vst [vmem:[#allocation2 + $0x10] sm:$0xff] %v173
  %240 = vst [vmem:[#allocation2 + $0x18] sm:$0xff] %v214
  %241 = vst [vmem:[#allocation2 + $0x20] sm:$0xff] %v94
  %242 = vst [vmem:[#allocation2 + $0x28] sm:$0xff] %v135
  %243 = vst [vmem:[#allocation2 + $0x30] sm:$0xff] %v176
  %244 = vst [vmem:[#allocation2 + $0x38] sm:$0xff] %v217
  %245 = vst [vmem:[#allocation2 + $0x40] sm:$0xff] %v97
  %246 = vst [vmem:[#allocation2 + $0x48] sm:$0xff] %v138
  %247 = vst [vmem:[#allocation2 + $0x50] sm:$0xff] %v179
  %248 = vst [vmem:[#allocation2 + $0x58] sm:$0xff] %v220
  %249 = vst [vmem:[#allocation2 + $0x60] sm:$0xff] %v100
  %250 = vst [vmem:[#allocation2 + $0x68] sm:$0xff] %v141
  %251 = vst [vmem:[#allocation2 + $0x70] sm:$0xff] %v182
  %252 = vst [vmem:[#allocation2 + $0x78] sm:$0xff] %v223
  %253 = vst [vmem:[#allocation2 + $0x80] sm:$0xff] %v103
  %254 = vst [vmem:[#allocation2 + $0x88] sm:$0xff] %v144
  %255 = vst [vmem:[#allocation2 + $0x90] sm:$0xff] %v185
  %256 = vst [vmem:[#allocation2 + $0x98] sm:$0xff] %v226
  %257 = vst [vmem:[#allocation2 + $0xa0] sm:$0xff] %v106
  %258 = vst [vmem:[#allocation2 + $0xa8] sm:$0xff] %v147
  %259 = vst [vmem:[#allocation2 + $0xb0] sm:$0xff] %v188
  %260 = vst [vmem:[#allocation2 + $0xb8] sm:$0xff] %v229
  %261 = vst [vmem:[#allocation2 + $0xc0] sm:$0xff] %v109
  %262 = vst [vmem:[#allocation2 + $0xc8] sm:$0xff] %v150
  %263 = vst [vmem:[#allocation2 + $0xd0] sm:$0xff] %v191
  %264 = vst [vmem:[#allocation2 + $0xd8] sm:$0xff] %v232
  %265 = vst [vmem:[#allocation2 + $0xe0] sm:$0xff] %v112
  %266 = vst [vmem:[#allocation2 + $0xe8] sm:$0xff] %v153
  %267 = vst [vmem:[#allocation2 + $0xf0] sm:$0xff] %v194
  %268 = vst [vmem:[#allocation2 + $0xf8] sm:$0xff] %v235
  %v269 = vld [vmem:[%s4] sm:$0xf]
  %v271 = vperm.slane %v269, 0
  %v272 = vperm.slane %v269, 1
  %v273 = vperm.slane %v269, 2
  %v274 = vperm.slane %v269, 3
  %v279 = vld [vmem:[#allocation2] sm:$0xff]
  %v280 = vld [vmem:[#allocation2 + $0x8] sm:$0xff]
  %v281 = vld [vmem:[#allocation2 + $0x10] sm:$0xff]
  %v282 = vld [vmem:[#allocation2 + $0x18] sm:$0xff]
  %v283 = vmul.f32 %v279, 0.5
  %v284 = vmul.f32 %v280, 0.5
  %v285 = vmul.f32 %v281, 0.5
  %v286 = vtanh.pop %v283
  %v287 = vtanh.pop %v284
  %v288 = vtanh.pop %v285
  %v289 = vmul.f32 %v286, 0.5
  %v290 = vmul.f32 %v287, 0.5
  %v291 = vmul.f32 %v288, 0.5
  %v292 = vadd.f32 %v289, 0.5
  %v293 = vadd.f32 %v290, 0.5
  %v294 = vadd.f32 %v291, 0.5
  %v295 = vtanh.pop %v282
  %v296 = vmul.f32 %v293, 0.0
  %v297 = vmul.f32 %v292, %v295
  %v298 = vadd.f32 %v296, %v297
  %v299 = vtanh.pop %v298
  %v300 = vmul.f32 %v294, %v299
  %v301 = vpack.c.bf16 %v300, %v300
  %v302 = vpack.c.bf16 0.0, 0.0
  %v303 = vld [vmem:[%s3] sm:$0xff]
  %v304 = vld [vmem:[%s3 + $0x8] sm:$0xff]
  %v305 = vld [vmem:[%s3 + $0x10] sm:$0xff]
  %v306 = vld [vmem:[%s3 + $0x18] sm:$0xff]
  %v307 = vld [vmem:[%s3 + $0x20] sm:$0xff]
  %v308 = vld [vmem:[%s3 + $0x28] sm:$0xff]
  %v309 = vld [vmem:[%s3 + $0x30] sm:$0xff]
  %v310 = vld [vmem:[%s3 + $0x38] sm:$0xff]
  %v311 = vld [vmem:[%s3 + $0x40] sm:$0xff]
  %v312 = vld [vmem:[%s3 + $0x48] sm:$0xff]
  %v313 = vld [vmem:[%s3 + $0x50] sm:$0xff]
  %v314 = vld [vmem:[%s3 + $0x58] sm:$0xff]
  %v315 = vld [vmem:[%s3 + $0x60] sm:$0xff]
  %v316 = vld [vmem:[%s3 + $0x68] sm:$0xff]
  %v317 = vld [vmem:[%s3 + $0x70] sm:$0xff]
  %v318 = vld [vmem:[%s3 + $0x78] sm:$0xff]
  %v319 = vld [vmem:[%s3 + $0x80] sm:$0xff]
  %v320 = vld [vmem:[%s3 + $0x88] sm:$0xff]
  %v321 = vld [vmem:[%s3 + $0x90] sm:$0xff]
  %v322 = vld [vmem:[%s3 + $0x98] sm:$0xff]
  %v323 = vld [vmem:[%s3 + $0xa0] sm:$0xff]
  %v324 = vld [vmem:[%s3 + $0xa8] sm:$0xff]
  %v325 = vld [vmem:[%s3 + $0xb0] sm:$0xff]
  %v326 = vld [vmem:[%s3 + $0xb8] sm:$0xff]
  %v327 = vld [vmem:[%s3 + $0xc0] sm:$0xff]
  %v328 = vld [vmem:[%s3 + $0xc8] sm:$0xff]
  %v329 = vld [vmem:[%s3 + $0xd0] sm:$0xff]
  %v330 = vld [vmem:[%s3 + $0xd8] sm:$0xff]
  %v331 = vld [vmem:[%s3 + $0xe0] sm:$0xff]
  %v332 = vld [vmem:[%s3 + $0xe8] sm:$0xff]
  %v333 = vld [vmem:[%s3 + $0xf0] sm:$0xff]
  %v334 = vld [vmem:[%s3 + $0xf8] sm:$0xff]
  %v335 = vld [vmem:[%s3 + $0x100] sm:$0xff]
  %v336 = vld [vmem:[%s3 + $0x108] sm:$0xff]
  %v337 = vld [vmem:[%s3 + $0x110] sm:$0xff]
  %v338 = vld [vmem:[%s3 + $0x118] sm:$0xff]
  %v339 = vld [vmem:[%s3 + $0x120] sm:$0xff]
  %v340 = vld [vmem:[%s3 + $0x128] sm:$0xff]
  %v341 = vld [vmem:[%s3 + $0x130] sm:$0xff]
  %v342 = vld [vmem:[%s3 + $0x138] sm:$0xff]
  %v343 = vld [vmem:[%s3 + $0x140] sm:$0xff]
  %v344 = vld [vmem:[%s3 + $0x148] sm:$0xff]
  %v345 = vld [vmem:[%s3 + $0x150] sm:$0xff]
  %v346 = vld [vmem:[%s3 + $0x158] sm:$0xff]
  %v347 = vld [vmem:[%s3 + $0x160] sm:$0xff]
  %v348 = vld [vmem:[%s3 + $0x168] sm:$0xff]
  %v349 = vld [vmem:[%s3 + $0x170] sm:$0xff]
  %v350 = vld [vmem:[%s3 + $0x178] sm:$0xff]
  %v351 = vld [vmem:[%s3 + $0x180] sm:$0xff]
  %v352 = vld [vmem:[%s3 + $0x188] sm:$0xff]
  %v353 = vld [vmem:[%s3 + $0x190] sm:$0xff]
  %v354 = vld [vmem:[%s3 + $0x198] sm:$0xff]
  %v355 = vld [vmem:[%s3 + $0x1a0] sm:$0xff]
  %v356 = vld [vmem:[%s3 + $0x1a8] sm:$0xff]
  %v357 = vld [vmem:[%s3 + $0x1b0] sm:$0xff]
  %v358 = vld [vmem:[%s3 + $0x1b8] sm:$0xff]
  %v359 = vld [vmem:[%s3 + $0x1c0] sm:$0xff]
  %v360 = vld [vmem:[%s3 + $0x1c8] sm:$0xff]
  %v361 = vld [vmem:[%s3 + $0x1d0] sm:$0xff]
  %v362 = vld [vmem:[%s3 + $0x1d8] sm:$0xff]
  %v363 = vld [vmem:[%s3 + $0x1e0] sm:$0xff]
  %v364 = vld [vmem:[%s3 + $0x1e8] sm:$0xff]
  %v365 = vld [vmem:[%s3 + $0x1f0] sm:$0xff]
  %v366 = vld [vmem:[%s3 + $0x1f8] sm:$0xff]
  %v367 = vld [vmem:[%s3 + $0x200] sm:$0xff]
  %v368 = vld [vmem:[%s3 + $0x208] sm:$0xff]
  %v369 = vld [vmem:[%s3 + $0x210] sm:$0xff]
  %v370 = vld [vmem:[%s3 + $0x218] sm:$0xff]
  %v371 = vld [vmem:[%s3 + $0x220] sm:$0xff]
  %v372 = vld [vmem:[%s3 + $0x228] sm:$0xff]
  %v373 = vld [vmem:[%s3 + $0x230] sm:$0xff]
  %v374 = vld [vmem:[%s3 + $0x238] sm:$0xff]
  %v375 = vld [vmem:[%s3 + $0x240] sm:$0xff]
  %v376 = vld [vmem:[%s3 + $0x248] sm:$0xff]
  %v377 = vld [vmem:[%s3 + $0x250] sm:$0xff]
  %v378 = vld [vmem:[%s3 + $0x258] sm:$0xff]
  %v379 = vld [vmem:[%s3 + $0x260] sm:$0xff]
  %v380 = vld [vmem:[%s3 + $0x268] sm:$0xff]
  %v381 = vld [vmem:[%s3 + $0x270] sm:$0xff]
  %v382 = vld [vmem:[%s3 + $0x278] sm:$0xff]
  %v383 = vld [vmem:[%s3 + $0x280] sm:$0xff]
  %v384 = vld [vmem:[%s3 + $0x288] sm:$0xff]
  %v385 = vld [vmem:[%s3 + $0x290] sm:$0xff]
  %v386 = vld [vmem:[%s3 + $0x298] sm:$0xff]
  %v387 = vld [vmem:[%s3 + $0x2a0] sm:$0xff]
  %v388 = vld [vmem:[%s3 + $0x2a8] sm:$0xff]
  %v389 = vld [vmem:[%s3 + $0x2b0] sm:$0xff]
  %v390 = vld [vmem:[%s3 + $0x2b8] sm:$0xff]
  %v391 = vld [vmem:[%s3 + $0x2c0] sm:$0xff]
  %v392 = vld [vmem:[%s3 + $0x2c8] sm:$0xff]
  %v393 = vld [vmem:[%s3 + $0x2d0] sm:$0xff]
  %v394 = vld [vmem:[%s3 + $0x2d8] sm:$0xff]
  %v395 = vld [vmem:[%s3 + $0x2e0] sm:$0xff]
  %v396 = vld [vmem:[%s3 + $0x2e8] sm:$0xff]
  %v397 = vld [vmem:[%s3 + $0x2f0] sm:$0xff]
  %v398 = vld [vmem:[%s3 + $0x2f8] sm:$0xff]
  %v399 = vld [vmem:[%s3 + $0x300] sm:$0xff]
  %v400 = vld [vmem:[%s3 + $0x308] sm:$0xff]
  %v401 = vld [vmem:[%s3 + $0x310] sm:$0xff]
  %v402 = vld [vmem:[%s3 + $0x318] sm:$0xff]
  %v403 = vld [vmem:[%s3 + $0x320] sm:$0xff]
  %v404 = vld [vmem:[%s3 + $0x328] sm:$0xff]
  %v405 = vld [vmem:[%s3 + $0x330] sm:$0xff]
  %v406 = vld [vmem:[%s3 + $0x338] sm:$0xff]
  %v407 = vld [vmem:[%s3 + $0x340] sm:$0xff]
  %v408 = vld [vmem:[%s3 + $0x348] sm:$0xff]
  %v409 = vld [vmem:[%s3 + $0x350] sm:$0xff]
  %v410 = vld [vmem:[%s3 + $0x358] sm:$0xff]
  %v411 = vld [vmem:[%s3 + $0x360] sm:$0xff]
  %v412 = vld [vmem:[%s3 + $0x368] sm:$0xff]
  %v413 = vld [vmem:[%s3 + $0x370] sm:$0xff]
  %v414 = vld [vmem:[%s3 + $0x378] sm:$0xff]
  %v415 = vld [vmem:[%s3 + $0x380] sm:$0xff]
  %v416 = vld [vmem:[%s3 + $0x388] sm:$0xff]
  %v417 = vld [vmem:[%s3 + $0x390] sm:$0xff]
  %v418 = vld [vmem:[%s3 + $0x398] sm:$0xff]
  %v419 = vld [vmem:[%s3 + $0x3a0] sm:$0xff]
  %v420 = vld [vmem:[%s3 + $0x3a8] sm:$0xff]
  %v421 = vld [vmem:[%s3 + $0x3b0] sm:$0xff]
  %v422 = vld [vmem:[%s3 + $0x3b8] sm:$0xff]
  %v423 = vld [vmem:[%s3 + $0x3c0] sm:$0xff]
  %v424 = vld [vmem:[%s3 + $0x3c8] sm:$0xff]
  %v425 = vld [vmem:[%s3 + $0x3d0] sm:$0xff]
  %v426 = vld [vmem:[%s3 + $0x3d8] sm:$0xff]
  %v427 = vld [vmem:[%s3 + $0x3e0] sm:$0xff]
  %v428 = vld [vmem:[%s3 + $0x3e8] sm:$0xff]
  %v429 = vld [vmem:[%s3 + $0x3f0] sm:$0xff]
  %v430 = vld [vmem:[%s3 + $0x3f8] sm:$0xff]
  %v559 = vunpack.c.l.b16 %v303
  %v560 = vunpack.c.h.b16 %v303
  %v561 = vunpack.c.l.b16 %v304
  %v562 = vunpack.c.h.b16 %v304
  %v563 = vunpack.c.l.b16 %v305
  %v564 = vunpack.c.h.b16 %v305
  %v565 = vunpack.c.l.b16 %v306
  %v566 = vunpack.c.h.b16 %v306
  %v567 = vunpack.c.l.b16 %v307
  %v568 = vunpack.c.h.b16 %v307
  %v569 = vunpack.c.l.b16 %v308
  %v570 = vunpack.c.h.b16 %v308
  %v571 = vunpack.c.l.b16 %v309
  %v572 = vunpack.c.h.b16 %v309
  %v573 = vunpack.c.l.b16 %v310
  %v574 = vunpack.c.h.b16 %v310
  %v575 = vunpack.c.l.b16 %v311
  %v576 = vunpack.c.h.b16 %v311
  %v577 = vunpack.c.l.b16 %v312
  %v578 = vunpack.c.h.b16 %v312
  %v579 = vunpack.c.l.b16 %v313
  %v580 = vunpack.c.h.b16 %v313
  %v581 = vunpack.c.l.b16 %v314
  %v582 = vunpack.c.h.b16 %v314
  %v583 = vunpack.c.l.b16 %v315
  %v584 = vunpack.c.h.b16 %v315
  %v585 = vunpack.c.l.b16 %v316
  %v586 = vunpack.c.h.b16 %v316
  %v587 = vunpack.c.l.b16 %v317
  %v588 = vunpack.c.h.b16 %v317
  %v589 = vunpack.c.l.b16 %v318
  %v590 = vunpack.c.h.b16 %v318
  %v591 = vunpack.c.l.b16 %v319
  %v592 = vunpack.c.h.b16 %v319
  %v593 = vunpack.c.l.b16 %v320
  %v594 = vunpack.c.h.b16 %v320
  %v595 = vunpack.c.l.b16 %v321
  %v596 = vunpack.c.h.b16 %v321
  %v597 = vunpack.c.l.b16 %v322
  %v598 = vunpack.c.h.b16 %v322
  %v599 = vunpack.c.l.b16 %v323
  %v600 = vunpack.c.h.b16 %v323
  %v601 = vunpack.c.l.b16 %v324
  %v602 = vunpack.c.h.b16 %v324
  %v603 = vunpack.c.l.b16 %v325
  %v604 = vunpack.c.h.b16 %v325
  %v605 = vunpack.c.l.b16 %v326
  %v606 = vunpack.c.h.b16 %v326
  %v607 = vunpack.c.l.b16 %v327
  %v608 = vunpack.c.h.b16 %v327
  %v609 = vunpack.c.l.b16 %v328
  %v610 = vunpack.c.h.b16 %v328
  %v611 = vunpack.c.l.b16 %v329
  %v612 = vunpack.c.h.b16 %v329
  %v613 = vunpack.c.l.b16 %v330
  %v614 = vunpack.c.h.b16 %v330
  %v615 = vunpack.c.l.b16 %v331
  %v616 = vunpack.c.h.b16 %v331
  %v617 = vunpack.c.l.b16 %v332
  %v618 = vunpack.c.h.b16 %v332
  %v619 = vunpack.c.l.b16 %v333
  %v620 = vunpack.c.h.b16 %v333
  %v621 = vunpack.c.l.b16 %v334
  %v622 = vunpack.c.h.b16 %v334
  %v623 = vunpack.c.l.b16 %v335
  %v624 = vunpack.c.h.b16 %v335
  %v625 = vunpack.c.l.b16 %v336
  %v626 = vunpack.c.h.b16 %v336
  %v627 = vunpack.c.l.b16 %v337
  %v628 = vunpack.c.h.b16 %v337
  %v629 = vunpack.c.l.b16 %v338
  %v630 = vunpack.c.h.b16 %v338
  %v631 = vunpack.c.l.b16 %v339
  %v632 = vunpack.c.h.b16 %v339
  %v633 = vunpack.c.l.b16 %v340
  %v634 = vunpack.c.h.b16 %v340
  %v635 = vunpack.c.l.b16 %v341
  %v636 = vunpack.c.h.b16 %v341
  %v637 = vunpack.c.l.b16 %v342
  %v638 = vunpack.c.h.b16 %v342
  %v639 = vunpack.c.l.b16 %v343
  %v640 = vunpack.c.h.b16 %v343
  %v641 = vunpack.c.l.b16 %v344
  %v642 = vunpack.c.h.b16 %v344
  %v643 = vunpack.c.l.b16 %v345
  %v644 = vunpack.c.h.b16 %v345
  %v645 = vunpack.c.l.b16 %v346
  %v646 = vunpack.c.h.b16 %v346
  %v647 = vunpack.c.l.b16 %v347
  %v648 = vunpack.c.h.b16 %v347
  %v649 = vunpack.c.l.b16 %v348
  %v650 = vunpack.c.h.b16 %v348
  %v651 = vunpack.c.l.b16 %v349
  %v652 = vunpack.c.h.b16 %v349
  %v653 = vunpack.c.l.b16 %v350
  %v654 = vunpack.c.h.b16 %v350
  %v655 = vunpack.c.l.b16 %v351
  %v656 = vunpack.c.h.b16 %v351
  %v657 = vunpack.c.l.b16 %v352
  %v658 = vunpack.c.h.b16 %v352
  %v659 = vunpack.c.l.b16 %v353
  %v660 = vunpack.c.h.b16 %v353
  %v661 = vunpack.c.l.b16 %v354
  %v662 = vunpack.c.h.b16 %v354
  %v663 = vunpack.c.l.b16 %v355
  %v664 = vunpack.c.h.b16 %v355
  %v665 = vunpack.c.l.b16 %v356
  %v666 = vunpack.c.h.b16 %v356
  %v667 = vunpack.c.l.b16 %v357
  %v668 = vunpack.c.h.b16 %v357
  %v669 = vunpack.c.l.b16 %v358
  %v670 = vunpack.c.h.b16 %v358
  %v671 = vunpack.c.l.b16 %v359
  %v672 = vunpack.c.h.b16 %v359
  %v673 = vunpack.c.l.b16 %v360
  %v674 = vunpack.c.h.b16 %v360
  %v675 = vunpack.c.l.b16 %v361
  %v676 = vunpack.c.h.b16 %v361
  %v677 = vunpack.c.l.b16 %v362
  %v678 = vunpack.c.h.b16 %v362
  %v679 = vunpack.c.l.b16 %v363
  %v680 = vunpack.c.h.b16 %v363
  %v681 = vunpack.c.l.b16 %v364
  %v682 = vunpack.c.h.b16 %v364
  %v683 = vunpack.c.l.b16 %v365
  %v684 = vunpack.c.h.b16 %v365
  %v685 = vunpack.c.l.b16 %v366
  %v686 = vunpack.c.h.b16 %v366
  %v687 = vunpack.c.l.b16 %v367
  %v688 = vunpack.c.h.b16 %v367
  %v689 = vunpack.c.l.b16 %v368
  %v690 = vunpack.c.h.b16 %v368
  %v691 = vunpack.c.l.b16 %v369
  %v692 = vunpack.c.h.b16 %v369
  %v693 = vunpack.c.l.b16 %v370
  %v694 = vunpack.c.h.b16 %v370
  %v695 = vunpack.c.l.b16 %v371
  %v696 = vunpack.c.h.b16 %v371
  %v697 = vunpack.c.l.b16 %v372
  %v698 = vunpack.c.h.b16 %v372
  %v699 = vunpack.c.l.b16 %v373
  %v700 = vunpack.c.h.b16 %v373
  %v701 = vunpack.c.l.b16 %v374
  %v702 = vunpack.c.h.b16 %v374
  %v703 = vunpack.c.l.b16 %v375
  %v704 = vunpack.c.h.b16 %v375
  %v705 = vunpack.c.l.b16 %v376
  %v706 = vunpack.c.h.b16 %v376
  %v707 = vunpack.c.l.b16 %v377
  %v708 = vunpack.c.h.b16 %v377
  %v709 = vunpack.c.l.b16 %v378
  %v710 = vunpack.c.h.b16 %v378
  %v711 = vunpack.c.l.b16 %v379
  %v712 = vunpack.c.h.b16 %v379
  %v713 = vunpack.c.l.b16 %v380
  %v714 = vunpack.c.h.b16 %v380
  %v715 = vunpack.c.l.b16 %v381
  %v716 = vunpack.c.h.b16 %v381
  %v717 = vunpack.c.l.b16 %v382
  %v718 = vunpack.c.h.b16 %v382
  %v719 = vunpack.c.l.b16 %v383
  %v720 = vunpack.c.h.b16 %v383
  %v721 = vunpack.c.l.b16 %v384
  %v722 = vunpack.c.h.b16 %v384
  %v723 = vunpack.c.l.b16 %v385
  %v724 = vunpack.c.h.b16 %v385
  %v725 = vunpack.c.l.b16 %v386
  %v726 = vunpack.c.h.b16 %v386
  %v727 = vunpack.c.l.b16 %v387
  %v728 = vunpack.c.h.b16 %v387
  %v729 = vunpack.c.l.b16 %v388
  %v730 = vunpack.c.h.b16 %v388
  %v731 = vunpack.c.l.b16 %v389
  %v732 = vunpack.c.h.b16 %v389
  %v733 = vunpack.c.l.b16 %v390
  %v734 = vunpack.c.h.b16 %v390
  %v735 = vunpack.c.l.b16 %v391
  %v736 = vunpack.c.h.b16 %v391
  %v737 = vunpack.c.l.b16 %v392
  %v738 = vunpack.c.h.b16 %v392
  %v739 = vunpack.c.l.b16 %v393
  %v740 = vunpack.c.h.b16 %v393
  %v741 = vunpack.c.l.b16 %v394
  %v742 = vunpack.c.h.b16 %v394
  %v743 = vunpack.c.l.b16 %v395
  %v744 = vunpack.c.h.b16 %v395
  %v745 = vunpack.c.l.b16 %v396
  %v746 = vunpack.c.h.b16 %v396
  %v747 = vunpack.c.l.b16 %v397
  %v748 = vunpack.c.h.b16 %v397
  %v749 = vunpack.c.l.b16 %v398
  %v750 = vunpack.c.h.b16 %v398
  %v751 = vunpack.c.l.b16 %v399
  %v752 = vunpack.c.h.b16 %v399
  %v753 = vunpack.c.l.b16 %v400
  %v754 = vunpack.c.h.b16 %v400
  %v755 = vunpack.c.l.b16 %v401
  %v756 = vunpack.c.h.b16 %v401
  %v757 = vunpack.c.l.b16 %v402
  %v758 = vunpack.c.h.b16 %v402
  %v759 = vunpack.c.l.b16 %v403
  %v760 = vunpack.c.h.b16 %v403
  %v761 = vunpack.c.l.b16 %v404
  %v762 = vunpack.c.h.b16 %v404
  %v763 = vunpack.c.l.b16 %v405
  %v764 = vunpack.c.h.b16 %v405
  %v765 = vunpack.c.l.b16 %v406
  %v766 = vunpack.c.h.b16 %v406
  %v767 = vunpack.c.l.b16 %v407
  %v768 = vunpack.c.h.b16 %v407
  %v769 = vunpack.c.l.b16 %v408
  %v770 = vunpack.c.h.b16 %v408
  %v771 = vunpack.c.l.b16 %v409
  %v772 = vunpack.c.h.b16 %v409
  %v773 = vunpack.c.l.b16 %v410
  %v774 = vunpack.c.h.b16 %v410
  %v775 = vunpack.c.l.b16 %v411
  %v776 = vunpack.c.h.b16 %v411
  %v777 = vunpack.c.l.b16 %v412
  %v778 = vunpack.c.h.b16 %v412
  %v779 = vunpack.c.l.b16 %v413
  %v780 = vunpack.c.h.b16 %v413
  %v781 = vunpack.c.l.b16 %v414
  %v782 = vunpack.c.h.b16 %v414
  %v783 = vunpack.c.l.b16 %v415
  %v784 = vunpack.c.h.b16 %v415
  %v785 = vunpack.c.l.b16 %v416
  %v786 = vunpack.c.h.b16 %v416
  %v787 = vunpack.c.l.b16 %v417
  %v788 = vunpack.c.h.b16 %v417
  %v789 = vunpack.c.l.b16 %v418
  %v790 = vunpack.c.h.b16 %v418
  %v791 = vunpack.c.l.b16 %v419
  %v792 = vunpack.c.h.b16 %v419
  %v793 = vunpack.c.l.b16 %v420
  %v794 = vunpack.c.h.b16 %v420
  %v795 = vunpack.c.l.b16 %v421
  %v796 = vunpack.c.h.b16 %v421
  %v797 = vunpack.c.l.b16 %v422
  %v798 = vunpack.c.h.b16 %v422
  %v799 = vunpack.c.l.b16 %v423
  %v800 = vunpack.c.h.b16 %v423
  %v801 = vunpack.c.l.b16 %v424
  %v802 = vunpack.c.h.b16 %v424
  %v803 = vunpack.c.l.b16 %v425
  %v804 = vunpack.c.h.b16 %v425
  %v805 = vunpack.c.l.b16 %v426
  %v806 = vunpack.c.h.b16 %v426
  %v807 = vunpack.c.l.b16 %v427
  %v808 = vunpack.c.h.b16 %v427
  %v809 = vunpack.c.l.b16 %v428
  %v810 = vunpack.c.h.b16 %v428
  %v811 = vunpack.c.l.b16 %v429
  %v812 = vunpack.c.h.b16 %v429
  %v813 = vunpack.c.l.b16 %v430
  %v814 = vunpack.c.h.b16 %v430
  %v815 = vpack.c.b16 %v567, %v559
  %v816 = vpack.c.b16 %v568, %v560
  %v817 = vpack.c.b16 %v569, %v561
  %v818 = vpack.c.b16 %v570, %v562
  %v819 = vpack.c.b16 %v571, %v563
  %v820 = vpack.c.b16 %v572, %v564
  %v821 = vpack.c.b16 %v573, %v565
  %v822 = vpack.c.b16 %v574, %v566
  %v823 = vpack.c.b16 %v583, %v575
  %v824 = vpack.c.b16 %v584, %v576
  %v825 = vpack.c.b16 %v585, %v577
  %v826 = vpack.c.b16 %v586, %v578
  %v827 = vpack.c.b16 %v587, %v579
  %v828 = vpack.c.b16 %v588, %v580
  %v829 = vpack.c.b16 %v589, %v581
  %v830 = vpack.c.b16 %v590, %v582
  %v831 = vpack.c.b16 %v599, %v591
  %v832 = vpack.c.b16 %v600, %v592
  %v833 = vpack.c.b16 %v601, %v593
  %v834 = vpack.c.b16 %v602, %v594
  %v835 = vpack.c.b16 %v603, %v595
  %v836 = vpack.c.b16 %v604, %v596
  %v837 = vpack.c.b16 %v605, %v597
  %v838 = vpack.c.b16 %v606, %v598
  %v839 = vpack.c.b16 %v615, %v607
  %v840 = vpack.c.b16 %v616, %v608
  %v841 = vpack.c.b16 %v617, %v609
  %v842 = vpack.c.b16 %v618, %v610
  %v843 = vpack.c.b16 %v619, %v611
  %v844 = vpack.c.b16 %v620, %v612
  %v845 = vpack.c.b16 %v621, %v613
  %v846 = vpack.c.b16 %v622, %v614
  %v847 = vpack.c.b16 %v631, %v623
  %v848 = vpack.c.b16 %v632, %v624
  %v849 = vpack.c.b16 %v633, %v625
  %v850 = vpack.c.b16 %v634, %v626
  %v851 = vpack.c.b16 %v635, %v627
  %v852 = vpack.c.b16 %v636, %v628
  %v853 = vpack.c.b16 %v637, %v629
  %v854 = vpack.c.b16 %v638, %v630
  %v855 = vpack.c.b16 %v647, %v639
  %v856 = vpack.c.b16 %v648, %v640
  %v857 = vpack.c.b16 %v649, %v641
  %v858 = vpack.c.b16 %v650, %v642
  %v859 = vpack.c.b16 %v651, %v643
  %v860 = vpack.c.b16 %v652, %v644
  %v861 = vpack.c.b16 %v653, %v645
  %v862 = vpack.c.b16 %v654, %v646
  %v863 = vpack.c.b16 %v663, %v655
  %v864 = vpack.c.b16 %v664, %v656
  %v865 = vpack.c.b16 %v665, %v657
  %v866 = vpack.c.b16 %v666, %v658
  %v867 = vpack.c.b16 %v667, %v659
  %v868 = vpack.c.b16 %v668, %v660
  %v869 = vpack.c.b16 %v669, %v661
  %v870 = vpack.c.b16 %v670, %v662
  %v871 = vpack.c.b16 %v679, %v671
  %v872 = vpack.c.b16 %v680, %v672
  %v873 = vpack.c.b16 %v681, %v673
  %v874 = vpack.c.b16 %v682, %v674
  %v875 = vpack.c.b16 %v683, %v675
  %v876 = vpack.c.b16 %v684, %v676
  %v877 = vpack.c.b16 %v685, %v677
  %v878 = vpack.c.b16 %v686, %v678
  %v879 = vpack.c.b16 %v695, %v687
  %v880 = vpack.c.b16 %v696, %v688
  %v881 = vpack.c.b16 %v697, %v689
  %v882 = vpack.c.b16 %v698, %v690
  %v883 = vpack.c.b16 %v699, %v691
  %v884 = vpack.c.b16 %v700, %v692
  %v885 = vpack.c.b16 %v701, %v693
  %v886 = vpack.c.b16 %v702, %v694
  %v887 = vpack.c.b16 %v711, %v703
  %v888 = vpack.c.b16 %v712, %v704
  %v889 = vpack.c.b16 %v713, %v705
  %v890 = vpack.c.b16 %v714, %v706
  %v891 = vpack.c.b16 %v715, %v707
  %v892 = vpack.c.b16 %v716, %v708
  %v893 = vpack.c.b16 %v717, %v709
  %v894 = vpack.c.b16 %v718, %v710
  %v895 = vpack.c.b16 %v727, %v719
  %v896 = vpack.c.b16 %v728, %v720
  %v897 = vpack.c.b16 %v729, %v721
  %v898 = vpack.c.b16 %v730, %v722
  %v899 = vpack.c.b16 %v731, %v723
  %v900 = vpack.c.b16 %v732, %v724
  %v901 = vpack.c.b16 %v733, %v725
  %v902 = vpack.c.b16 %v734, %v726
  %v903 = vpack.c.b16 %v743, %v735
  %v904 = vpack.c.b16 %v744, %v736
  %v905 = vpack.c.b16 %v745, %v737
  %v906 = vpack.c.b16 %v746, %v738
  %v907 = vpack.c.b16 %v747, %v739
  %v908 = vpack.c.b16 %v748, %v740
  %v909 = vpack.c.b16 %v749, %v741
  %v910 = vpack.c.b16 %v750, %v742
  %v911 = vpack.c.b16 %v759, %v751
  %v912 = vpack.c.b16 %v760, %v752
  %v913 = vpack.c.b16 %v761, %v753
  %v914 = vpack.c.b16 %v762, %v754
  %v915 = vpack.c.b16 %v763, %v755
  %v916 = vpack.c.b16 %v764, %v756
  %v917 = vpack.c.b16 %v765, %v757
  %v918 = vpack.c.b16 %v766, %v758
  %v919 = vpack.c.b16 %v775, %v767
  %v920 = vpack.c.b16 %v776, %v768
  %v921 = vpack.c.b16 %v777, %v769
  %v922 = vpack.c.b16 %v778, %v770
  %v923 = vpack.c.b16 %v779, %v771
  %v924 = vpack.c.b16 %v780, %v772
  %v925 = vpack.c.b16 %v781, %v773
  %v926 = vpack.c.b16 %v782, %v774
  %v927 = vpack.c.b16 %v791, %v783
  %v928 = vpack.c.b16 %v792, %v784
  %v929 = vpack.c.b16 %v793, %v785
  %v930 = vpack.c.b16 %v794, %v786
  %v931 = vpack.c.b16 %v795, %v787
  %v932 = vpack.c.b16 %v796, %v788
  %v933 = vpack.c.b16 %v797, %v789
  %v934 = vpack.c.b16 %v798, %v790
  %v935 = vpack.c.b16 %v807, %v799
  %v936 = vpack.c.b16 %v808, %v800
  %v937 = vpack.c.b16 %v809, %v801
  %v938 = vpack.c.b16 %v810, %v802
  %v939 = vpack.c.b16 %v811, %v803
  %v940 = vpack.c.b16 %v812, %v804
  %v941 = vpack.c.b16 %v813, %v805
  %v942 = vpack.c.b16 %v814, %v806
  %1071 = vmatpush.bf16.msra.mxu0 %v871
  %1072 = vmatpush.bf16.msra.mxu0 %v863
  %1073 = vmatpush.bf16.msra.mxu0 %v855
  %1074 = vmatpush.bf16.msra.mxu0 %v847
  %1075 = vmatpush.bf16.msra.mxu0 %v839
  %1076 = vmatpush.bf16.msra.mxu0 %v831
  %1077 = vmatpush.bf16.msra.mxu0 %v823
  %1078 = vmatpush.bf16.msra.mxu0 %v815
  %1079 = vmatmul.bf16.gmra.mxu0 %v301
  %v1080 = vpop.f32.mrf.mxu0
  %v1081 = vadd.f32 0.0, %v1080
  %v1082 = vpop.f32.mrf.mxu0
  %1083 = vdwg.mxu0
  %1084 = vmatpush.bf16.msra.mxu0 %v935
  %1085 = vmatpush.bf16.msra.mxu0 %v927
  %1086 = vmatpush.bf16.msra.mxu0 %v919
  %1087 = vmatpush.bf16.msra.mxu0 %v911
  %1088 = vmatpush.bf16.msra.mxu0 %v903
  %1089 = vmatpush.bf16.msra.mxu0 %v895
  %1090 = vmatpush.bf16.msra.mxu0 %v887
  %1091 = vmatpush.bf16.msra.mxu0 %v879
  %1092 = vmatmul.bf16.gmra.mxu0 %v302
  %v1093 = vpop.f32.mrf.mxu0
  %v1094 = vadd.f32 %v1081, %v1093
  %v1095 = vpop.f32.mrf.mxu0
  %1096 = vdwg.mxu0
  %1097 = vmatpush.bf16.msra.mxu0 %v872
  %1098 = vmatpush.bf16.msra.mxu0 %v864
  %1099 = vmatpush.bf16.msra.mxu0 %v856
  %1100 = vmatpush.bf16.msra.mxu0 %v848
  %1101 = vmatpush.bf16.msra.mxu0 %v840
  %1102 = vmatpush.bf16.msra.mxu0 %v832
  %1103 = vmatpush.bf16.msra.mxu0 %v824
  %1104 = vmatpush.bf16.msra.mxu0 %v816
  %1105 = vmatmul.bf16.gmra.mxu0 %v301
  %v1106 = vpop.f32.mrf.mxu0
  %v1107 = vadd.f32 0.0, %v1106
  %v1108 = vpop.f32.mrf.mxu0
  %1109 = vdwg.mxu0
  %1110 = vmatpush.bf16.msra.mxu0 %v936
  %1111 = vmatpush.bf16.msra.mxu0 %v928
  %1112 = vmatpush.bf16.msra.mxu0 %v920
  %1113 = vmatpush.bf16.msra.mxu0 %v912
  %1114 = vmatpush.bf16.msra.mxu0 %v904
  %1115 = vmatpush.bf16.msra.mxu0 %v896
  %1116 = vmatpush.bf16.msra.mxu0 %v888
  %1117 = vmatpush.bf16.msra.mxu0 %v880
  %1118 = vmatmul.bf16.gmra.mxu0 %v302
  %v1119 = vpop.f32.mrf.mxu0
  %v1120 = vadd.f32 %v1107, %v1119
  %v1121 = vpop.f32.mrf.mxu0
  %1122 = vdwg.mxu0
  %1123 = vmatpush.bf16.msra.mxu0 %v873
  %1124 = vmatpush.bf16.msra.mxu0 %v865
  %1125 = vmatpush.bf16.msra.mxu0 %v857
  %1126 = vmatpush.bf16.msra.mxu0 %v849
  %1127 = vmatpush.bf16.msra.mxu0 %v841
  %1128 = vmatpush.bf16.msra.mxu0 %v833
  %1129 = vmatpush.bf16.msra.mxu0 %v825
  %1130 = vmatpush.bf16.msra.mxu0 %v817
  %1131 = vmatmul.bf16.gmra.mxu0 %v301
  %v1132 = vpop.f32.mrf.mxu0
  %v1133 = vadd.f32 0.0, %v1132
  %v1134 = vpop.f32.mrf.mxu0
  %1135 = vdwg.mxu0
  %1136 = vmatpush.bf16.msra.mxu0 %v937
  %1137 = vmatpush.bf16.msra.mxu0 %v929
  %1138 = vmatpush.bf16.msra.mxu0 %v921
  %1139 = vmatpush.bf16.msra.mxu0 %v913
  %1140 = vmatpush.bf16.msra.mxu0 %v905
  %1141 = vmatpush.bf16.msra.mxu0 %v897
  %1142 = vmatpush.bf16.msra.mxu0 %v889
  %1143 = vmatpush.bf16.msra.mxu0 %v881
  %1144 = vmatmul.bf16.gmra.mxu0 %v302
  %v1145 = vpop.f32.mrf.mxu0
  %v1146 = vadd.f32 %v1133, %v1145
  %v1147 = vpop.f32.mrf.mxu0
  %1148 = vdwg.mxu0
  %1149 = vmatpush.bf16.msra.mxu0 %v874
  %1150 = vmatpush.bf16.msra.mxu0 %v866
  %1151 = vmatpush.bf16.msra.mxu0 %v858
  %1152 = vmatpush.bf16.msra.mxu0 %v850
  %1153 = vmatpush.bf16.msra.mxu0 %v842
  %1154 = vmatpush.bf16.msra.mxu0 %v834
  %1155 = vmatpush.bf16.msra.mxu0 %v826
  %1156 = vmatpush.bf16.msra.mxu0 %v818
  %1157 = vmatmul.bf16.gmra.mxu0 %v301
  %v1158 = vpop.f32.mrf.mxu0
  %v1159 = vadd.f32 0.0, %v1158
  %v1160 = vpop.f32.mrf.mxu0
  %1161 = vdwg.mxu0
  %1162 = vmatpush.bf16.msra.mxu0 %v938
  %1163 = vmatpush.bf16.msra.mxu0 %v930
  %1164 = vmatpush.bf16.msra.mxu0 %v922
  %1165 = vmatpush.bf16.msra.mxu0 %v914
  %1166 = vmatpush.bf16.msra.mxu0 %v906
  %1167 = vmatpush.bf16.msra.mxu0 %v898
  %1168 = vmatpush.bf16.msra.mxu0 %v890
  %1169 = vmatpush.bf16.msra.mxu0 %v882
  %1170 = vmatmul.bf16.gmra.mxu0 %v302
  %v1171 = vpop.f32.mrf.mxu0
  %v1172 = vadd.f32 %v1159, %v1171
  %v1173 = vpop.f32.mrf.mxu0
  %1174 = vdwg.mxu0
  %1175 = vmatpush.bf16.msra.mxu0 %v875
  %1176 = vmatpush.bf16.msra.mxu0 %v867
  %1177 = vmatpush.bf16.msra.mxu0 %v859
  %1178 = vmatpush.bf16.msra.mxu0 %v851
  %1179 = vmatpush.bf16.msra.mxu0 %v843
  %1180 = vmatpush.bf16.msra.mxu0 %v835
  %1181 = vmatpush.bf16.msra.mxu0 %v827
  %1182 = vmatpush.bf16.msra.mxu0 %v819
  %1183 = vmatmul.bf16.gmra.mxu0 %v301
  %v1184 = vpop.f32.mrf.mxu0
  %v1185 = vadd.f32 0.0, %v1184
  %v1186 = vpop.f32.mrf.mxu0
  %1187 = vdwg.mxu0
  %1188 = vmatpush.bf16.msra.mxu0 %v939
  %1189 = vmatpush.bf16.msra.mxu0 %v931
  %1190 = vmatpush.bf16.msra.mxu0 %v923
  %1191 = vmatpush.bf16.msra.mxu0 %v915
  %1192 = vmatpush.bf16.msra.mxu0 %v907
  %1193 = vmatpush.bf16.msra.mxu0 %v899
  %1194 = vmatpush.bf16.msra.mxu0 %v891
  %1195 = vmatpush.bf16.msra.mxu0 %v883
  %1196 = vmatmul.bf16.gmra.mxu0 %v302
  %v1197 = vpop.f32.mrf.mxu0
  %v1198 = vadd.f32 %v1185, %v1197
  %v1199 = vpop.f32.mrf.mxu0
  %1200 = vdwg.mxu0
  %1201 = vmatpush.bf16.msra.mxu0 %v876
  %1202 = vmatpush.bf16.msra.mxu0 %v868
  %1203 = vmatpush.bf16.msra.mxu0 %v860
  %1204 = vmatpush.bf16.msra.mxu0 %v852
  %1205 = vmatpush.bf16.msra.mxu0 %v844
  %1206 = vmatpush.bf16.msra.mxu0 %v836
  %1207 = vmatpush.bf16.msra.mxu0 %v828
  %1208 = vmatpush.bf16.msra.mxu0 %v820
  %1209 = vmatmul.bf16.gmra.mxu0 %v301
  %v1210 = vpop.f32.mrf.mxu0
  %v1211 = vadd.f32 0.0, %v1210
  %v1212 = vpop.f32.mrf.mxu0
  %1213 = vdwg.mxu0
  %1214 = vmatpush.bf16.msra.mxu0 %v940
  %1215 = vmatpush.bf16.msra.mxu0 %v932
  %1216 = vmatpush.bf16.msra.mxu0 %v924
  %1217 = vmatpush.bf16.msra.mxu0 %v916
  %1218 = vmatpush.bf16.msra.mxu0 %v908
  %1219 = vmatpush.bf16.msra.mxu0 %v900
  %1220 = vmatpush.bf16.msra.mxu0 %v892
  %1221 = vmatpush.bf16.msra.mxu0 %v884
  %1222 = vmatmul.bf16.gmra.mxu0 %v302
  %v1223 = vpop.f32.mrf.mxu0
  %v1224 = vadd.f32 %v1211, %v1223
  %v1225 = vpop.f32.mrf.mxu0
  %1226 = vdwg.mxu0
  %1227 = vmatpush.bf16.msra.mxu0 %v877
  %1228 = vmatpush.bf16.msra.mxu0 %v869
  %1229 = vmatpush.bf16.msra.mxu0 %v861
  %1230 = vmatpush.bf16.msra.mxu0 %v853
  %1231 = vmatpush.bf16.msra.mxu0 %v845
  %1232 = vmatpush.bf16.msra.mxu0 %v837
  %1233 = vmatpush.bf16.msra.mxu0 %v829
  %1234 = vmatpush.bf16.msra.mxu0 %v821
  %1235 = vmatmul.bf16.gmra.mxu0 %v301
  %v1236 = vpop.f32.mrf.mxu0
  %v1237 = vadd.f32 0.0, %v1236
  %v1238 = vpop.f32.mrf.mxu0
  %1239 = vdwg.mxu0
  %1240 = vmatpush.bf16.msra.mxu0 %v941
  %1241 = vmatpush.bf16.msra.mxu0 %v933
  %1242 = vmatpush.bf16.msra.mxu0 %v925
  %1243 = vmatpush.bf16.msra.mxu0 %v917
  %1244 = vmatpush.bf16.msra.mxu0 %v909
  %1245 = vmatpush.bf16.msra.mxu0 %v901
  %1246 = vmatpush.bf16.msra.mxu0 %v893
  %1247 = vmatpush.bf16.msra.mxu0 %v885
  %1248 = vmatmul.bf16.gmra.mxu0 %v302
  %v1249 = vpop.f32.mrf.mxu0
  %v1250 = vadd.f32 %v1237, %v1249
  %v1251 = vpop.f32.mrf.mxu0
  %1252 = vdwg.mxu0
  %1253 = vmatpush.bf16.msra.mxu0 %v878
  %1254 = vmatpush.bf16.msra.mxu0 %v870
  %1255 = vmatpush.bf16.msra.mxu0 %v862
  %1256 = vmatpush.bf16.msra.mxu0 %v854
  %1257 = vmatpush.bf16.msra.mxu0 %v846
  %1258 = vmatpush.bf16.msra.mxu0 %v838
  %1259 = vmatpush.bf16.msra.mxu0 %v830
  %1260 = vmatpush.bf16.msra.mxu0 %v822
  %1261 = vmatmul.bf16.gmra.mxu0 %v301
  %v1262 = vpop.f32.mrf.mxu0
  %v1263 = vadd.f32 0.0, %v1262
  %v1264 = vpop.f32.mrf.mxu0
  %1265 = vdwg.mxu0
  %1266 = vmatpush.bf16.msra.mxu0 %v942
  %1267 = vmatpush.bf16.msra.mxu0 %v934
  %1268 = vmatpush.bf16.msra.mxu0 %v926
  %1269 = vmatpush.bf16.msra.mxu0 %v918
  %1270 = vmatpush.bf16.msra.mxu0 %v910
  %1271 = vmatpush.bf16.msra.mxu0 %v902
  %1272 = vmatpush.bf16.msra.mxu0 %v894
  %1273 = vmatpush.bf16.msra.mxu0 %v886
  %1274 = vmatmul.bf16.gmra.mxu0 %v302
  %v1275 = vpop.f32.mrf.mxu0
  %v1276 = vadd.f32 %v1263, %v1275
  %v1277 = vpop.f32.mrf.mxu0
  %1278 = vdwg.mxu0
  %s1279 = smul.u32 1, 4
  %s1280 = smul.addr %s1279, 8
  %s1281 = scalar_lea.vmem [#allocation2], %s1280
  %v1282 = vld [vmem:[%s1281] sm:$0xff]
  %v1283 = vld [vmem:[%s1281 + $0x8] sm:$0xff]
  %v1284 = vld [vmem:[%s1281 + $0x10] sm:$0xff]
  %v1285 = vld [vmem:[%s1281 + $0x18] sm:$0xff]
  %v1286 = vadd.f32 %v1094, %v1282
  %v1287 = vadd.f32 %v1120, %v1283
  %v1288 = vadd.f32 %v1146, %v1284
  %v1289 = vadd.f32 %v1172, %v1285
  %v1290 = vadd.f32 %v1198, %v271
  %v1291 = vadd.f32 %v1224, %v272
  %v1292 = vadd.f32 %v1250, %v273
  %v1293 = vadd.f32 %v1276, %v274
  %v1294 = vmul.f32 %v1286, 0.5
  %v1295 = vmul.f32 %v1287, 0.5
  %v1296 = vmul.f32 %v1288, 0.5
  %v1297 = vtanh.pop %v1294
  %v1298 = vtanh.pop %v1295
  %v1299 = vtanh.pop %v1296
  %v1300 = vmul.f32 %v1297, 0.5
  %v1301 = vmul.f32 %v1298, 0.5
  %v1302 = vmul.f32 %v1299, 0.5
  %v1303 = vadd.f32 %v1300, 0.5
  %v1304 = vadd.f32 %v1301, 0.5
  %v1305 = vadd.f32 %v1302, 0.5
  %v1306 = vtanh.pop %v1289
  %v1307 = vmul.f32 %v1304, %v298
  %v1308 = vmul.f32 %v1303, %v1306
  %v1309 = vadd.f32 %v1307, %v1308
  %v1310 = vtanh.pop %v1309
  %v1311 = vmul.f32 %v1305, %v1310
  %v1312 = vmul.f32 %v1290, 0.5
  %v1313 = vmul.f32 %v1291, 0.5
  %v1314 = vmul.f32 %v1292, 0.5
  %v1315 = vtanh.pop %v1312
  %v1316 = vtanh.pop %v1313
  %v1317 = vtanh.pop %v1314
  %v1318 = vmul.f32 %v1315, 0.5
  %v1319 = vmul.f32 %v1316, 0.5
  %v1320 = vmul.f32 %v1317, 0.5
  %v1321 = vadd.f32 %v1318, 0.5
  %v1322 = vadd.f32 %v1319, 0.5
  %v1323 = vadd.f32 %v1320, 0.5
  %v1324 = vtanh.pop %v1293
  %v1325 = vmul.f32 %v1322, 0.0
  %v1326 = vmul.f32 %v1321, %v1324
  %v1327 = vadd.f32 %v1325, %v1326
  %v1328 = vtanh.pop %v1327
  %v1329 = vmul.f32 %v1323, %v1328
  %v1330 = vpack.c.bf16 %v1311, %v1311
  %v1331 = vpack.c.bf16 %v1329, %v1329
  %1332 = vmatpush.bf16.msra.mxu0 %v871
  %1333 = vmatpush.bf16.msra.mxu0 %v863
  %1334 = vmatpush.bf16.msra.mxu0 %v855
  %1335 = vmatpush.bf16.msra.mxu0 %v847
  %1336 = vmatpush.bf16.msra.mxu0 %v839
  %1337 = vmatpush.bf16.msra.mxu0 %v831
  %1338 = vmatpush.bf16.msra.mxu0 %v823
  %1339 = vmatpush.bf16.msra.mxu0 %v815
  %1340 = vmatmul.bf16.gmra.mxu0 %v1330
  %v1341 = vpop.f32.mrf.mxu0
  %v1342 = vadd.f32 0.0, %v1341
  %v1343 = vpop.f32.mrf.mxu0
  %1344 = vdwg.mxu0
  %1345 = vmatpush.bf16.msra.mxu0 %v935
  %1346 = vmatpush.bf16.msra.mxu0 %v927
  %1347 = vmatpush.bf16.msra.mxu0 %v919
  %1348 = vmatpush.bf16.msra.mxu0 %v911
  %1349 = vmatpush.bf16.msra.mxu0 %v903
  %1350 = vmatpush.bf16.msra.mxu0 %v895
  %1351 = vmatpush.bf16.msra.mxu0 %v887
  %1352 = vmatpush.bf16.msra.mxu0 %v879
  %1353 = vmatmul.bf16.gmra.mxu0 %v1331
  %v1354 = vpop.f32.mrf.mxu0
  %v1355 = vadd.f32 %v1342, %v1354
  %v1356 = vpop.f32.mrf.mxu0
  %1357 = vdwg.mxu0
  %1358 = vmatpush.bf16.msra.mxu0 %v872
  %1359 = vmatpush.bf16.msra.mxu0 %v864
  %1360 = vmatpush.bf16.msra.mxu0 %v856
  %1361 = vmatpush.bf16.msra.mxu0 %v848
  %1362 = vmatpush.bf16.msra.mxu0 %v840
  %1363 = vmatpush.bf16.msra.mxu0 %v832
  %1364 = vmatpush.bf16.msra.mxu0 %v824
  %1365 = vmatpush.bf16.msra.mxu0 %v816
  %1366 = vmatmul.bf16.gmra.mxu0 %v1330
  %v1367 = vpop.f32.mrf.mxu0
  %v1368 = vadd.f32 0.0, %v1367
  %v1369 = vpop.f32.mrf.mxu0
  %1370 = vdwg.mxu0
  %1371 = vmatpush.bf16.msra.mxu0 %v936
  %1372 = vmatpush.bf16.msra.mxu0 %v928
  %1373 = vmatpush.bf16.msra.mxu0 %v920
  %1374 = vmatpush.bf16.msra.mxu0 %v912
  %1375 = vmatpush.bf16.msra.mxu0 %v904
  %1376 = vmatpush.bf16.msra.mxu0 %v896
  %1377 = vmatpush.bf16.msra.mxu0 %v888
  %1378 = vmatpush.bf16.msra.mxu0 %v880
  %1379 = vmatmul.bf16.gmra.mxu0 %v1331
  %v1380 = vpop.f32.mrf.mxu0
  %v1381 = vadd.f32 %v1368, %v1380
  %v1382 = vpop.f32.mrf.mxu0
  %1383 = vdwg.mxu0
  %1384 = vmatpush.bf16.msra.mxu0 %v873
  %1385 = vmatpush.bf16.msra.mxu0 %v865
  %1386 = vmatpush.bf16.msra.mxu0 %v857
  %1387 = vmatpush.bf16.msra.mxu0 %v849
  %1388 = vmatpush.bf16.msra.mxu0 %v841
  %1389 = vmatpush.bf16.msra.mxu0 %v833
  %1390 = vmatpush.bf16.msra.mxu0 %v825
  %1391 = vmatpush.bf16.msra.mxu0 %v817
  %1392 = vmatmul.bf16.gmra.mxu0 %v1330
  %v1393 = vpop.f32.mrf.mxu0
  %v1394 = vadd.f32 0.0, %v1393
  %v1395 = vpop.f32.mrf.mxu0
  %1396 = vdwg.mxu0
  %1397 = vmatpush.bf16.msra.mxu0 %v937
  %1398 = vmatpush.bf16.msra.mxu0 %v929
  %1399 = vmatpush.bf16.msra.mxu0 %v921
  %1400 = vmatpush.bf16.msra.mxu0 %v913
  %1401 = vmatpush.bf16.msra.mxu0 %v905
  %1402 = vmatpush.bf16.msra.mxu0 %v897
  %1403 = vmatpush.bf16.msra.mxu0 %v889
  %1404 = vmatpush.bf16.msra.mxu0 %v881
  %1405 = vmatmul.bf16.gmra.mxu0 %v1331
  %v1406 = vpop.f32.mrf.mxu0
  %v1407 = vadd.f32 %v1394, %v1406
  %v1408 = vpop.f32.mrf.mxu0
  %1409 = vdwg.mxu0
  %1410 = vmatpush.bf16.msra.mxu0 %v874
  %1411 = vmatpush.bf16.msra.mxu0 %v866
  %1412 = vmatpush.bf16.msra.mxu0 %v858
  %1413 = vmatpush.bf16.msra.mxu0 %v850
  %1414 = vmatpush.bf16.msra.mxu0 %v842
  %1415 = vmatpush.bf16.msra.mxu0 %v834
  %1416 = vmatpush.bf16.msra.mxu0 %v826
  %1417 = vmatpush.bf16.msra.mxu0 %v818
  %1418 = vmatmul.bf16.gmra.mxu0 %v1330
  %v1419 = vpop.f32.mrf.mxu0
  %v1420 = vadd.f32 0.0, %v1419
  %v1421 = vpop.f32.mrf.mxu0
  %1422 = vdwg.mxu0
  %1423 = vmatpush.bf16.msra.mxu0 %v938
  %1424 = vmatpush.bf16.msra.mxu0 %v930
  %1425 = vmatpush.bf16.msra.mxu0 %v922
  %1426 = vmatpush.bf16.msra.mxu0 %v914
  %1427 = vmatpush.bf16.msra.mxu0 %v906
  %1428 = vmatpush.bf16.msra.mxu0 %v898
  %1429 = vmatpush.bf16.msra.mxu0 %v890
  %1430 = vmatpush.bf16.msra.mxu0 %v882
  %1431 = vmatmul.bf16.gmra.mxu0 %v1331
  %v1432 = vpop.f32.mrf.mxu0
  %v1433 = vadd.f32 %v1420, %v1432
  %v1434 = vpop.f32.mrf.mxu0
  %1435 = vdwg.mxu0
  %1436 = vmatpush.bf16.msra.mxu0 %v875
  %1437 = vmatpush.bf16.msra.mxu0 %v867
  %1438 = vmatpush.bf16.msra.mxu0 %v859
  %1439 = vmatpush.bf16.msra.mxu0 %v851
  %1440 = vmatpush.bf16.msra.mxu0 %v843
  %1441 = vmatpush.bf16.msra.mxu0 %v835
  %1442 = vmatpush.bf16.msra.mxu0 %v827
  %1443 = vmatpush.bf16.msra.mxu0 %v819
  %1444 = vmatmul.bf16.gmra.mxu0 %v1330
  %v1445 = vpop.f32.mrf.mxu0
  %v1446 = vadd.f32 0.0, %v1445
  %v1447 = vpop.f32.mrf.mxu0
  %1448 = vdwg.mxu0
  %1449 = vmatpush.bf16.msra.mxu0 %v939
  %1450 = vmatpush.bf16.msra.mxu0 %v931
  %1451 = vmatpush.bf16.msra.mxu0 %v923
  %1452 = vmatpush.bf16.msra.mxu0 %v915
  %1453 = vmatpush.bf16.msra.mxu0 %v907
  %1454 = vmatpush.bf16.msra.mxu0 %v899
  %1455 = vmatpush.bf16.msra.mxu0 %v891
  %1456 = vmatpush.bf16.msra.mxu0 %v883
  %1457 = vmatmul.bf16.gmra.mxu0 %v1331
  %v1458 = vpop.f32.mrf.mxu0
  %v1459 = vadd.f32 %v1446, %v1458
  %v1460 = vpop.f32.mrf.mxu0
  %1461 = vdwg.mxu0
  %1462 = vmatpush.bf16.msra.mxu0 %v876
  %1463 = vmatpush.bf16.msra.mxu0 %v868
  %1464 = vmatpush.bf16.msra.mxu0 %v860
  %1465 = vmatpush.bf16.msra.mxu0 %v852
  %1466 = vmatpush.bf16.msra.mxu0 %v844
  %1467 = vmatpush.bf16.msra.mxu0 %v836
  %1468 = vmatpush.bf16.msra.mxu0 %v828
  %1469 = vmatpush.bf16.msra.mxu0 %v820
  %1470 = vmatmul.bf16.gmra.mxu0 %v1330
  %v1471 = vpop.f32.mrf.mxu0
  %v1472 = vadd.f32 0.0, %v1471
  %v1473 = vpop.f32.mrf.mxu0
  %1474 = vdwg.mxu0
  %1475 = vmatpush.bf16.msra.mxu0 %v940
  %1476 = vmatpush.bf16.msra.mxu0 %v932
  %1477 = vmatpush.bf16.msra.mxu0 %v924
  %1478 = vmatpush.bf16.msra.mxu0 %v916
  %1479 = vmatpush.bf16.msra.mxu0 %v908
  %1480 = vmatpush.bf16.msra.mxu0 %v900
  %1481 = vmatpush.bf16.msra.mxu0 %v892
  %1482 = vmatpush.bf16.msra.mxu0 %v884
  %1483 = vmatmul.bf16.gmra.mxu0 %v1331
  %v1484 = vpop.f32.mrf.mxu0
  %v1485 = vadd.f32 %v1472, %v1484
  %v1486 = vpop.f32.mrf.mxu0
  %1487 = vdwg.mxu0
  %1488 = vmatpush.bf16.msra.mxu0 %v877
  %1489 = vmatpush.bf16.msra.mxu0 %v869
  %1490 = vmatpush.bf16.msra.mxu0 %v861
  %1491 = vmatpush.bf16.msra.mxu0 %v853
  %1492 = vmatpush.bf16.msra.mxu0 %v845
  %1493 = vmatpush.bf16.msra.mxu0 %v837
  %1494 = vmatpush.bf16.msra.mxu0 %v829
  %1495 = vmatpush.bf16.msra.mxu0 %v821
  %1496 = vmatmul.bf16.gmra.mxu0 %v1330
  %v1497 = vpop.f32.mrf.mxu0
  %v1498 = vadd.f32 0.0, %v1497
  %v1499 = vpop.f32.mrf.mxu0
  %1500 = vdwg.mxu0
  %1501 = vmatpush.bf16.msra.mxu0 %v941
  %1502 = vmatpush.bf16.msra.mxu0 %v933
  %1503 = vmatpush.bf16.msra.mxu0 %v925
  %1504 = vmatpush.bf16.msra.mxu0 %v917
  %1505 = vmatpush.bf16.msra.mxu0 %v909
  %1506 = vmatpush.bf16.msra.mxu0 %v901
  %1507 = vmatpush.bf16.msra.mxu0 %v893
  %1508 = vmatpush.bf16.msra.mxu0 %v885
  %1509 = vmatmul.bf16.gmra.mxu0 %v1331
  %v1510 = vpop.f32.mrf.mxu0
  %v1511 = vadd.f32 %v1498, %v1510
  %v1512 = vpop.f32.mrf.mxu0
  %1513 = vdwg.mxu0
  %1514 = vmatpush.bf16.msra.mxu0 %v878
  %1515 = vmatpush.bf16.msra.mxu0 %v870
  %1516 = vmatpush.bf16.msra.mxu0 %v862
  %1517 = vmatpush.bf16.msra.mxu0 %v854
  %1518 = vmatpush.bf16.msra.mxu0 %v846
  %1519 = vmatpush.bf16.msra.mxu0 %v838
  %1520 = vmatpush.bf16.msra.mxu0 %v830
  %1521 = vmatpush.bf16.msra.mxu0 %v822
  %1522 = vmatmul.bf16.gmra.mxu0 %v1330
  %v1523 = vpop.f32.mrf.mxu0
  %v1524 = vadd.f32 0.0, %v1523
  %v1525 = vpop.f32.mrf.mxu0
  %1526 = vdwg.mxu0
  %1527 = vmatpush.bf16.msra.mxu0 %v942
  %1528 = vmatpush.bf16.msra.mxu0 %v934
  %1529 = vmatpush.bf16.msra.mxu0 %v926
  %1530 = vmatpush.bf16.msra.mxu0 %v918
  %1531 = vmatpush.bf16.msra.mxu0 %v910
  %1532 = vmatpush.bf16.msra.mxu0 %v902
  %1533 = vmatpush.bf16.msra.mxu0 %v894
  %1534 = vmatpush.bf16.msra.mxu0 %v886
  %1535 = vmatmul.bf16.gmra.mxu0 %v1331
  %v1536 = vpop.f32.mrf.mxu0
  %v1537 = vadd.f32 %v1524, %v1536
  %v1538 = vpop.f32.mrf.mxu0
  %1539 = vdwg.mxu0
  %s1540 = smul.u32 2, 4
  %s1541 = smul.addr %s1540, 8
  %s1542 = scalar_lea.vmem [#allocation2], %s1541
  %v1543 = vld [vmem:[%s1542] sm:$0xff]
  %v1544 = vld [vmem:[%s1542 + $0x8] sm:$0xff]
  %v1545 = vld [vmem:[%s1542 + $0x10] sm:$0xff]
  %v1546 = vld [vmem:[%s1542 + $0x18] sm:$0xff]
  %v1547 = vadd.f32 %v1355, %v1543
  %v1548 = vadd.f32 %v1381, %v1544
  %v1549 = vadd.f32 %v1407, %v1545
  %v1550 = vadd.f32 %v1433, %v1546
  %v1551 = vadd.f32 %v1459, %v271
  %v1552 = vadd.f32 %v1485, %v272
  %v1553 = vadd.f32 %v1511, %v273
  %v1554 = vadd.f32 %v1537, %v274
  %v1555 = vmul.f32 %v1547, 0.5
  %v1556 = vmul.f32 %v1548, 0.5
  %v1557 = vmul.f32 %v1549, 0.5
  %v1558 = vtanh.pop %v1555
  %v1559 = vtanh.pop %v1556
  %v1560 = vtanh.pop %v1557
  %v1561 = vmul.f32 %v1558, 0.5
  %v1562 = vmul.f32 %v1559, 0.5
  %v1563 = vmul.f32 %v1560, 0.5
  %v1564 = vadd.f32 %v1561, 0.5
  %v1565 = vadd.f32 %v1562, 0.5
  %v1566 = vadd.f32 %v1563, 0.5
  %v1567 = vtanh.pop %v1550
  %v1568 = vmul.f32 %v1565, %v1309
  %v1569 = vmul.f32 %v1564, %v1567
  %v1570 = vadd.f32 %v1568, %v1569
  %v1571 = vtanh.pop %v1570
  %v1572 = vmul.f32 %v1566, %v1571
  %v1573 = vmul.f32 %v1551, 0.5
  %v1574 = vmul.f32 %v1552, 0.5
  %v1575 = vmul.f32 %v1553, 0.5
  %v1576 = vtanh.pop %v1573
  %v1577 = vtanh.pop %v1574
  %v1578 = vtanh.pop %v1575
  %v1579 = vmul.f32 %v1576, 0.5
  %v1580 = vmul.f32 %v1577, 0.5
  %v1581 = vmul.f32 %v1578, 0.5
  %v1582 = vadd.f32 %v1579, 0.5
  %v1583 = vadd.f32 %v1580, 0.5
  %v1584 = vadd.f32 %v1581, 0.5
  %v1585 = vtanh.pop %v1554
  %v1586 = vmul.f32 %v1583, %v1327
  %v1587 = vmul.f32 %v1582, %v1585
  %v1588 = vadd.f32 %v1586, %v1587
  %v1589 = vtanh.pop %v1588
  %v1590 = vmul.f32 %v1584, %v1589
  %v1591 = vpack.c.bf16 %v1572, %v1572
  %v1592 = vpack.c.bf16 %v1590, %v1590
  %1593 = vmatpush.bf16.msra.mxu0 %v871
  %1594 = vmatpush.bf16.msra.mxu0 %v863
  %1595 = vmatpush.bf16.msra.mxu0 %v855
  %1596 = vmatpush.bf16.msra.mxu0 %v847
  %1597 = vmatpush.bf16.msra.mxu0 %v839
  %1598 = vmatpush.bf16.msra.mxu0 %v831
  %1599 = vmatpush.bf16.msra.mxu0 %v823
  %1600 = vmatpush.bf16.msra.mxu0 %v815
  %1601 = vmatmul.bf16.gmra.mxu0 %v1591
  %v1602 = vpop.f32.mrf.mxu0
  %v1603 = vadd.f32 0.0, %v1602
  %v1604 = vpop.f32.mrf.mxu0
  %1605 = vdwg.mxu0
  %1606 = vmatpush.bf16.msra.mxu0 %v935
  %1607 = vmatpush.bf16.msra.mxu0 %v927
  %1608 = vmatpush.bf16.msra.mxu0 %v919
  %1609 = vmatpush.bf16.msra.mxu0 %v911
  %1610 = vmatpush.bf16.msra.mxu0 %v903
  %1611 = vmatpush.bf16.msra.mxu0 %v895
  %1612 = vmatpush.bf16.msra.mxu0 %v887
  %1613 = vmatpush.bf16.msra.mxu0 %v879
  %1614 = vmatmul.bf16.gmra.mxu0 %v1592
  %v1615 = vpop.f32.mrf.mxu0
  %v1616 = vadd.f32 %v1603, %v1615
  %v1617 = vpop.f32.mrf.mxu0
  %1618 = vdwg.mxu0
  %1619 = vmatpush.bf16.msra.mxu0 %v872
  %1620 = vmatpush.bf16.msra.mxu0 %v864
  %1621 = vmatpush.bf16.msra.mxu0 %v856
  %1622 = vmatpush.bf16.msra.mxu0 %v848
  %1623 = vmatpush.bf16.msra.mxu0 %v840
  %1624 = vmatpush.bf16.msra.mxu0 %v832
  %1625 = vmatpush.bf16.msra.mxu0 %v824
  %1626 = vmatpush.bf16.msra.mxu0 %v816
  %1627 = vmatmul.bf16.gmra.mxu0 %v1591
  %v1628 = vpop.f32.mrf.mxu0
  %v1629 = vadd.f32 0.0, %v1628
  %v1630 = vpop.f32.mrf.mxu0
  %1631 = vdwg.mxu0
  %1632 = vmatpush.bf16.msra.mxu0 %v936
  %1633 = vmatpush.bf16.msra.mxu0 %v928
  %1634 = vmatpush.bf16.msra.mxu0 %v920
  %1635 = vmatpush.bf16.msra.mxu0 %v912
  %1636 = vmatpush.bf16.msra.mxu0 %v904
  %1637 = vmatpush.bf16.msra.mxu0 %v896
  %1638 = vmatpush.bf16.msra.mxu0 %v888
  %1639 = vmatpush.bf16.msra.mxu0 %v880
  %1640 = vmatmul.bf16.gmra.mxu0 %v1592
  %v1641 = vpop.f32.mrf.mxu0
  %v1642 = vadd.f32 %v1629, %v1641
  %v1643 = vpop.f32.mrf.mxu0
  %1644 = vdwg.mxu0
  %1645 = vmatpush.bf16.msra.mxu0 %v873
  %1646 = vmatpush.bf16.msra.mxu0 %v865
  %1647 = vmatpush.bf16.msra.mxu0 %v857
  %1648 = vmatpush.bf16.msra.mxu0 %v849
  %1649 = vmatpush.bf16.msra.mxu0 %v841
  %1650 = vmatpush.bf16.msra.mxu0 %v833
  %1651 = vmatpush.bf16.msra.mxu0 %v825
  %1652 = vmatpush.bf16.msra.mxu0 %v817
  %1653 = vmatmul.bf16.gmra.mxu0 %v1591
  %v1654 = vpop.f32.mrf.mxu0
  %v1655 = vadd.f32 0.0, %v1654
  %v1656 = vpop.f32.mrf.mxu0
  %1657 = vdwg.mxu0
  %1658 = vmatpush.bf16.msra.mxu0 %v937
  %1659 = vmatpush.bf16.msra.mxu0 %v929
  %1660 = vmatpush.bf16.msra.mxu0 %v921
  %1661 = vmatpush.bf16.msra.mxu0 %v913
  %1662 = vmatpush.bf16.msra.mxu0 %v905
  %1663 = vmatpush.bf16.msra.mxu0 %v897
  %1664 = vmatpush.bf16.msra.mxu0 %v889
  %1665 = vmatpush.bf16.msra.mxu0 %v881
  %1666 = vmatmul.bf16.gmra.mxu0 %v1592
  %v1667 = vpop.f32.mrf.mxu0
  %v1668 = vadd.f32 %v1655, %v1667
  %v1669 = vpop.f32.mrf.mxu0
  %1670 = vdwg.mxu0
  %1671 = vmatpush.bf16.msra.mxu0 %v874
  %1672 = vmatpush.bf16.msra.mxu0 %v866
  %1673 = vmatpush.bf16.msra.mxu0 %v858
  %1674 = vmatpush.bf16.msra.mxu0 %v850
  %1675 = vmatpush.bf16.msra.mxu0 %v842
  %1676 = vmatpush.bf16.msra.mxu0 %v834
  %1677 = vmatpush.bf16.msra.mxu0 %v826
  %1678 = vmatpush.bf16.msra.mxu0 %v818
  %1679 = vmatmul.bf16.gmra.mxu0 %v1591
  %v1680 = vpop.f32.mrf.mxu0
  %v1681 = vadd.f32 0.0, %v1680
  %v1682 = vpop.f32.mrf.mxu0
  %1683 = vdwg.mxu0
  %1684 = vmatpush.bf16.msra.mxu0 %v938
  %1685 = vmatpush.bf16.msra.mxu0 %v930
  %1686 = vmatpush.bf16.msra.mxu0 %v922
  %1687 = vmatpush.bf16.msra.mxu0 %v914
  %1688 = vmatpush.bf16.msra.mxu0 %v906
  %1689 = vmatpush.bf16.msra.mxu0 %v898
  %1690 = vmatpush.bf16.msra.mxu0 %v890
  %1691 = vmatpush.bf16.msra.mxu0 %v882
  %1692 = vmatmul.bf16.gmra.mxu0 %v1592
  %v1693 = vpop.f32.mrf.mxu0
  %v1694 = vadd.f32 %v1681, %v1693
  %v1695 = vpop.f32.mrf.mxu0
  %1696 = vdwg.mxu0
  %1697 = vmatpush.bf16.msra.mxu0 %v875
  %1698 = vmatpush.bf16.msra.mxu0 %v867
  %1699 = vmatpush.bf16.msra.mxu0 %v859
  %1700 = vmatpush.bf16.msra.mxu0 %v851
  %1701 = vmatpush.bf16.msra.mxu0 %v843
  %1702 = vmatpush.bf16.msra.mxu0 %v835
  %1703 = vmatpush.bf16.msra.mxu0 %v827
  %1704 = vmatpush.bf16.msra.mxu0 %v819
  %1705 = vmatmul.bf16.gmra.mxu0 %v1591
  %v1706 = vpop.f32.mrf.mxu0
  %v1707 = vadd.f32 0.0, %v1706
  %v1708 = vpop.f32.mrf.mxu0
  %1709 = vdwg.mxu0
  %1710 = vmatpush.bf16.msra.mxu0 %v939
  %1711 = vmatpush.bf16.msra.mxu0 %v931
  %1712 = vmatpush.bf16.msra.mxu0 %v923
  %1713 = vmatpush.bf16.msra.mxu0 %v915
  %1714 = vmatpush.bf16.msra.mxu0 %v907
  %1715 = vmatpush.bf16.msra.mxu0 %v899
  %1716 = vmatpush.bf16.msra.mxu0 %v891
  %1717 = vmatpush.bf16.msra.mxu0 %v883
  %1718 = vmatmul.bf16.gmra.mxu0 %v1592
  %v1719 = vpop.f32.mrf.mxu0
  %v1720 = vadd.f32 %v1707, %v1719
  %v1721 = vpop.f32.mrf.mxu0
  %1722 = vdwg.mxu0
  %1723 = vmatpush.bf16.msra.mxu0 %v876
  %1724 = vmatpush.bf16.msra.mxu0 %v868
  %1725 = vmatpush.bf16.msra.mxu0 %v860
  %1726 = vmatpush.bf16.msra.mxu0 %v852
  %1727 = vmatpush.bf16.msra.mxu0 %v844
  %1728 = vmatpush.bf16.msra.mxu0 %v836
  %1729 = vmatpush.bf16.msra.mxu0 %v828
  %1730 = vmatpush.bf16.msra.mxu0 %v820
  %1731 = vmatmul.bf16.gmra.mxu0 %v1591
  %v1732 = vpop.f32.mrf.mxu0
  %v1733 = vadd.f32 0.0, %v1732
  %v1734 = vpop.f32.mrf.mxu0
  %1735 = vdwg.mxu0
  %1736 = vmatpush.bf16.msra.mxu0 %v940
  %1737 = vmatpush.bf16.msra.mxu0 %v932
  %1738 = vmatpush.bf16.msra.mxu0 %v924
  %1739 = vmatpush.bf16.msra.mxu0 %v916
  %1740 = vmatpush.bf16.msra.mxu0 %v908
  %1741 = vmatpush.bf16.msra.mxu0 %v900
  %1742 = vmatpush.bf16.msra.mxu0 %v892
  %1743 = vmatpush.bf16.msra.mxu0 %v884
  %1744 = vmatmul.bf16.gmra.mxu0 %v1592
  %v1745 = vpop.f32.mrf.mxu0
  %v1746 = vadd.f32 %v1733, %v1745
  %v1747 = vpop.f32.mrf.mxu0
  %1748 = vdwg.mxu0
  %1749 = vmatpush.bf16.msra.mxu0 %v877
  %1750 = vmatpush.bf16.msra.mxu0 %v869
  %1751 = vmatpush.bf16.msra.mxu0 %v861
  %1752 = vmatpush.bf16.msra.mxu0 %v853
  %1753 = vmatpush.bf16.msra.mxu0 %v845
  %1754 = vmatpush.bf16.msra.mxu0 %v837
  %1755 = vmatpush.bf16.msra.mxu0 %v829
  %1756 = vmatpush.bf16.msra.mxu0 %v821
  %1757 = vmatmul.bf16.gmra.mxu0 %v1591
  %v1758 = vpop.f32.mrf.mxu0
  %v1759 = vadd.f32 0.0, %v1758
  %v1760 = vpop.f32.mrf.mxu0
  %1761 = vdwg.mxu0
  %1762 = vmatpush.bf16.msra.mxu0 %v941
  %1763 = vmatpush.bf16.msra.mxu0 %v933
  %1764 = vmatpush.bf16.msra.mxu0 %v925
  %1765 = vmatpush.bf16.msra.mxu0 %v917
  %1766 = vmatpush.bf16.msra.mxu0 %v909
  %1767 = vmatpush.bf16.msra.mxu0 %v901
  %1768 = vmatpush.bf16.msra.mxu0 %v893
  %1769 = vmatpush.bf16.msra.mxu0 %v885
  %1770 = vmatmul.bf16.gmra.mxu0 %v1592
  %v1771 = vpop.f32.mrf.mxu0
  %v1772 = vadd.f32 %v1759, %v1771
  %v1773 = vpop.f32.mrf.mxu0
  %1774 = vdwg.mxu0
  %1775 = vmatpush.bf16.msra.mxu0 %v878
  %1776 = vmatpush.bf16.msra.mxu0 %v870
  %1777 = vmatpush.bf16.msra.mxu0 %v862
  %1778 = vmatpush.bf16.msra.mxu0 %v854
  %1779 = vmatpush.bf16.msra.mxu0 %v846
  %1780 = vmatpush.bf16.msra.mxu0 %v838
  %1781 = vmatpush.bf16.msra.mxu0 %v830
  %1782 = vmatpush.bf16.msra.mxu0 %v822
  %1783 = vmatmul.bf16.gmra.mxu0 %v1591
  %v1784 = vpop.f32.mrf.mxu0
  %v1785 = vadd.f32 0.0, %v1784
  %v1786 = vpop.f32.mrf.mxu0
  %1787 = vdwg.mxu0
  %1788 = vmatpush.bf16.msra.mxu0 %v942
  %1789 = vmatpush.bf16.msra.mxu0 %v934
  %1790 = vmatpush.bf16.msra.mxu0 %v926
  %1791 = vmatpush.bf16.msra.mxu0 %v918
  %1792 = vmatpush.bf16.msra.mxu0 %v910
  %1793 = vmatpush.bf16.msra.mxu0 %v902
  %1794 = vmatpush.bf16.msra.mxu0 %v894
  %1795 = vmatpush.bf16.msra.mxu0 %v886
  %1796 = vmatmul.bf16.gmra.mxu0 %v1592
  %v1797 = vpop.f32.mrf.mxu0
  %v1798 = vadd.f32 %v1785, %v1797
  %v1799 = vpop.f32.mrf.mxu0
  %1800 = vdwg.mxu0
  %s1801 = smul.u32 3, 4
  %s1802 = smul.addr %s1801, 8
  %s1803 = scalar_lea.vmem [#allocation2], %s1802
  %v1804 = vld [vmem:[%s1803] sm:$0xff]
  %v1805 = vld [vmem:[%s1803 + $0x8] sm:$0xff]
  %v1806 = vld [vmem:[%s1803 + $0x10] sm:$0xff]
  %v1807 = vld [vmem:[%s1803 + $0x18] sm:$0xff]
  %v1808 = vadd.f32 %v1616, %v1804
  %v1809 = vadd.f32 %v1642, %v1805
  %v1810 = vadd.f32 %v1668, %v1806
  %v1811 = vadd.f32 %v1694, %v1807
  %v1812 = vadd.f32 %v1720, %v271
  %v1813 = vadd.f32 %v1746, %v272
  %v1814 = vadd.f32 %v1772, %v273
  %v1815 = vadd.f32 %v1798, %v274
  %v1816 = vmul.f32 %v1808, 0.5
  %v1817 = vmul.f32 %v1809, 0.5
  %v1818 = vmul.f32 %v1810, 0.5
  %v1819 = vtanh.pop %v1816
  %v1820 = vtanh.pop %v1817
  %v1821 = vtanh.pop %v1818
  %v1822 = vmul.f32 %v1819, 0.5
  %v1823 = vmul.f32 %v1820, 0.5
  %v1824 = vmul.f32 %v1821, 0.5
  %v1825 = vadd.f32 %v1822, 0.5
  %v1826 = vadd.f32 %v1823, 0.5
  %v1827 = vadd.f32 %v1824, 0.5
  %v1828 = vtanh.pop %v1811
  %v1829 = vmul.f32 %v1826, %v1570
  %v1830 = vmul.f32 %v1825, %v1828
  %v1831 = vadd.f32 %v1829, %v1830
  %v1832 = vtanh.pop %v1831
  %v1833 = vmul.f32 %v1827, %v1832
  %v1834 = vmul.f32 %v1812, 0.5
  %v1835 = vmul.f32 %v1813, 0.5
  %v1836 = vmul.f32 %v1814, 0.5
  %v1837 = vtanh.pop %v1834
  %v1838 = vtanh.pop %v1835
  %v1839 = vtanh.pop %v1836
  %v1840 = vmul.f32 %v1837, 0.5
  %v1841 = vmul.f32 %v1838, 0.5
  %v1842 = vmul.f32 %v1839, 0.5
  %v1843 = vadd.f32 %v1840, 0.5
  %v1844 = vadd.f32 %v1841, 0.5
  %v1845 = vadd.f32 %v1842, 0.5
  %v1846 = vtanh.pop %v1815
  %v1847 = vmul.f32 %v1844, %v1588
  %v1848 = vmul.f32 %v1843, %v1846
  %v1849 = vadd.f32 %v1847, %v1848
  %v1850 = vtanh.pop %v1849
  %v1851 = vmul.f32 %v1845, %v1850
  %v1852 = vpack.c.bf16 %v1833, %v1833
  %v1853 = vpack.c.bf16 %v1851, %v1851
  %1854 = vmatpush.bf16.msra.mxu0 %v871
  %1855 = vmatpush.bf16.msra.mxu0 %v863
  %1856 = vmatpush.bf16.msra.mxu0 %v855
  %1857 = vmatpush.bf16.msra.mxu0 %v847
  %1858 = vmatpush.bf16.msra.mxu0 %v839
  %1859 = vmatpush.bf16.msra.mxu0 %v831
  %1860 = vmatpush.bf16.msra.mxu0 %v823
  %1861 = vmatpush.bf16.msra.mxu0 %v815
  %1862 = vmatmul.bf16.gmra.mxu0 %v1852
  %v1863 = vpop.f32.mrf.mxu0
  %v1864 = vadd.f32 0.0, %v1863
  %v1865 = vpop.f32.mrf.mxu0
  %1866 = vdwg.mxu0
  %1867 = vmatpush.bf16.msra.mxu0 %v935
  %1868 = vmatpush.bf16.msra.mxu0 %v927
  %1869 = vmatpush.bf16.msra.mxu0 %v919
  %1870 = vmatpush.bf16.msra.mxu0 %v911
  %1871 = vmatpush.bf16.msra.mxu0 %v903
  %1872 = vmatpush.bf16.msra.mxu0 %v895
  %1873 = vmatpush.bf16.msra.mxu0 %v887
  %1874 = vmatpush.bf16.msra.mxu0 %v879
  %1875 = vmatmul.bf16.gmra.mxu0 %v1853
  %v1876 = vpop.f32.mrf.mxu0
  %v1877 = vadd.f32 %v1864, %v1876
  %v1878 = vpop.f32.mrf.mxu0
  %1879 = vdwg.mxu0
  %1880 = vmatpush.bf16.msra.mxu0 %v872
  %1881 = vmatpush.bf16.msra.mxu0 %v864
  %1882 = vmatpush.bf16.msra.mxu0 %v856
  %1883 = vmatpush.bf16.msra.mxu0 %v848
  %1884 = vmatpush.bf16.msra.mxu0 %v840
  %1885 = vmatpush.bf16.msra.mxu0 %v832
  %1886 = vmatpush.bf16.msra.mxu0 %v824
  %1887 = vmatpush.bf16.msra.mxu0 %v816
  %1888 = vmatmul.bf16.gmra.mxu0 %v1852
  %v1889 = vpop.f32.mrf.mxu0
  %v1890 = vadd.f32 0.0, %v1889
  %v1891 = vpop.f32.mrf.mxu0
  %1892 = vdwg.mxu0
  %1893 = vmatpush.bf16.msra.mxu0 %v936
  %1894 = vmatpush.bf16.msra.mxu0 %v928
  %1895 = vmatpush.bf16.msra.mxu0 %v920
  %1896 = vmatpush.bf16.msra.mxu0 %v912
  %1897 = vmatpush.bf16.msra.mxu0 %v904
  %1898 = vmatpush.bf16.msra.mxu0 %v896
  %1899 = vmatpush.bf16.msra.mxu0 %v888
  %1900 = vmatpush.bf16.msra.mxu0 %v880
  %1901 = vmatmul.bf16.gmra.mxu0 %v1853
  %v1902 = vpop.f32.mrf.mxu0
  %v1903 = vadd.f32 %v1890, %v1902
  %v1904 = vpop.f32.mrf.mxu0
  %1905 = vdwg.mxu0
  %1906 = vmatpush.bf16.msra.mxu0 %v873
  %1907 = vmatpush.bf16.msra.mxu0 %v865
  %1908 = vmatpush.bf16.msra.mxu0 %v857
  %1909 = vmatpush.bf16.msra.mxu0 %v849
  %1910 = vmatpush.bf16.msra.mxu0 %v841
  %1911 = vmatpush.bf16.msra.mxu0 %v833
  %1912 = vmatpush.bf16.msra.mxu0 %v825
  %1913 = vmatpush.bf16.msra.mxu0 %v817
  %1914 = vmatmul.bf16.gmra.mxu0 %v1852
  %v1915 = vpop.f32.mrf.mxu0
  %v1916 = vadd.f32 0.0, %v1915
  %v1917 = vpop.f32.mrf.mxu0
  %1918 = vdwg.mxu0
  %1919 = vmatpush.bf16.msra.mxu0 %v937
  %1920 = vmatpush.bf16.msra.mxu0 %v929
  %1921 = vmatpush.bf16.msra.mxu0 %v921
  %1922 = vmatpush.bf16.msra.mxu0 %v913
  %1923 = vmatpush.bf16.msra.mxu0 %v905
  %1924 = vmatpush.bf16.msra.mxu0 %v897
  %1925 = vmatpush.bf16.msra.mxu0 %v889
  %1926 = vmatpush.bf16.msra.mxu0 %v881
  %1927 = vmatmul.bf16.gmra.mxu0 %v1853
  %v1928 = vpop.f32.mrf.mxu0
  %v1929 = vadd.f32 %v1916, %v1928
  %v1930 = vpop.f32.mrf.mxu0
  %1931 = vdwg.mxu0
  %1932 = vmatpush.bf16.msra.mxu0 %v874
  %1933 = vmatpush.bf16.msra.mxu0 %v866
  %1934 = vmatpush.bf16.msra.mxu0 %v858
  %1935 = vmatpush.bf16.msra.mxu0 %v850
  %1936 = vmatpush.bf16.msra.mxu0 %v842
  %1937 = vmatpush.bf16.msra.mxu0 %v834
  %1938 = vmatpush.bf16.msra.mxu0 %v826
  %1939 = vmatpush.bf16.msra.mxu0 %v818
  %1940 = vmatmul.bf16.gmra.mxu0 %v1852
  %v1941 = vpop.f32.mrf.mxu0
  %v1942 = vadd.f32 0.0, %v1941
  %v1943 = vpop.f32.mrf.mxu0
  %1944 = vdwg.mxu0
  %1945 = vmatpush.bf16.msra.mxu0 %v938
  %1946 = vmatpush.bf16.msra.mxu0 %v930
  %1947 = vmatpush.bf16.msra.mxu0 %v922
  %1948 = vmatpush.bf16.msra.mxu0 %v914
  %1949 = vmatpush.bf16.msra.mxu0 %v906
  %1950 = vmatpush.bf16.msra.mxu0 %v898
  %1951 = vmatpush.bf16.msra.mxu0 %v890
  %1952 = vmatpush.bf16.msra.mxu0 %v882
  %1953 = vmatmul.bf16.gmra.mxu0 %v1853
  %v1954 = vpop.f32.mrf.mxu0
  %v1955 = vadd.f32 %v1942, %v1954
  %v1956 = vpop.f32.mrf.mxu0
  %1957 = vdwg.mxu0
  %1958 = vmatpush.bf16.msra.mxu0 %v875
  %1959 = vmatpush.bf16.msra.mxu0 %v867
  %1960 = vmatpush.bf16.msra.mxu0 %v859
  %1961 = vmatpush.bf16.msra.mxu0 %v851
  %1962 = vmatpush.bf16.msra.mxu0 %v843
  %1963 = vmatpush.bf16.msra.mxu0 %v835
  %1964 = vmatpush.bf16.msra.mxu0 %v827
  %1965 = vmatpush.bf16.msra.mxu0 %v819
  %1966 = vmatmul.bf16.gmra.mxu0 %v1852
  %v1967 = vpop.f32.mrf.mxu0
  %v1968 = vadd.f32 0.0, %v1967
  %v1969 = vpop.f32.mrf.mxu0
  %1970 = vdwg.mxu0
  %1971 = vmatpush.bf16.msra.mxu0 %v939
  %1972 = vmatpush.bf16.msra.mxu0 %v931
  %1973 = vmatpush.bf16.msra.mxu0 %v923
  %1974 = vmatpush.bf16.msra.mxu0 %v915
  %1975 = vmatpush.bf16.msra.mxu0 %v907
  %1976 = vmatpush.bf16.msra.mxu0 %v899
  %1977 = vmatpush.bf16.msra.mxu0 %v891
  %1978 = vmatpush.bf16.msra.mxu0 %v883
  %1979 = vmatmul.bf16.gmra.mxu0 %v1853
  %v1980 = vpop.f32.mrf.mxu0
  %v1981 = vadd.f32 %v1968, %v1980
  %v1982 = vpop.f32.mrf.mxu0
  %1983 = vdwg.mxu0
  %1984 = vmatpush.bf16.msra.mxu0 %v876
  %1985 = vmatpush.bf16.msra.mxu0 %v868
  %1986 = vmatpush.bf16.msra.mxu0 %v860
  %1987 = vmatpush.bf16.msra.mxu0 %v852
  %1988 = vmatpush.bf16.msra.mxu0 %v844
  %1989 = vmatpush.bf16.msra.mxu0 %v836
  %1990 = vmatpush.bf16.msra.mxu0 %v828
  %1991 = vmatpush.bf16.msra.mxu0 %v820
  %1992 = vmatmul.bf16.gmra.mxu0 %v1852
  %v1993 = vpop.f32.mrf.mxu0
  %v1994 = vadd.f32 0.0, %v1993
  %v1995 = vpop.f32.mrf.mxu0
  %1996 = vdwg.mxu0
  %1997 = vmatpush.bf16.msra.mxu0 %v940
  %1998 = vmatpush.bf16.msra.mxu0 %v932
  %1999 = vmatpush.bf16.msra.mxu0 %v924
  %2000 = vmatpush.bf16.msra.mxu0 %v916
  %2001 = vmatpush.bf16.msra.mxu0 %v908
  %2002 = vmatpush.bf16.msra.mxu0 %v900
  %2003 = vmatpush.bf16.msra.mxu0 %v892
  %2004 = vmatpush.bf16.msra.mxu0 %v884
  %2005 = vmatmul.bf16.gmra.mxu0 %v1853
  %v2006 = vpop.f32.mrf.mxu0
  %v2007 = vadd.f32 %v1994, %v2006
  %v2008 = vpop.f32.mrf.mxu0
  %2009 = vdwg.mxu0
  %2010 = vmatpush.bf16.msra.mxu0 %v877
  %2011 = vmatpush.bf16.msra.mxu0 %v869
  %2012 = vmatpush.bf16.msra.mxu0 %v861
  %2013 = vmatpush.bf16.msra.mxu0 %v853
  %2014 = vmatpush.bf16.msra.mxu0 %v845
  %2015 = vmatpush.bf16.msra.mxu0 %v837
  %2016 = vmatpush.bf16.msra.mxu0 %v829
  %2017 = vmatpush.bf16.msra.mxu0 %v821
  %2018 = vmatmul.bf16.gmra.mxu0 %v1852
  %v2019 = vpop.f32.mrf.mxu0
  %v2020 = vadd.f32 0.0, %v2019
  %v2021 = vpop.f32.mrf.mxu0
  %2022 = vdwg.mxu0
  %2023 = vmatpush.bf16.msra.mxu0 %v941
  %2024 = vmatpush.bf16.msra.mxu0 %v933
  %2025 = vmatpush.bf16.msra.mxu0 %v925
  %2026 = vmatpush.bf16.msra.mxu0 %v917
  %2027 = vmatpush.bf16.msra.mxu0 %v909
  %2028 = vmatpush.bf16.msra.mxu0 %v901
  %2029 = vmatpush.bf16.msra.mxu0 %v893
  %2030 = vmatpush.bf16.msra.mxu0 %v885
  %2031 = vmatmul.bf16.gmra.mxu0 %v1853
  %v2032 = vpop.f32.mrf.mxu0
  %v2033 = vadd.f32 %v2020, %v2032
  %v2034 = vpop.f32.mrf.mxu0
  %2035 = vdwg.mxu0
  %2036 = vmatpush.bf16.msra.mxu0 %v878
  %2037 = vmatpush.bf16.msra.mxu0 %v870
  %2038 = vmatpush.bf16.msra.mxu0 %v862
  %2039 = vmatpush.bf16.msra.mxu0 %v854
  %2040 = vmatpush.bf16.msra.mxu0 %v846
  %2041 = vmatpush.bf16.msra.mxu0 %v838
  %2042 = vmatpush.bf16.msra.mxu0 %v830
  %2043 = vmatpush.bf16.msra.mxu0 %v822
  %2044 = vmatmul.bf16.gmra.mxu0 %v1852
  %v2045 = vpop.f32.mrf.mxu0
  %v2046 = vadd.f32 0.0, %v2045
  %v2047 = vpop.f32.mrf.mxu0
  %2048 = vdwg.mxu0
  %2049 = vmatpush.bf16.msra.mxu0 %v942
  %2050 = vmatpush.bf16.msra.mxu0 %v934
  %2051 = vmatpush.bf16.msra.mxu0 %v926
  %2052 = vmatpush.bf16.msra.mxu0 %v918
  %2053 = vmatpush.bf16.msra.mxu0 %v910
  %2054 = vmatpush.bf16.msra.mxu0 %v902
  %2055 = vmatpush.bf16.msra.mxu0 %v894
  %2056 = vmatpush.bf16.msra.mxu0 %v886
  %2057 = vmatmul.bf16.gmra.mxu0 %v1853
  %v2058 = vpop.f32.mrf.mxu0
  %v2059 = vadd.f32 %v2046, %v2058
  %v2060 = vpop.f32.mrf.mxu0
  %2061 = vdwg.mxu0
  %s2062 = smul.u32 4, 4
  %s2063 = smul.addr %s2062, 8
  %s2064 = scalar_lea.vmem [#allocation2], %s2063
  %v2065 = vld [vmem:[%s2064] sm:$0xff]
  %v2066 = vld [vmem:[%s2064 + $0x8] sm:$0xff]
  %v2067 = vld [vmem:[%s2064 + $0x10] sm:$0xff]
  %v2068 = vld [vmem:[%s2064 + $0x18] sm:$0xff]
  %v2069 = vadd.f32 %v1877, %v2065
  %v2070 = vadd.f32 %v1903, %v2066
  %v2071 = vadd.f32 %v1929, %v2067
  %v2072 = vadd.f32 %v1955, %v2068
  %v2073 = vadd.f32 %v1981, %v271
  %v2074 = vadd.f32 %v2007, %v272
  %v2075 = vadd.f32 %v2033, %v273
  %v2076 = vadd.f32 %v2059, %v274
  %v2077 = vmul.f32 %v2069, 0.5
  %v2078 = vmul.f32 %v2070, 0.5
  %v2079 = vmul.f32 %v2071, 0.5
  %v2080 = vtanh.pop %v2077
  %v2081 = vtanh.pop %v2078
  %v2082 = vtanh.pop %v2079
  %v2083 = vmul.f32 %v2080, 0.5
  %v2084 = vmul.f32 %v2081, 0.5
  %v2085 = vmul.f32 %v2082, 0.5
  %v2086 = vadd.f32 %v2083, 0.5
  %v2087 = vadd.f32 %v2084, 0.5
  %v2088 = vadd.f32 %v2085, 0.5
  %v2089 = vtanh.pop %v2072
  %v2090 = vmul.f32 %v2087, %v1831
  %v2091 = vmul.f32 %v2086, %v2089
  %v2092 = vadd.f32 %v2090, %v2091
  %v2093 = vtanh.pop %v2092
  %v2094 = vmul.f32 %v2088, %v2093
  %v2095 = vmul.f32 %v2073, 0.5
  %v2096 = vmul.f32 %v2074, 0.5
  %v2097 = vmul.f32 %v2075, 0.5
  %v2098 = vtanh.pop %v2095
  %v2099 = vtanh.pop %v2096
  %v2100 = vtanh.pop %v2097
  %v2101 = vmul.f32 %v2098, 0.5
  %v2102 = vmul.f32 %v2099, 0.5
  %v2103 = vmul.f32 %v2100, 0.5
  %v2104 = vadd.f32 %v2101, 0.5
  %v2105 = vadd.f32 %v2102, 0.5
  %v2106 = vadd.f32 %v2103, 0.5
  %v2107 = vtanh.pop %v2076
  %v2108 = vmul.f32 %v2105, %v1849
  %v2109 = vmul.f32 %v2104, %v2107
  %v2110 = vadd.f32 %v2108, %v2109
  %v2111 = vtanh.pop %v2110
  %v2112 = vmul.f32 %v2106, %v2111
  %v2113 = vpack.c.bf16 %v2094, %v2094
  %v2114 = vpack.c.bf16 %v2112, %v2112
  %2115 = vmatpush.bf16.msra.mxu0 %v871
  %2116 = vmatpush.bf16.msra.mxu0 %v863
  %2117 = vmatpush.bf16.msra.mxu0 %v855
  %2118 = vmatpush.bf16.msra.mxu0 %v847
  %2119 = vmatpush.bf16.msra.mxu0 %v839
  %2120 = vmatpush.bf16.msra.mxu0 %v831
  %2121 = vmatpush.bf16.msra.mxu0 %v823
  %2122 = vmatpush.bf16.msra.mxu0 %v815
  %2123 = vmatmul.bf16.gmra.mxu0 %v2113
  %v2124 = vpop.f32.mrf.mxu0
  %v2125 = vadd.f32 0.0, %v2124
  %v2126 = vpop.f32.mrf.mxu0
  %2127 = vdwg.mxu0
  %2128 = vmatpush.bf16.msra.mxu0 %v935
  %2129 = vmatpush.bf16.msra.mxu0 %v927
  %2130 = vmatpush.bf16.msra.mxu0 %v919
  %2131 = vmatpush.bf16.msra.mxu0 %v911
  %2132 = vmatpush.bf16.msra.mxu0 %v903
  %2133 = vmatpush.bf16.msra.mxu0 %v895
  %2134 = vmatpush.bf16.msra.mxu0 %v887
  %2135 = vmatpush.bf16.msra.mxu0 %v879
  %2136 = vmatmul.bf16.gmra.mxu0 %v2114
  %v2137 = vpop.f32.mrf.mxu0
  %v2138 = vadd.f32 %v2125, %v2137
  %v2139 = vpop.f32.mrf.mxu0
  %2140 = vdwg.mxu0
  %2141 = vmatpush.bf16.msra.mxu0 %v872
  %2142 = vmatpush.bf16.msra.mxu0 %v864
  %2143 = vmatpush.bf16.msra.mxu0 %v856
  %2144 = vmatpush.bf16.msra.mxu0 %v848
  %2145 = vmatpush.bf16.msra.mxu0 %v840
  %2146 = vmatpush.bf16.msra.mxu0 %v832
  %2147 = vmatpush.bf16.msra.mxu0 %v824
  %2148 = vmatpush.bf16.msra.mxu0 %v816
  %2149 = vmatmul.bf16.gmra.mxu0 %v2113
  %v2150 = vpop.f32.mrf.mxu0
  %v2151 = vadd.f32 0.0, %v2150
  %v2152 = vpop.f32.mrf.mxu0
  %2153 = vdwg.mxu0
  %2154 = vmatpush.bf16.msra.mxu0 %v936
  %2155 = vmatpush.bf16.msra.mxu0 %v928
  %2156 = vmatpush.bf16.msra.mxu0 %v920
  %2157 = vmatpush.bf16.msra.mxu0 %v912
  %2158 = vmatpush.bf16.msra.mxu0 %v904
  %2159 = vmatpush.bf16.msra.mxu0 %v896
  %2160 = vmatpush.bf16.msra.mxu0 %v888
  %2161 = vmatpush.bf16.msra.mxu0 %v880
  %2162 = vmatmul.bf16.gmra.mxu0 %v2114
  %v2163 = vpop.f32.mrf.mxu0
  %v2164 = vadd.f32 %v2151, %v2163
  %v2165 = vpop.f32.mrf.mxu0
  %2166 = vdwg.mxu0
  %2167 = vmatpush.bf16.msra.mxu0 %v873
  %2168 = vmatpush.bf16.msra.mxu0 %v865
  %2169 = vmatpush.bf16.msra.mxu0 %v857
  %2170 = vmatpush.bf16.msra.mxu0 %v849
  %2171 = vmatpush.bf16.msra.mxu0 %v841
  %2172 = vmatpush.bf16.msra.mxu0 %v833
  %2173 = vmatpush.bf16.msra.mxu0 %v825
  %2174 = vmatpush.bf16.msra.mxu0 %v817
  %2175 = vmatmul.bf16.gmra.mxu0 %v2113
  %v2176 = vpop.f32.mrf.mxu0
  %v2177 = vadd.f32 0.0, %v2176
  %v2178 = vpop.f32.mrf.mxu0
  %2179 = vdwg.mxu0
  %2180 = vmatpush.bf16.msra.mxu0 %v937
  %2181 = vmatpush.bf16.msra.mxu0 %v929
  %2182 = vmatpush.bf16.msra.mxu0 %v921
  %2183 = vmatpush.bf16.msra.mxu0 %v913
  %2184 = vmatpush.bf16.msra.mxu0 %v905
  %2185 = vmatpush.bf16.msra.mxu0 %v897
  %2186 = vmatpush.bf16.msra.mxu0 %v889
  %2187 = vmatpush.bf16.msra.mxu0 %v881
  %2188 = vmatmul.bf16.gmra.mxu0 %v2114
  %v2189 = vpop.f32.mrf.mxu0
  %v2190 = vadd.f32 %v2177, %v2189
  %v2191 = vpop.f32.mrf.mxu0
  %2192 = vdwg.mxu0
  %2193 = vmatpush.bf16.msra.mxu0 %v874
  %2194 = vmatpush.bf16.msra.mxu0 %v866
  %2195 = vmatpush.bf16.msra.mxu0 %v858
  %2196 = vmatpush.bf16.msra.mxu0 %v850
  %2197 = vmatpush.bf16.msra.mxu0 %v842
  %2198 = vmatpush.bf16.msra.mxu0 %v834
  %2199 = vmatpush.bf16.msra.mxu0 %v826
  %2200 = vmatpush.bf16.msra.mxu0 %v818
  %2201 = vmatmul.bf16.gmra.mxu0 %v2113
  %v2202 = vpop.f32.mrf.mxu0
  %v2203 = vadd.f32 0.0, %v2202
  %v2204 = vpop.f32.mrf.mxu0
  %2205 = vdwg.mxu0
  %2206 = vmatpush.bf16.msra.mxu0 %v938
  %2207 = vmatpush.bf16.msra.mxu0 %v930
  %2208 = vmatpush.bf16.msra.mxu0 %v922
  %2209 = vmatpush.bf16.msra.mxu0 %v914
  %2210 = vmatpush.bf16.msra.mxu0 %v906
  %2211 = vmatpush.bf16.msra.mxu0 %v898
  %2212 = vmatpush.bf16.msra.mxu0 %v890
  %2213 = vmatpush.bf16.msra.mxu0 %v882
  %2214 = vmatmul.bf16.gmra.mxu0 %v2114
  %v2215 = vpop.f32.mrf.mxu0
  %v2216 = vadd.f32 %v2203, %v2215
  %v2217 = vpop.f32.mrf.mxu0
  %2218 = vdwg.mxu0
  %2219 = vmatpush.bf16.msra.mxu0 %v875
  %2220 = vmatpush.bf16.msra.mxu0 %v867
  %2221 = vmatpush.bf16.msra.mxu0 %v859
  %2222 = vmatpush.bf16.msra.mxu0 %v851
  %2223 = vmatpush.bf16.msra.mxu0 %v843
  %2224 = vmatpush.bf16.msra.mxu0 %v835
  %2225 = vmatpush.bf16.msra.mxu0 %v827
  %2226 = vmatpush.bf16.msra.mxu0 %v819
  %2227 = vmatmul.bf16.gmra.mxu0 %v2113
  %v2228 = vpop.f32.mrf.mxu0
  %v2229 = vadd.f32 0.0, %v2228
  %v2230 = vpop.f32.mrf.mxu0
  %2231 = vdwg.mxu0
  %2232 = vmatpush.bf16.msra.mxu0 %v939
  %2233 = vmatpush.bf16.msra.mxu0 %v931
  %2234 = vmatpush.bf16.msra.mxu0 %v923
  %2235 = vmatpush.bf16.msra.mxu0 %v915
  %2236 = vmatpush.bf16.msra.mxu0 %v907
  %2237 = vmatpush.bf16.msra.mxu0 %v899
  %2238 = vmatpush.bf16.msra.mxu0 %v891
  %2239 = vmatpush.bf16.msra.mxu0 %v883
  %2240 = vmatmul.bf16.gmra.mxu0 %v2114
  %v2241 = vpop.f32.mrf.mxu0
  %v2242 = vadd.f32 %v2229, %v2241
  %v2243 = vpop.f32.mrf.mxu0
  %2244 = vdwg.mxu0
  %2245 = vmatpush.bf16.msra.mxu0 %v876
  %2246 = vmatpush.bf16.msra.mxu0 %v868
  %2247 = vmatpush.bf16.msra.mxu0 %v860
  %2248 = vmatpush.bf16.msra.mxu0 %v852
  %2249 = vmatpush.bf16.msra.mxu0 %v844
  %2250 = vmatpush.bf16.msra.mxu0 %v836
  %2251 = vmatpush.bf16.msra.mxu0 %v828
  %2252 = vmatpush.bf16.msra.mxu0 %v820
  %2253 = vmatmul.bf16.gmra.mxu0 %v2113
  %v2254 = vpop.f32.mrf.mxu0
  %v2255 = vadd.f32 0.0, %v2254
  %v2256 = vpop.f32.mrf.mxu0
  %2257 = vdwg.mxu0
  %2258 = vmatpush.bf16.msra.mxu0 %v940
  %2259 = vmatpush.bf16.msra.mxu0 %v932
  %2260 = vmatpush.bf16.msra.mxu0 %v924
  %2261 = vmatpush.bf16.msra.mxu0 %v916
  %2262 = vmatpush.bf16.msra.mxu0 %v908
  %2263 = vmatpush.bf16.msra.mxu0 %v900
  %2264 = vmatpush.bf16.msra.mxu0 %v892
  %2265 = vmatpush.bf16.msra.mxu0 %v884
  %2266 = vmatmul.bf16.gmra.mxu0 %v2114
  %v2267 = vpop.f32.mrf.mxu0
  %v2268 = vadd.f32 %v2255, %v2267
  %v2269 = vpop.f32.mrf.mxu0
  %2270 = vdwg.mxu0
  %2271 = vmatpush.bf16.msra.mxu0 %v877
  %2272 = vmatpush.bf16.msra.mxu0 %v869
  %2273 = vmatpush.bf16.msra.mxu0 %v861
  %2274 = vmatpush.bf16.msra.mxu0 %v853
  %2275 = vmatpush.bf16.msra.mxu0 %v845
  %2276 = vmatpush.bf16.msra.mxu0 %v837
  %2277 = vmatpush.bf16.msra.mxu0 %v829
  %2278 = vmatpush.bf16.msra.mxu0 %v821
  %2279 = vmatmul.bf16.gmra.mxu0 %v2113
  %v2280 = vpop.f32.mrf.mxu0
  %v2281 = vadd.f32 0.0, %v2280
  %v2282 = vpop.f32.mrf.mxu0
  %2283 = vdwg.mxu0
  %2284 = vmatpush.bf16.msra.mxu0 %v941
  %2285 = vmatpush.bf16.msra.mxu0 %v933
  %2286 = vmatpush.bf16.msra.mxu0 %v925
  %2287 = vmatpush.bf16.msra.mxu0 %v917
  %2288 = vmatpush.bf16.msra.mxu0 %v909
  %2289 = vmatpush.bf16.msra.mxu0 %v901
  %2290 = vmatpush.bf16.msra.mxu0 %v893
  %2291 = vmatpush.bf16.msra.mxu0 %v885
  %2292 = vmatmul.bf16.gmra.mxu0 %v2114
  %v2293 = vpop.f32.mrf.mxu0
  %v2294 = vadd.f32 %v2281, %v2293
  %v2295 = vpop.f32.mrf.mxu0
  %2296 = vdwg.mxu0
  %2297 = vmatpush.bf16.msra.mxu0 %v878
  %2298 = vmatpush.bf16.msra.mxu0 %v870
  %2299 = vmatpush.bf16.msra.mxu0 %v862
  %2300 = vmatpush.bf16.msra.mxu0 %v854
  %2301 = vmatpush.bf16.msra.mxu0 %v846
  %2302 = vmatpush.bf16.msra.mxu0 %v838
  %2303 = vmatpush.bf16.msra.mxu0 %v830
  %2304 = vmatpush.bf16.msra.mxu0 %v822
  %2305 = vmatmul.bf16.gmra.mxu0 %v2113
  %v2306 = vpop.f32.mrf.mxu0
  %v2307 = vadd.f32 0.0, %v2306
  %v2308 = vpop.f32.mrf.mxu0
  %2309 = vdwg.mxu0
  %2310 = vmatpush.bf16.msra.mxu0 %v942
  %2311 = vmatpush.bf16.msra.mxu0 %v934
  %2312 = vmatpush.bf16.msra.mxu0 %v926
  %2313 = vmatpush.bf16.msra.mxu0 %v918
  %2314 = vmatpush.bf16.msra.mxu0 %v910
  %2315 = vmatpush.bf16.msra.mxu0 %v902
  %2316 = vmatpush.bf16.msra.mxu0 %v894
  %2317 = vmatpush.bf16.msra.mxu0 %v886
  %2318 = vmatmul.bf16.gmra.mxu0 %v2114
  %v2319 = vpop.f32.mrf.mxu0
  %v2320 = vadd.f32 %v2307, %v2319
  %v2321 = vpop.f32.mrf.mxu0
  %2322 = vdwg.mxu0
  %s2323 = smul.u32 5, 4
  %s2324 = smul.addr %s2323, 8
  %s2325 = scalar_lea.vmem [#allocation2], %s2324
  %v2326 = vld [vmem:[%s2325] sm:$0xff]
  %v2327 = vld [vmem:[%s2325 + $0x8] sm:$0xff]
  %v2328 = vld [vmem:[%s2325 + $0x10] sm:$0xff]
  %v2329 = vld [vmem:[%s2325 + $0x18] sm:$0xff]
  %v2330 = vadd.f32 %v2138, %v2326
  %v2331 = vadd.f32 %v2164, %v2327
  %v2332 = vadd.f32 %v2190, %v2328
  %v2333 = vadd.f32 %v2216, %v2329
  %v2334 = vadd.f32 %v2242, %v271
  %v2335 = vadd.f32 %v2268, %v272
  %v2336 = vadd.f32 %v2294, %v273
  %v2337 = vadd.f32 %v2320, %v274
  %v2338 = vmul.f32 %v2330, 0.5
  %v2339 = vmul.f32 %v2331, 0.5
  %v2340 = vmul.f32 %v2332, 0.5
  %v2341 = vtanh.pop %v2338
  %v2342 = vtanh.pop %v2339
  %v2343 = vtanh.pop %v2340
  %v2344 = vmul.f32 %v2341, 0.5
  %v2345 = vmul.f32 %v2342, 0.5
  %v2346 = vmul.f32 %v2343, 0.5
  %v2347 = vadd.f32 %v2344, 0.5
  %v2348 = vadd.f32 %v2345, 0.5
  %v2349 = vadd.f32 %v2346, 0.5
  %v2350 = vtanh.pop %v2333
  %v2351 = vmul.f32 %v2348, %v2092
  %v2352 = vmul.f32 %v2347, %v2350
  %v2353 = vadd.f32 %v2351, %v2352
  %v2354 = vtanh.pop %v2353
  %v2355 = vmul.f32 %v2349, %v2354
  %v2356 = vmul.f32 %v2334, 0.5
  %v2357 = vmul.f32 %v2335, 0.5
  %v2358 = vmul.f32 %v2336, 0.5
  %v2359 = vtanh.pop %v2356
  %v2360 = vtanh.pop %v2357
  %v2361 = vtanh.pop %v2358
  %v2362 = vmul.f32 %v2359, 0.5
  %v2363 = vmul.f32 %v2360, 0.5
  %v2364 = vmul.f32 %v2361, 0.5
  %v2365 = vadd.f32 %v2362, 0.5
  %v2366 = vadd.f32 %v2363, 0.5
  %v2367 = vadd.f32 %v2364, 0.5
  %v2368 = vtanh.pop %v2337
  %v2369 = vmul.f32 %v2366, %v2110
  %v2370 = vmul.f32 %v2365, %v2368
  %v2371 = vadd.f32 %v2369, %v2370
  %v2372 = vtanh.pop %v2371
  %v2373 = vmul.f32 %v2367, %v2372
  %v2374 = vpack.c.bf16 %v2355, %v2355
  %v2375 = vpack.c.bf16 %v2373, %v2373
  %2376 = vmatpush.bf16.msra.mxu0 %v871
  %2377 = vmatpush.bf16.msra.mxu0 %v863
  %2378 = vmatpush.bf16.msra.mxu0 %v855
  %2379 = vmatpush.bf16.msra.mxu0 %v847
  %2380 = vmatpush.bf16.msra.mxu0 %v839
  %2381 = vmatpush.bf16.msra.mxu0 %v831
  %2382 = vmatpush.bf16.msra.mxu0 %v823
  %2383 = vmatpush.bf16.msra.mxu0 %v815
  %2384 = vmatmul.bf16.gmra.mxu0 %v2374
  %v2385 = vpop.f32.mrf.mxu0
  %v2386 = vadd.f32 0.0, %v2385
  %v2387 = vpop.f32.mrf.mxu0
  %2388 = vdwg.mxu0
  %2389 = vmatpush.bf16.msra.mxu0 %v935
  %2390 = vmatpush.bf16.msra.mxu0 %v927
  %2391 = vmatpush.bf16.msra.mxu0 %v919
  %2392 = vmatpush.bf16.msra.mxu0 %v911
  %2393 = vmatpush.bf16.msra.mxu0 %v903
  %2394 = vmatpush.bf16.msra.mxu0 %v895
  %2395 = vmatpush.bf16.msra.mxu0 %v887
  %2396 = vmatpush.bf16.msra.mxu0 %v879
  %2397 = vmatmul.bf16.gmra.mxu0 %v2375
  %v2398 = vpop.f32.mrf.mxu0
  %v2399 = vadd.f32 %v2386, %v2398
  %v2400 = vpop.f32.mrf.mxu0
  %2401 = vdwg.mxu0
  %2402 = vmatpush.bf16.msra.mxu0 %v872
  %2403 = vmatpush.bf16.msra.mxu0 %v864
  %2404 = vmatpush.bf16.msra.mxu0 %v856
  %2405 = vmatpush.bf16.msra.mxu0 %v848
  %2406 = vmatpush.bf16.msra.mxu0 %v840
  %2407 = vmatpush.bf16.msra.mxu0 %v832
  %2408 = vmatpush.bf16.msra.mxu0 %v824
  %2409 = vmatpush.bf16.msra.mxu0 %v816
  %2410 = vmatmul.bf16.gmra.mxu0 %v2374
  %v2411 = vpop.f32.mrf.mxu0
  %v2412 = vadd.f32 0.0, %v2411
  %v2413 = vpop.f32.mrf.mxu0
  %2414 = vdwg.mxu0
  %2415 = vmatpush.bf16.msra.mxu0 %v936
  %2416 = vmatpush.bf16.msra.mxu0 %v928
  %2417 = vmatpush.bf16.msra.mxu0 %v920
  %2418 = vmatpush.bf16.msra.mxu0 %v912
  %2419 = vmatpush.bf16.msra.mxu0 %v904
  %2420 = vmatpush.bf16.msra.mxu0 %v896
  %2421 = vmatpush.bf16.msra.mxu0 %v888
  %2422 = vmatpush.bf16.msra.mxu0 %v880
  %2423 = vmatmul.bf16.gmra.mxu0 %v2375
  %v2424 = vpop.f32.mrf.mxu0
  %v2425 = vadd.f32 %v2412, %v2424
  %v2426 = vpop.f32.mrf.mxu0
  %2427 = vdwg.mxu0
  %2428 = vmatpush.bf16.msra.mxu0 %v873
  %2429 = vmatpush.bf16.msra.mxu0 %v865
  %2430 = vmatpush.bf16.msra.mxu0 %v857
  %2431 = vmatpush.bf16.msra.mxu0 %v849
  %2432 = vmatpush.bf16.msra.mxu0 %v841
  %2433 = vmatpush.bf16.msra.mxu0 %v833
  %2434 = vmatpush.bf16.msra.mxu0 %v825
  %2435 = vmatpush.bf16.msra.mxu0 %v817
  %2436 = vmatmul.bf16.gmra.mxu0 %v2374
  %v2437 = vpop.f32.mrf.mxu0
  %v2438 = vadd.f32 0.0, %v2437
  %v2439 = vpop.f32.mrf.mxu0
  %2440 = vdwg.mxu0
  %2441 = vmatpush.bf16.msra.mxu0 %v937
  %2442 = vmatpush.bf16.msra.mxu0 %v929
  %2443 = vmatpush.bf16.msra.mxu0 %v921
  %2444 = vmatpush.bf16.msra.mxu0 %v913
  %2445 = vmatpush.bf16.msra.mxu0 %v905
  %2446 = vmatpush.bf16.msra.mxu0 %v897
  %2447 = vmatpush.bf16.msra.mxu0 %v889
  %2448 = vmatpush.bf16.msra.mxu0 %v881
  %2449 = vmatmul.bf16.gmra.mxu0 %v2375
  %v2450 = vpop.f32.mrf.mxu0
  %v2451 = vadd.f32 %v2438, %v2450
  %v2452 = vpop.f32.mrf.mxu0
  %2453 = vdwg.mxu0
  %2454 = vmatpush.bf16.msra.mxu0 %v874
  %2455 = vmatpush.bf16.msra.mxu0 %v866
  %2456 = vmatpush.bf16.msra.mxu0 %v858
  %2457 = vmatpush.bf16.msra.mxu0 %v850
  %2458 = vmatpush.bf16.msra.mxu0 %v842
  %2459 = vmatpush.bf16.msra.mxu0 %v834
  %2460 = vmatpush.bf16.msra.mxu0 %v826
  %2461 = vmatpush.bf16.msra.mxu0 %v818
  %2462 = vmatmul.bf16.gmra.mxu0 %v2374
  %v2463 = vpop.f32.mrf.mxu0
  %v2464 = vadd.f32 0.0, %v2463
  %v2465 = vpop.f32.mrf.mxu0
  %2466 = vdwg.mxu0
  %2467 = vmatpush.bf16.msra.mxu0 %v938
  %2468 = vmatpush.bf16.msra.mxu0 %v930
  %2469 = vmatpush.bf16.msra.mxu0 %v922
  %2470 = vmatpush.bf16.msra.mxu0 %v914
  %2471 = vmatpush.bf16.msra.mxu0 %v906
  %2472 = vmatpush.bf16.msra.mxu0 %v898
  %2473 = vmatpush.bf16.msra.mxu0 %v890
  %2474 = vmatpush.bf16.msra.mxu0 %v882
  %2475 = vmatmul.bf16.gmra.mxu0 %v2375
  %v2476 = vpop.f32.mrf.mxu0
  %v2477 = vadd.f32 %v2464, %v2476
  %v2478 = vpop.f32.mrf.mxu0
  %2479 = vdwg.mxu0
  %2480 = vmatpush.bf16.msra.mxu0 %v875
  %2481 = vmatpush.bf16.msra.mxu0 %v867
  %2482 = vmatpush.bf16.msra.mxu0 %v859
  %2483 = vmatpush.bf16.msra.mxu0 %v851
  %2484 = vmatpush.bf16.msra.mxu0 %v843
  %2485 = vmatpush.bf16.msra.mxu0 %v835
  %2486 = vmatpush.bf16.msra.mxu0 %v827
  %2487 = vmatpush.bf16.msra.mxu0 %v819
  %2488 = vmatmul.bf16.gmra.mxu0 %v2374
  %v2489 = vpop.f32.mrf.mxu0
  %v2490 = vadd.f32 0.0, %v2489
  %v2491 = vpop.f32.mrf.mxu0
  %2492 = vdwg.mxu0
  %2493 = vmatpush.bf16.msra.mxu0 %v939
  %2494 = vmatpush.bf16.msra.mxu0 %v931
  %2495 = vmatpush.bf16.msra.mxu0 %v923
  %2496 = vmatpush.bf16.msra.mxu0 %v915
  %2497 = vmatpush.bf16.msra.mxu0 %v907
  %2498 = vmatpush.bf16.msra.mxu0 %v899
  %2499 = vmatpush.bf16.msra.mxu0 %v891
  %2500 = vmatpush.bf16.msra.mxu0 %v883
  %2501 = vmatmul.bf16.gmra.mxu0 %v2375
  %v2502 = vpop.f32.mrf.mxu0
  %v2503 = vadd.f32 %v2490, %v2502
  %v2504 = vpop.f32.mrf.mxu0
  %2505 = vdwg.mxu0
  %2506 = vmatpush.bf16.msra.mxu0 %v876
  %2507 = vmatpush.bf16.msra.mxu0 %v868
  %2508 = vmatpush.bf16.msra.mxu0 %v860
  %2509 = vmatpush.bf16.msra.mxu0 %v852
  %2510 = vmatpush.bf16.msra.mxu0 %v844
  %2511 = vmatpush.bf16.msra.mxu0 %v836
  %2512 = vmatpush.bf16.msra.mxu0 %v828
  %2513 = vmatpush.bf16.msra.mxu0 %v820
  %2514 = vmatmul.bf16.gmra.mxu0 %v2374
  %v2515 = vpop.f32.mrf.mxu0
  %v2516 = vadd.f32 0.0, %v2515
  %v2517 = vpop.f32.mrf.mxu0
  %2518 = vdwg.mxu0
  %2519 = vmatpush.bf16.msra.mxu0 %v940
  %2520 = vmatpush.bf16.msra.mxu0 %v932
  %2521 = vmatpush.bf16.msra.mxu0 %v924
  %2522 = vmatpush.bf16.msra.mxu0 %v916
  %2523 = vmatpush.bf16.msra.mxu0 %v908
  %2524 = vmatpush.bf16.msra.mxu0 %v900
  %2525 = vmatpush.bf16.msra.mxu0 %v892
  %2526 = vmatpush.bf16.msra.mxu0 %v884
  %2527 = vmatmul.bf16.gmra.mxu0 %v2375
  %v2528 = vpop.f32.mrf.mxu0
  %v2529 = vadd.f32 %v2516, %v2528
  %v2530 = vpop.f32.mrf.mxu0
  %2531 = vdwg.mxu0
  %2532 = vmatpush.bf16.msra.mxu0 %v877
  %2533 = vmatpush.bf16.msra.mxu0 %v869
  %2534 = vmatpush.bf16.msra.mxu0 %v861
  %2535 = vmatpush.bf16.msra.mxu0 %v853
  %2536 = vmatpush.bf16.msra.mxu0 %v845
  %2537 = vmatpush.bf16.msra.mxu0 %v837
  %2538 = vmatpush.bf16.msra.mxu0 %v829
  %2539 = vmatpush.bf16.msra.mxu0 %v821
  %2540 = vmatmul.bf16.gmra.mxu0 %v2374
  %v2541 = vpop.f32.mrf.mxu0
  %v2542 = vadd.f32 0.0, %v2541
  %v2543 = vpop.f32.mrf.mxu0
  %2544 = vdwg.mxu0
  %2545 = vmatpush.bf16.msra.mxu0 %v941
  %2546 = vmatpush.bf16.msra.mxu0 %v933
  %2547 = vmatpush.bf16.msra.mxu0 %v925
  %2548 = vmatpush.bf16.msra.mxu0 %v917
  %2549 = vmatpush.bf16.msra.mxu0 %v909
  %2550 = vmatpush.bf16.msra.mxu0 %v901
  %2551 = vmatpush.bf16.msra.mxu0 %v893
  %2552 = vmatpush.bf16.msra.mxu0 %v885
  %2553 = vmatmul.bf16.gmra.mxu0 %v2375
  %v2554 = vpop.f32.mrf.mxu0
  %v2555 = vadd.f32 %v2542, %v2554
  %v2556 = vpop.f32.mrf.mxu0
  %2557 = vdwg.mxu0
  %2558 = vmatpush.bf16.msra.mxu0 %v878
  %2559 = vmatpush.bf16.msra.mxu0 %v870
  %2560 = vmatpush.bf16.msra.mxu0 %v862
  %2561 = vmatpush.bf16.msra.mxu0 %v854
  %2562 = vmatpush.bf16.msra.mxu0 %v846
  %2563 = vmatpush.bf16.msra.mxu0 %v838
  %2564 = vmatpush.bf16.msra.mxu0 %v830
  %2565 = vmatpush.bf16.msra.mxu0 %v822
  %2566 = vmatmul.bf16.gmra.mxu0 %v2374
  %v2567 = vpop.f32.mrf.mxu0
  %v2568 = vadd.f32 0.0, %v2567
  %v2569 = vpop.f32.mrf.mxu0
  %2570 = vdwg.mxu0
  %2571 = vmatpush.bf16.msra.mxu0 %v942
  %2572 = vmatpush.bf16.msra.mxu0 %v934
  %2573 = vmatpush.bf16.msra.mxu0 %v926
  %2574 = vmatpush.bf16.msra.mxu0 %v918
  %2575 = vmatpush.bf16.msra.mxu0 %v910
  %2576 = vmatpush.bf16.msra.mxu0 %v902
  %2577 = vmatpush.bf16.msra.mxu0 %v894
  %2578 = vmatpush.bf16.msra.mxu0 %v886
  %2579 = vmatmul.bf16.gmra.mxu0 %v2375
  %v2580 = vpop.f32.mrf.mxu0
  %v2581 = vadd.f32 %v2568, %v2580
  %v2582 = vpop.f32.mrf.mxu0
  %2583 = vdwg.mxu0
  %s2584 = smul.u32 6, 4
  %s2585 = smul.addr %s2584, 8
  %s2586 = scalar_lea.vmem [#allocation2], %s2585
  %v2587 = vld [vmem:[%s2586] sm:$0xff]
  %v2588 = vld [vmem:[%s2586 + $0x8] sm:$0xff]
  %v2589 = vld [vmem:[%s2586 + $0x10] sm:$0xff]
  %v2590 = vld [vmem:[%s2586 + $0x18] sm:$0xff]
  %v2591 = vadd.f32 %v2399, %v2587
  %v2592 = vadd.f32 %v2425, %v2588
  %v2593 = vadd.f32 %v2451, %v2589
  %v2594 = vadd.f32 %v2477, %v2590
  %v2595 = vadd.f32 %v2503, %v271
  %v2596 = vadd.f32 %v2529, %v272
  %v2597 = vadd.f32 %v2555, %v273
  %v2598 = vadd.f32 %v2581, %v274
  %v2599 = vmul.f32 %v2591, 0.5
  %v2600 = vmul.f32 %v2592, 0.5
  %v2601 = vmul.f32 %v2593, 0.5
  %v2602 = vtanh.pop %v2599
  %v2603 = vtanh.pop %v2600
  %v2604 = vtanh.pop %v2601
  %v2605 = vmul.f32 %v2602, 0.5
  %v2606 = vmul.f32 %v2603, 0.5
  %v2607 = vmul.f32 %v2604, 0.5
  %v2608 = vadd.f32 %v2605, 0.5
  %v2609 = vadd.f32 %v2606, 0.5
  %v2610 = vadd.f32 %v2607, 0.5
  %v2611 = vtanh.pop %v2594
  %v2612 = vmul.f32 %v2609, %v2353
  %v2613 = vmul.f32 %v2608, %v2611
  %v2614 = vadd.f32 %v2612, %v2613
  %v2615 = vtanh.pop %v2614
  %v2616 = vmul.f32 %v2610, %v2615
  %v2617 = vmul.f32 %v2595, 0.5
  %v2618 = vmul.f32 %v2596, 0.5
  %v2619 = vmul.f32 %v2597, 0.5
  %v2620 = vtanh.pop %v2617
  %v2621 = vtanh.pop %v2618
  %v2622 = vtanh.pop %v2619
  %v2623 = vmul.f32 %v2620, 0.5
  %v2624 = vmul.f32 %v2621, 0.5
  %v2625 = vmul.f32 %v2622, 0.5
  %v2626 = vadd.f32 %v2623, 0.5
  %v2627 = vadd.f32 %v2624, 0.5
  %v2628 = vadd.f32 %v2625, 0.5
  %v2629 = vtanh.pop %v2598
  %v2630 = vmul.f32 %v2627, %v2371
  %v2631 = vmul.f32 %v2626, %v2629
  %v2632 = vadd.f32 %v2630, %v2631
  %v2633 = vtanh.pop %v2632
  %v2634 = vmul.f32 %v2628, %v2633
  %v2635 = vpack.c.bf16 %v2616, %v2616
  %v2636 = vpack.c.bf16 %v2634, %v2634
  %2637 = vmatpush.bf16.msra.mxu0 %v871
  %2638 = vmatpush.bf16.msra.mxu0 %v863
  %2639 = vmatpush.bf16.msra.mxu0 %v855
  %2640 = vmatpush.bf16.msra.mxu0 %v847
  %2641 = vmatpush.bf16.msra.mxu0 %v839
  %2642 = vmatpush.bf16.msra.mxu0 %v831
  %2643 = vmatpush.bf16.msra.mxu0 %v823
  %2644 = vmatpush.bf16.msra.mxu0 %v815
  %2645 = vmatmul.bf16.gmra.mxu0 %v2635
  %v2646 = vpop.f32.mrf.mxu0
  %v2647 = vadd.f32 0.0, %v2646
  %v2648 = vpop.f32.mrf.mxu0
  %2649 = vdwg.mxu0
  %2650 = vmatpush.bf16.msra.mxu0 %v935
  %2651 = vmatpush.bf16.msra.mxu0 %v927
  %2652 = vmatpush.bf16.msra.mxu0 %v919
  %2653 = vmatpush.bf16.msra.mxu0 %v911
  %2654 = vmatpush.bf16.msra.mxu0 %v903
  %2655 = vmatpush.bf16.msra.mxu0 %v895
  %2656 = vmatpush.bf16.msra.mxu0 %v887
  %2657 = vmatpush.bf16.msra.mxu0 %v879
  %2658 = vmatmul.bf16.gmra.mxu0 %v2636
  %v2659 = vpop.f32.mrf.mxu0
  %v2660 = vadd.f32 %v2647, %v2659
  %v2661 = vpop.f32.mrf.mxu0
  %2662 = vdwg.mxu0
  %2663 = vmatpush.bf16.msra.mxu0 %v872
  %2664 = vmatpush.bf16.msra.mxu0 %v864
  %2665 = vmatpush.bf16.msra.mxu0 %v856
  %2666 = vmatpush.bf16.msra.mxu0 %v848
  %2667 = vmatpush.bf16.msra.mxu0 %v840
  %2668 = vmatpush.bf16.msra.mxu0 %v832
  %2669 = vmatpush.bf16.msra.mxu0 %v824
  %2670 = vmatpush.bf16.msra.mxu0 %v816
  %2671 = vmatmul.bf16.gmra.mxu0 %v2635
  %v2672 = vpop.f32.mrf.mxu0
  %v2673 = vadd.f32 0.0, %v2672
  %v2674 = vpop.f32.mrf.mxu0
  %2675 = vdwg.mxu0
  %2676 = vmatpush.bf16.msra.mxu0 %v936
  %2677 = vmatpush.bf16.msra.mxu0 %v928
  %2678 = vmatpush.bf16.msra.mxu0 %v920
  %2679 = vmatpush.bf16.msra.mxu0 %v912
  %2680 = vmatpush.bf16.msra.mxu0 %v904
  %2681 = vmatpush.bf16.msra.mxu0 %v896
  %2682 = vmatpush.bf16.msra.mxu0 %v888
  %2683 = vmatpush.bf16.msra.mxu0 %v880
  %2684 = vmatmul.bf16.gmra.mxu0 %v2636
  %v2685 = vpop.f32.mrf.mxu0
  %v2686 = vadd.f32 %v2673, %v2685
  %v2687 = vpop.f32.mrf.mxu0
  %2688 = vdwg.mxu0
  %2689 = vmatpush.bf16.msra.mxu0 %v873
  %2690 = vmatpush.bf16.msra.mxu0 %v865
  %2691 = vmatpush.bf16.msra.mxu0 %v857
  %2692 = vmatpush.bf16.msra.mxu0 %v849
  %2693 = vmatpush.bf16.msra.mxu0 %v841
  %2694 = vmatpush.bf16.msra.mxu0 %v833
  %2695 = vmatpush.bf16.msra.mxu0 %v825
  %2696 = vmatpush.bf16.msra.mxu0 %v817
  %2697 = vmatmul.bf16.gmra.mxu0 %v2635
  %v2698 = vpop.f32.mrf.mxu0
  %v2699 = vadd.f32 0.0, %v2698
  %v2700 = vpop.f32.mrf.mxu0
  %2701 = vdwg.mxu0
  %2702 = vmatpush.bf16.msra.mxu0 %v937
  %2703 = vmatpush.bf16.msra.mxu0 %v929
  %2704 = vmatpush.bf16.msra.mxu0 %v921
  %2705 = vmatpush.bf16.msra.mxu0 %v913
  %2706 = vmatpush.bf16.msra.mxu0 %v905
  %2707 = vmatpush.bf16.msra.mxu0 %v897
  %2708 = vmatpush.bf16.msra.mxu0 %v889
  %2709 = vmatpush.bf16.msra.mxu0 %v881
  %2710 = vmatmul.bf16.gmra.mxu0 %v2636
  %v2711 = vpop.f32.mrf.mxu0
  %v2712 = vadd.f32 %v2699, %v2711
  %v2713 = vpop.f32.mrf.mxu0
  %2714 = vdwg.mxu0
  %2715 = vmatpush.bf16.msra.mxu0 %v874
  %2716 = vmatpush.bf16.msra.mxu0 %v866
  %2717 = vmatpush.bf16.msra.mxu0 %v858
  %2718 = vmatpush.bf16.msra.mxu0 %v850
  %2719 = vmatpush.bf16.msra.mxu0 %v842
  %2720 = vmatpush.bf16.msra.mxu0 %v834
  %2721 = vmatpush.bf16.msra.mxu0 %v826
  %2722 = vmatpush.bf16.msra.mxu0 %v818
  %2723 = vmatmul.bf16.gmra.mxu0 %v2635
  %v2724 = vpop.f32.mrf.mxu0
  %v2725 = vadd.f32 0.0, %v2724
  %v2726 = vpop.f32.mrf.mxu0
  %2727 = vdwg.mxu0
  %2728 = vmatpush.bf16.msra.mxu0 %v938
  %2729 = vmatpush.bf16.msra.mxu0 %v930
  %2730 = vmatpush.bf16.msra.mxu0 %v922
  %2731 = vmatpush.bf16.msra.mxu0 %v914
  %2732 = vmatpush.bf16.msra.mxu0 %v906
  %2733 = vmatpush.bf16.msra.mxu0 %v898
  %2734 = vmatpush.bf16.msra.mxu0 %v890
  %2735 = vmatpush.bf16.msra.mxu0 %v882
  %2736 = vmatmul.bf16.gmra.mxu0 %v2636
  %v2737 = vpop.f32.mrf.mxu0
  %v2738 = vadd.f32 %v2725, %v2737
  %v2739 = vpop.f32.mrf.mxu0
  %2740 = vdwg.mxu0
  %2741 = vmatpush.bf16.msra.mxu0 %v875
  %2742 = vmatpush.bf16.msra.mxu0 %v867
  %2743 = vmatpush.bf16.msra.mxu0 %v859
  %2744 = vmatpush.bf16.msra.mxu0 %v851
  %2745 = vmatpush.bf16.msra.mxu0 %v843
  %2746 = vmatpush.bf16.msra.mxu0 %v835
  %2747 = vmatpush.bf16.msra.mxu0 %v827
  %2748 = vmatpush.bf16.msra.mxu0 %v819
  %2749 = vmatmul.bf16.gmra.mxu0 %v2635
  %v2750 = vpop.f32.mrf.mxu0
  %v2751 = vadd.f32 0.0, %v2750
  %v2752 = vpop.f32.mrf.mxu0
  %2753 = vdwg.mxu0
  %2754 = vmatpush.bf16.msra.mxu0 %v939
  %2755 = vmatpush.bf16.msra.mxu0 %v931
  %2756 = vmatpush.bf16.msra.mxu0 %v923
  %2757 = vmatpush.bf16.msra.mxu0 %v915
  %2758 = vmatpush.bf16.msra.mxu0 %v907
  %2759 = vmatpush.bf16.msra.mxu0 %v899
  %2760 = vmatpush.bf16.msra.mxu0 %v891
  %2761 = vmatpush.bf16.msra.mxu0 %v883
  %2762 = vmatmul.bf16.gmra.mxu0 %v2636
  %v2763 = vpop.f32.mrf.mxu0
  %v2764 = vadd.f32 %v2751, %v2763
  %v2765 = vpop.f32.mrf.mxu0
  %2766 = vdwg.mxu0
  %2767 = vmatpush.bf16.msra.mxu0 %v876
  %2768 = vmatpush.bf16.msra.mxu0 %v868
  %2769 = vmatpush.bf16.msra.mxu0 %v860
  %2770 = vmatpush.bf16.msra.mxu0 %v852
  %2771 = vmatpush.bf16.msra.mxu0 %v844
  %2772 = vmatpush.bf16.msra.mxu0 %v836
  %2773 = vmatpush.bf16.msra.mxu0 %v828
  %2774 = vmatpush.bf16.msra.mxu0 %v820
  %2775 = vmatmul.bf16.gmra.mxu0 %v2635
  %v2776 = vpop.f32.mrf.mxu0
  %v2777 = vadd.f32 0.0, %v2776
  %v2778 = vpop.f32.mrf.mxu0
  %2779 = vdwg.mxu0
  %2780 = vmatpush.bf16.msra.mxu0 %v940
  %2781 = vmatpush.bf16.msra.mxu0 %v932
  %2782 = vmatpush.bf16.msra.mxu0 %v924
  %2783 = vmatpush.bf16.msra.mxu0 %v916
  %2784 = vmatpush.bf16.msra.mxu0 %v908
  %2785 = vmatpush.bf16.msra.mxu0 %v900
  %2786 = vmatpush.bf16.msra.mxu0 %v892
  %2787 = vmatpush.bf16.msra.mxu0 %v884
  %2788 = vmatmul.bf16.gmra.mxu0 %v2636
  %v2789 = vpop.f32.mrf.mxu0
  %v2790 = vadd.f32 %v2777, %v2789
  %v2791 = vpop.f32.mrf.mxu0
  %2792 = vdwg.mxu0
  %2793 = vmatpush.bf16.msra.mxu0 %v877
  %2794 = vmatpush.bf16.msra.mxu0 %v869
  %2795 = vmatpush.bf16.msra.mxu0 %v861
  %2796 = vmatpush.bf16.msra.mxu0 %v853
  %2797 = vmatpush.bf16.msra.mxu0 %v845
  %2798 = vmatpush.bf16.msra.mxu0 %v837
  %2799 = vmatpush.bf16.msra.mxu0 %v829
  %2800 = vmatpush.bf16.msra.mxu0 %v821
  %2801 = vmatmul.bf16.gmra.mxu0 %v2635
  %v2802 = vpop.f32.mrf.mxu0
  %v2803 = vadd.f32 0.0, %v2802
  %v2804 = vpop.f32.mrf.mxu0
  %2805 = vdwg.mxu0
  %2806 = vmatpush.bf16.msra.mxu0 %v941
  %2807 = vmatpush.bf16.msra.mxu0 %v933
  %2808 = vmatpush.bf16.msra.mxu0 %v925
  %2809 = vmatpush.bf16.msra.mxu0 %v917
  %2810 = vmatpush.bf16.msra.mxu0 %v909
  %2811 = vmatpush.bf16.msra.mxu0 %v901
  %2812 = vmatpush.bf16.msra.mxu0 %v893
  %2813 = vmatpush.bf16.msra.mxu0 %v885
  %2814 = vmatmul.bf16.gmra.mxu0 %v2636
  %v2815 = vpop.f32.mrf.mxu0
  %v2816 = vadd.f32 %v2803, %v2815
  %v2817 = vpop.f32.mrf.mxu0
  %2818 = vdwg.mxu0
  %2819 = vmatpush.bf16.msra.mxu0 %v878
  %2820 = vmatpush.bf16.msra.mxu0 %v870
  %2821 = vmatpush.bf16.msra.mxu0 %v862
  %2822 = vmatpush.bf16.msra.mxu0 %v854
  %2823 = vmatpush.bf16.msra.mxu0 %v846
  %2824 = vmatpush.bf16.msra.mxu0 %v838
  %2825 = vmatpush.bf16.msra.mxu0 %v830
  %2826 = vmatpush.bf16.msra.mxu0 %v822
  %2827 = vmatmul.bf16.gmra.mxu0 %v2635
  %v2828 = vpop.f32.mrf.mxu0
  %v2829 = vadd.f32 0.0, %v2828
  %v2830 = vpop.f32.mrf.mxu0
  %2831 = vdwg.mxu0
  %2832 = vmatpush.bf16.msra.mxu0 %v942
  %2833 = vmatpush.bf16.msra.mxu0 %v934
  %2834 = vmatpush.bf16.msra.mxu0 %v926
  %2835 = vmatpush.bf16.msra.mxu0 %v918
  %2836 = vmatpush.bf16.msra.mxu0 %v910
  %2837 = vmatpush.bf16.msra.mxu0 %v902
  %2838 = vmatpush.bf16.msra.mxu0 %v894
  %2839 = vmatpush.bf16.msra.mxu0 %v886
  %2840 = vmatmul.bf16.gmra.mxu0 %v2636
  %v2841 = vpop.f32.mrf.mxu0
  %v2842 = vadd.f32 %v2829, %v2841
  %v2843 = vpop.f32.mrf.mxu0
  %2844 = vdwg.mxu0
  %s2845 = smul.u32 7, 4
  %s2846 = smul.addr %s2845, 8
  %s2847 = scalar_lea.vmem [#allocation2], %s2846
  %v2848 = vld [vmem:[%s2847] sm:$0xff]
  %v2849 = vld [vmem:[%s2847 + $0x8] sm:$0xff]
  %v2850 = vld [vmem:[%s2847 + $0x10] sm:$0xff]
  %v2851 = vld [vmem:[%s2847 + $0x18] sm:$0xff]
  %v2852 = vadd.f32 %v2660, %v2848
  %v2853 = vadd.f32 %v2686, %v2849
  %v2854 = vadd.f32 %v2712, %v2850
  %v2855 = vadd.f32 %v2738, %v2851
  %v2856 = vadd.f32 %v2764, %v271
  %v2857 = vadd.f32 %v2790, %v272
  %v2858 = vadd.f32 %v2816, %v273
  %v2859 = vadd.f32 %v2842, %v274
  %v2860 = vmul.f32 %v2852, 0.5
  %v2861 = vmul.f32 %v2853, 0.5
  %v2862 = vmul.f32 %v2854, 0.5
  %v2863 = vtanh.pop %v2860
  %v2864 = vtanh.pop %v2861
  %v2865 = vtanh.pop %v2862
  %v2866 = vmul.f32 %v2863, 0.5
  %v2867 = vmul.f32 %v2864, 0.5
  %v2868 = vmul.f32 %v2865, 0.5
  %v2869 = vadd.f32 %v2866, 0.5
  %v2870 = vadd.f32 %v2867, 0.5
  %v2871 = vadd.f32 %v2868, 0.5
  %v2872 = vtanh.pop %v2855
  %v2873 = vmul.f32 %v2870, %v2614
  %v2874 = vmul.f32 %v2869, %v2872
  %v2875 = vadd.f32 %v2873, %v2874
  %v2876 = vtanh.pop %v2875
  %v2877 = vmul.f32 %v2871, %v2876
  %v2878 = vmul.f32 %v2856, 0.5
  %v2879 = vmul.f32 %v2857, 0.5
  %v2880 = vmul.f32 %v2858, 0.5
  %v2881 = vtanh.pop %v2878
  %v2882 = vtanh.pop %v2879
  %v2883 = vtanh.pop %v2880
  %v2884 = vmul.f32 %v2881, 0.5
  %v2885 = vmul.f32 %v2882, 0.5
  %v2886 = vmul.f32 %v2883, 0.5
  %v2887 = vadd.f32 %v2884, 0.5
  %v2888 = vadd.f32 %v2885, 0.5
  %v2889 = vadd.f32 %v2886, 0.5
  %v2890 = vtanh.pop %v2859
  %v2891 = vmul.f32 %v2888, %v2632
  %v2892 = vmul.f32 %v2887, %v2890
  %v2893 = vadd.f32 %v2891, %v2892
  %v2894 = vtanh.pop %v2893
  %v2895 = vmul.f32 %v2889, %v2894
  %v2896 = vpack.c.bf16 %v2877, %v2877
  %v2897 = vpack.c.bf16 %v2895, %v2895
  %2898 = vmatpush.bf16.msra.mxu0 %v875
  %2899 = vmatpush.bf16.msra.mxu0 %v867
  %2900 = vmatpush.bf16.msra.mxu0 %v859
  %2901 = vmatpush.bf16.msra.mxu0 %v851
  %2902 = vmatpush.bf16.msra.mxu0 %v843
  %2903 = vmatpush.bf16.msra.mxu0 %v835
  %2904 = vmatpush.bf16.msra.mxu0 %v827
  %2905 = vmatpush.bf16.msra.mxu0 %v819
  %2906 = vmatmul.bf16.gmra.mxu0 %v2896
  %v2907 = vpop.f32.mrf.mxu0
  %v2908 = vadd.f32 0.0, %v2907
  %v2909 = vpop.f32.mrf.mxu0
  %2910 = vdwg.mxu0
  %2911 = vmatpush.bf16.msra.mxu0 %v939
  %2912 = vmatpush.bf16.msra.mxu0 %v931
  %2913 = vmatpush.bf16.msra.mxu0 %v923
  %2914 = vmatpush.bf16.msra.mxu0 %v915
  %2915 = vmatpush.bf16.msra.mxu0 %v907
  %2916 = vmatpush.bf16.msra.mxu0 %v899
  %2917 = vmatpush.bf16.msra.mxu0 %v891
  %2918 = vmatpush.bf16.msra.mxu0 %v883
  %2919 = vmatmul.bf16.gmra.mxu0 %v2897
  %v2920 = vpop.f32.mrf.mxu0
  %v2921 = vadd.f32 %v2908, %v2920
  %v2922 = vpop.f32.mrf.mxu0
  %2923 = vdwg.mxu0
  %2924 = vmatpush.bf16.msra.mxu0 %v876
  %2925 = vmatpush.bf16.msra.mxu0 %v868
  %2926 = vmatpush.bf16.msra.mxu0 %v860
  %2927 = vmatpush.bf16.msra.mxu0 %v852
  %2928 = vmatpush.bf16.msra.mxu0 %v844
  %2929 = vmatpush.bf16.msra.mxu0 %v836
  %2930 = vmatpush.bf16.msra.mxu0 %v828
  %2931 = vmatpush.bf16.msra.mxu0 %v820
  %2932 = vmatmul.bf16.gmra.mxu0 %v2896
  %v2933 = vpop.f32.mrf.mxu0
  %v2934 = vadd.f32 0.0, %v2933
  %v2935 = vpop.f32.mrf.mxu0
  %2936 = vdwg.mxu0
  %2937 = vmatpush.bf16.msra.mxu0 %v940
  %2938 = vmatpush.bf16.msra.mxu0 %v932
  %2939 = vmatpush.bf16.msra.mxu0 %v924
  %2940 = vmatpush.bf16.msra.mxu0 %v916
  %2941 = vmatpush.bf16.msra.mxu0 %v908
  %2942 = vmatpush.bf16.msra.mxu0 %v900
  %2943 = vmatpush.bf16.msra.mxu0 %v892
  %2944 = vmatpush.bf16.msra.mxu0 %v884
  %2945 = vmatmul.bf16.gmra.mxu0 %v2897
  %v2946 = vpop.f32.mrf.mxu0
  %v2947 = vadd.f32 %v2934, %v2946
  %v2948 = vpop.f32.mrf.mxu0
  %2949 = vdwg.mxu0
  %2950 = vmatpush.bf16.msra.mxu0 %v877
  %2951 = vmatpush.bf16.msra.mxu0 %v869
  %2952 = vmatpush.bf16.msra.mxu0 %v861
  %2953 = vmatpush.bf16.msra.mxu0 %v853
  %2954 = vmatpush.bf16.msra.mxu0 %v845
  %2955 = vmatpush.bf16.msra.mxu0 %v837
  %2956 = vmatpush.bf16.msra.mxu0 %v829
  %2957 = vmatpush.bf16.msra.mxu0 %v821
  %2958 = vmatmul.bf16.gmra.mxu0 %v2896
  %v2959 = vpop.f32.mrf.mxu0
  %v2960 = vadd.f32 0.0, %v2959
  %v2961 = vpop.f32.mrf.mxu0
  %2962 = vdwg.mxu0
  %2963 = vmatpush.bf16.msra.mxu0 %v941
  %2964 = vmatpush.bf16.msra.mxu0 %v933
  %2965 = vmatpush.bf16.msra.mxu0 %v925
  %2966 = vmatpush.bf16.msra.mxu0 %v917
  %2967 = vmatpush.bf16.msra.mxu0 %v909
  %2968 = vmatpush.bf16.msra.mxu0 %v901
  %2969 = vmatpush.bf16.msra.mxu0 %v893
  %2970 = vmatpush.bf16.msra.mxu0 %v885
  %2971 = vmatmul.bf16.gmra.mxu0 %v2897
  %v2972 = vpop.f32.mrf.mxu0
  %v2973 = vadd.f32 %v2960, %v2972
  %v2974 = vpop.f32.mrf.mxu0
  %2975 = vdwg.mxu0
  %2976 = vmatpush.bf16.msra.mxu0 %v878
  %2977 = vmatpush.bf16.msra.mxu0 %v870
  %2978 = vmatpush.bf16.msra.mxu0 %v862
  %2979 = vmatpush.bf16.msra.mxu0 %v854
  %2980 = vmatpush.bf16.msra.mxu0 %v846
  %2981 = vmatpush.bf16.msra.mxu0 %v838
  %2982 = vmatpush.bf16.msra.mxu0 %v830
  %2983 = vmatpush.bf16.msra.mxu0 %v822
  %2984 = vmatmul.bf16.gmra.mxu0 %v2896
  %v2985 = vpop.f32.mrf.mxu0
  %v2986 = vadd.f32 0.0, %v2985
  %v2987 = vpop.f32.mrf.mxu0
  %2988 = vdwg.mxu0
  %2989 = vmatpush.bf16.msra.mxu0 %v942
  %2990 = vmatpush.bf16.msra.mxu0 %v934
  %2991 = vmatpush.bf16.msra.mxu0 %v926
  %2992 = vmatpush.bf16.msra.mxu0 %v918
  %2993 = vmatpush.bf16.msra.mxu0 %v910
  %2994 = vmatpush.bf16.msra.mxu0 %v902
  %2995 = vmatpush.bf16.msra.mxu0 %v894
  %2996 = vmatpush.bf16.msra.mxu0 %v886
  %2997 = vmatmul.bf16.gmra.mxu0 %v2897
  %v2998 = vpop.f32.mrf.mxu0
  %v2999 = vadd.f32 %v2986, %v2998
  %v3000 = vpop.f32.mrf.mxu0
  %3001 = vdwg.mxu0
  %v3002 = vadd.f32 %v2921, %v271
  %v3003 = vadd.f32 %v2947, %v272
  %v3004 = vadd.f32 %v2973, %v273
  %v3005 = vadd.f32 %v2999, %v274
  %v3006 = vmul.f32 %v3002, 0.5
  %v3007 = vmul.f32 %v3003, 0.5
  %v3008 = vmul.f32 %v3004, 0.5
  %v3009 = vtanh.pop %v3006
  %v3010 = vtanh.pop %v3007
  %v3011 = vtanh.pop %v3008
  %v3012 = vmul.f32 %v3009, 0.5
  %v3013 = vmul.f32 %v3010, 0.5
  %v3014 = vmul.f32 %v3011, 0.5
  %v3015 = vadd.f32 %v3012, 0.5
  %v3016 = vadd.f32 %v3013, 0.5
  %v3017 = vadd.f32 %v3014, 0.5
  %v3018 = vtanh.pop %v3005
  %v3019 = vmul.f32 %v3016, %v2893
  %v3020 = vmul.f32 %v3015, %v3018
  %v3021 = vadd.f32 %v3019, %v3020
  %v3022 = vtanh.pop %v3021
  %v3023 = vmul.f32 %v3017, %v3022
  %v3024 = vld [vmem:[%s5] sm:$0xff]
  %v3025 = vld [vmem:[%s5 + $0x8] sm:$0xff]
  %v3026 = vld [vmem:[%s5 + $0x10] sm:$0xff]
  %v3027 = vld [vmem:[%s5 + $0x18] sm:$0xff]
  %v3028 = vld [vmem:[%s5 + $0x20] sm:$0xff]
  %v3029 = vld [vmem:[%s5 + $0x28] sm:$0xff]
  %v3030 = vld [vmem:[%s5 + $0x30] sm:$0xff]
  %v3031 = vld [vmem:[%s5 + $0x38] sm:$0xff]
  %v3032 = vld [vmem:[%s5 + $0x40] sm:$0xff]
  %v3033 = vld [vmem:[%s5 + $0x48] sm:$0xff]
  %v3034 = vld [vmem:[%s5 + $0x50] sm:$0xff]
  %v3035 = vld [vmem:[%s5 + $0x58] sm:$0xff]
  %v3036 = vld [vmem:[%s5 + $0x60] sm:$0xff]
  %v3037 = vld [vmem:[%s5 + $0x68] sm:$0xff]
  %v3038 = vld [vmem:[%s5 + $0x70] sm:$0xff]
  %v3039 = vld [vmem:[%s5 + $0x78] sm:$0xff]
  %v3040 = vld [vmem:[%s6] sm:$0x1]
  %v3042 = vperm.slane %v3040, 0
  %3044 = vmatpush.msra.mxu0 %v3039
  %3045 = vmatpush.msra.mxu0 %v3038
  %3046 = vmatpush.msra.mxu0 %v3037
  %3047 = vmatpush.msra.mxu0 %v3036
  %3048 = vmatpush.msra.mxu0 %v3035
  %3049 = vmatpush.msra.mxu0 %v3034
  %3050 = vmatpush.msra.mxu0 %v3033
  %3051 = vmatpush.msra.mxu0 %v3032
  %3052 = vmatpush.msra.mxu0 %v3031
  %3053 = vmatpush.msra.mxu0 %v3030
  %3054 = vmatpush.msra.mxu0 %v3029
  %3055 = vmatpush.msra.mxu0 %v3028
  %3056 = vmatpush.msra.mxu0 %v3027
  %3057 = vmatpush.msra.mxu0 %v3026
  %3058 = vmatpush.msra.mxu0 %v3025
  %3059 = vmatpush.msra.mxu0 %v3024
  %3060 = vmatmul.f32.gmra.mxu0 %v3023
  %v3061 = vpop.f32.mrf.mxu0
  %v3062 = vadd.f32 %v3042, %v3061
  %3063 = vdwg.mxu0
  %v3064 = vmax.f32 %v3062, 0.0
  %3065 = vst [vmem:[%s7] sm:$0xff] %v3064
  // Predicated region
  $region30: #{lstm_model_pallas.1} parent=0 // pred_check
    _
  $region31: #{lstm_model_pallas.1} parent=0 // pred_check_branch
    %3067 = sbr.rel (0) target = $region33
  $region32: #{lstm_model_pallas.1} parent=0 // pred_region
    _
  $region33: #{lstm_model_pallas.1} parent=0 // pred_fallthru
    _
  // Predicated region
  $region34: #{lstm_model_pallas.1} parent=0 // pred_check
    _
  $region35: #{lstm_model_pallas.1} parent=0 // pred_check_branch
    %3069 = sbr.rel (0) target = $region37
  $region36: #{lstm_model_pallas.1} parent=0 // pred_region
    _
  $region37: #{lstm_model_pallas.1} parent=0 // pred_fallthru
    _

</llo_original>
